<compile_context>
chip_gen: v7x
topology: tpu7x:2x2x1
jax: 0.10.0
libtpu: 0.0.40
codegen_flags: <defaults>
</compile_context>

<pallas_src>
import jax
import jax.numpy as jnp
from jax import lax
from jax.experimental import pallas as pl
from jax.experimental.pallas import tpu as pltpu

# ---------------- synthetic ModelConfig (small, deterministic) ----------------
VOCAB = 256          # config.vocab_size
HIDDEN = 64          # config.hidden_size
N_LAYERS = 2         # config.num_hidden_layers
N_HEADS = 4          # config.num_attention_heads
HEAD_DIM = HIDDEN // N_HEADS   # 16
INTER = 128          # config.intermediate_size
SEQ = 8
BATCH = 2
EPS = 1e-5           # config.rms_norm_eps
ROPE_THETA = 10000.0
INIT_STD = 0.02      # config.initializer_range
# config.tie_word_embeddings = True  (lm_head shares the embedding table)


def _rmsnorm(x, w):
    """f32 RMSNorm; x [S, D], w [1, D]."""
    var = jnp.mean(x * x, axis=-1, keepdims=True)
    return x * lax.rsqrt(var + EPS) * w


def smollm_fused_kernel(x_ref, wqkv_ref, wo_ref, wgu_ref, wd_ref,
                        ln_attn_ref, ln_mlp_ref, ln_f_ref,
                        cos_ref, sina_ref, sinb_ref, embed_ref, o_ref):
    """Whole model (all layers + final norm + tied lm_head) for one batch element."""
    S, D, Dh, H, I = SEQ, HIDDEN, HEAD_DIM, N_HEADS, INTER
    half = Dh // 2

    x = x_ref[0].astype(jnp.float32)      # [S, D] residual stream (f32)
    cos = cos_ref[...]                    # [S, 2D] head-tiled cos
    sina = sina_ref[...]                  # -sin on first-half lanes of each head, else 0
    sinb = sinb_ref[...]                  # +sin on second-half lanes of each head, else 0

    # Causal mask: built once, reused by every layer / head.
    row = lax.broadcasted_iota(jnp.int32, (S, S), 0)
    col = lax.broadcasted_iota(jnp.int32, (S, S), 1)
    causal = col <= row

    nt = (((1,), (1,)), ((), ()))         # contract last dims: a @ b.T

    def rope(t):
        # HF rotate-half RoPE applied to all heads of the 128-lane q‖k slab at once.
        # Partner lanes are fetched with XLU rolls; wrong-head wrap-around terms are
        # zeroed by the precomputed sin masks (sina / sinb).
        t_hi = pltpu.roll(t, 2 * D - half, axis=1)   # lane j -> t[:, j + half]
        t_lo = pltpu.roll(t, half, axis=1)           # lane j -> t[:, j - half]
        return t * cos + t_hi * sina + t_lo * sinb

    for l in range(N_LAYERS):             # static unrolled (N_LAYERS = 2)
        # ---------------- attention block ----------------
        h = _rmsnorm(x, ln_attn_ref[l])
        qkv = jnp.dot(h.astype(jnp.bfloat16), wqkv_ref[l],
                      preferred_element_type=jnp.float32)          # [S, 3D]
        # 1/sqrt(head_dim) is already folded into the q columns of wqkv.
        qk = rope(qkv[:, 0:2 * D]).astype(jnp.bfloat16)            # [S, 2D]
        q = qk[:, 0:D]
        k = qk[:, D:2 * D]
        v = qkv[:, 2 * D:3 * D].astype(jnp.bfloat16)
        wo_l = wo_ref[l]                                           # [D, D] bf16

        attn = jnp.zeros((S, D), jnp.float32)
        for hd in range(H):                                        # static unrolled
            sl = slice(hd * Dh, (hd + 1) * Dh)
            scores = lax.dot_general(q[:, sl], k[:, sl], nt,
                                     preferred_element_type=jnp.float32)
            scores = jnp.where(causal, scores, -1e30)              # mask in f32
            m = jnp.max(scores, axis=-1, keepdims=True)
            p = jnp.exp(scores - m)
            p = p * pl.reciprocal(jnp.sum(p, axis=-1, keepdims=True), approx=True)
            o_h = jnp.dot(p.astype(jnp.bfloat16), v[:, sl],
                          preferred_element_type=jnp.float32)      # [S, Dh]
            # Accumulate through matching rows of Wo: no lane-axis concatenate.
            attn = attn + jnp.dot(o_h.astype(jnp.bfloat16), wo_l[sl, :],
                                  preferred_element_type=jnp.float32)
        x = x + attn

        # ---------------- SwiGLU MLP block ----------------
        h = _rmsnorm(x, ln_mlp_ref[l])
        gu = jnp.dot(h.astype(jnp.bfloat16), wgu_ref[l],
                     preferred_element_type=jnp.float32)           # [S, 2I]
        g = gu[:, 0:I]
        u = gu[:, I:2 * I]
        hmid = (g * (1.0 / (1.0 + jnp.exp(-g)))) * u               # SiLU(g) * u, f32
        x = x + jnp.dot(hmid.astype(jnp.bfloat16), wd_ref[l],
                        preferred_element_type=jnp.float32)

    # ---------------- final norm + tied lm_head ----------------
    xf = _rmsnorm(x, ln_f_ref[...])
    logits = lax.dot_general(xf.astype(jnp.bfloat16), embed_ref[...], nt,
                             preferred_element_type=jnp.float32)   # [S, V]
    o_ref[0] = logits


def smollm_forward(params, input_ids):
    B, S = input_ids.shape
    D, V = HIDDEN, VOCAB

    # Embedding lookup (gather) kept as JAX glue.
    x = jnp.take(params["embed"], input_ids, axis=0)               # [B, S, D] bf16

    # Rotary tables (position_ids = arange). Per-head [S, HEAD_DIM] cos/sin are
    # tiled across the 2*N_HEADS head-slots of the q‖k slab, with rotate-half
    # signs / zeros folded into two sin tables so the kernel only needs two
    # lane-rolls + multiplies.
    pos = jnp.arange(S, dtype=jnp.float32)
    inv_freq = 1.0 / (ROPE_THETA ** (jnp.arange(0, HEAD_DIM, 2, dtype=jnp.float32) / HEAD_DIM))
    freqs = pos[:, None] * inv_freq[None, :]                       # [S, HEAD_DIM/2]
    emb = jnp.concatenate([freqs, freqs], axis=-1)                 # [S, HEAD_DIM]
    cos_h, sin_h = jnp.cos(emb), jnp.sin(emb)
    half = HEAD_DIM // 2
    zeros = jnp.zeros((S, half), jnp.float32)
    sina_h = jnp.concatenate([-sin_h[:, :half], zeros], axis=-1)
    sinb_h = jnp.concatenate([zeros, sin_h[:, half:]], axis=-1)
    cos_f = jnp.tile(cos_h, (1, 2 * N_HEADS))                      # [S, 2D]
    sina_f = jnp.tile(sina_h, (1, 2 * N_HEADS))
    sinb_f = jnp.tile(sinb_h, (1, 2 * N_HEADS))

    full = lambda shape: pl.BlockSpec(shape, lambda b, _s=shape: (0,) * len(_s))

    return pl.pallas_call(
        smollm_fused_kernel,
        out_shape=jax.ShapeDtypeStruct((B, S, V), jnp.float32),
        grid=(B,),
        in_specs=[
            pl.BlockSpec((1, S, D), lambda b: (b, 0, 0)),          # activations
            full((N_LAYERS, D, 3 * D)),                            # fused qkv proj
            full((N_LAYERS, D, D)),                                # o proj
            full((N_LAYERS, D, 2 * INTER)),                        # fused gate/up
            full((N_LAYERS, INTER, D)),                            # down proj
            full((N_LAYERS, 1, D)),                                # attn RMSNorm w
            full((N_LAYERS, 1, D)),                                # mlp RMSNorm w
            full((1, D)),                                          # final RMSNorm w
            full((S, 2 * D)),                                      # cos
            full((S, 2 * D)),                                      # sinA
            full((S, 2 * D)),                                      # sinB
            full((V, D)),                                          # tied embed/lm_head
        ],
        out_specs=pl.BlockSpec((1, S, V), lambda b: (b, 0, 0)),
        compiler_params=pltpu.CompilerParams(
            dimension_semantics=("parallel",)),                    # both TCs on v7x
    )(x, params["wqkv"], params["wo"], params["wgu"], params["wd"],
      params["ln_attn"], params["ln_mlp"], params["final_norm"],
      cos_f, sina_f, sinb_f, params["embed"])


# ----------------------------- parameter init -----------------------------
def init_params(key):
    ks = jax.random.split(key, 5)

    def w(k, shape):       # nn.Linear / nn.Embedding init: N(0, initializer_range)
        return jax.random.normal(k, shape, jnp.float32) * INIT_STD

    # Fold the 1/sqrt(head_dim) attention scale into the q projection columns.
    wqkv = w(ks[1], (N_LAYERS, HIDDEN, 3 * HIDDEN))
    wqkv = wqkv.at[:, :, :HIDDEN].multiply(1.0 / (HEAD_DIM ** 0.5))

    return dict(
        embed=w(ks[0], (VOCAB, HIDDEN)).astype(jnp.bfloat16),      # tied with lm_head
        wqkv=wqkv.astype(jnp.bfloat16),
        wo=w(ks[2], (N_LAYERS, HIDDEN, HIDDEN)).astype(jnp.bfloat16),
        wgu=w(ks[3], (N_LAYERS, HIDDEN, 2 * INTER)).astype(jnp.bfloat16),
        wd=w(ks[4], (N_LAYERS, INTER, HIDDEN)).astype(jnp.bfloat16),
        ln_attn=jnp.ones((N_LAYERS, 1, HIDDEN), jnp.float32),
        ln_mlp=jnp.ones((N_LAYERS, 1, HIDDEN), jnp.float32),
        final_norm=jnp.ones((1, HIDDEN), jnp.float32),
    )

# TODO(synk): KV-cache / generation machinery (prepare_inputs_for_generation,
# past_key_values, GenerationMixin) and torchao 4/8-bit quantization have no
# Pallas equivalent here.


if __name__ == "__main__":
    key = jax.random.PRNGKey(0)
    pkey, dkey = jax.random.split(key)
    params = init_params(pkey)
    input_ids = jax.random.randint(dkey, (BATCH, SEQ), 0, VOCAB, dtype=jnp.int32)

    logits = jax.jit(smollm_forward)(params, input_ids)
    jax.block_until_ready(logits)
    assert logits.shape == (BATCH, SEQ, VOCAB)
    assert bool(jnp.all(jnp.isfinite(logits)))
    print("KERNEL_OK")
</pallas_src>

<mosaic_0001>
module attributes {stable_mosaic.version = 11 : i64} {
  func.func @smollm_fused_kernel(%arg0: i32, %arg1: memref<1x8x64xbf16, #tpu.memory_space<vmem>>, %arg2: memref<2x64x192xbf16, #tpu.memory_space<vmem>>, %arg3: memref<2x64x64xbf16, #tpu.memory_space<vmem>>, %arg4: memref<2x64x256xbf16, #tpu.memory_space<vmem>>, %arg5: memref<2x128x64xbf16, #tpu.memory_space<vmem>>, %arg6: memref<2x1x64xf32, #tpu.memory_space<vmem>>, %arg7: memref<2x1x64xf32, #tpu.memory_space<vmem>>, %arg8: memref<1x64xf32, #tpu.memory_space<vmem>>, %arg9: memref<8x128xf32, #tpu.memory_space<vmem>>, %arg10: memref<8x128xf32, #tpu.memory_space<vmem>>, %arg11: memref<8x128xf32, #tpu.memory_space<vmem>>, %arg12: memref<256x64xbf16, #tpu.memory_space<vmem>>, %arg13: memref<1x8x256xf32, #tpu.memory_space<vmem>>) attributes {dimension_semantics = [#tpu.dimension_semantics<parallel>], iteration_bounds = array<i64: 2>, scalar_prefetch = 0 : i64, scratch_operands = 0 : i64, tpu.core_type = #tpu.core_type<tc>, window_params = [{transform_indices = @transform_0, window_bounds = array<i64: 1, 8, 64>}, {pipeline_mode = #tpu.pipeline_mode<synchronous>, transform_indices = @transform_1, window_bounds = array<i64: 2, 64, 192>}, {pipeline_mode = #tpu.pipeline_mode<synchronous>, transform_indices = @transform_2, window_bounds = array<i64: 2, 64, 64>}, {pipeline_mode = #tpu.pipeline_mode<synchronous>, transform_indices = @transform_3, window_bounds = array<i64: 2, 64, 256>}, {pipeline_mode = #tpu.pipeline_mode<synchronous>, transform_indices = @transform_4, window_bounds = array<i64: 2, 128, 64>}, {pipeline_mode = #tpu.pipeline_mode<synchronous>, transform_indices = @transform_5, window_bounds = array<i64: 2, 1, 64>}, {pipeline_mode = #tpu.pipeline_mode<synchronous>, transform_indices = @transform_6, window_bounds = array<i64: 2, 1, 64>}, {pipeline_mode = #tpu.pipeline_mode<synchronous>, transform_indices = @transform_7, window_bounds = array<i64: 1, 64>}, {pipeline_mode = #tpu.pipeline_mode<synchronous>, transform_indices = @transform_8, window_bounds = array<i64: 8, 128>}, {pipeline_mode = #tpu.pipeline_mode<synchronous>, transform_indices = @transform_9, window_bounds = array<i64: 8, 128>}, {pipeline_mode = #tpu.pipeline_mode<synchronous>, transform_indices = @transform_10, window_bounds = array<i64: 8, 128>}, {pipeline_mode = #tpu.pipeline_mode<synchronous>, transform_indices = @transform_11, window_bounds = array<i64: 256, 64>}, {transform_indices = @transform_12, window_bounds = array<i64: 1, 8, 256>}]} {
    %c0 = arith.constant 0 : index
    %c0_0 = arith.constant 0 : index
    %c0_1 = arith.constant 0 : index
    %0 = vector.load %arg1[%c0, %c0_0, %c0_1] : memref<1x8x64xbf16, #tpu.memory_space<vmem>>, vector<1x8x64xbf16>
    %1 = vector.shape_cast %0 : vector<1x8x64xbf16> to vector<8x64xbf16>
    %2 = arith.extf %1 : vector<8x64xbf16> to vector<8x64xf32>
    %c0_2 = arith.constant 0 : index
    %c0_3 = arith.constant 0 : index
    %3 = vector.load %arg9[%c0_2, %c0_3] : memref<8x128xf32, #tpu.memory_space<vmem>>, vector<8x128xf32>
    %c0_4 = arith.constant 0 : index
    %c0_5 = arith.constant 0 : index
    %4 = vector.load %arg10[%c0_4, %c0_5] : memref<8x128xf32, #tpu.memory_space<vmem>>, vector<8x128xf32>
    %c0_6 = arith.constant 0 : index
    %c0_7 = arith.constant 0 : index
    %5 = vector.load %arg11[%c0_6, %c0_7] : memref<8x128xf32, #tpu.memory_space<vmem>>, vector<8x128xf32>
    %6 = tpu.iota {dimensions = array<i32: 0>} : vector<8x8xi32>
    %7 = tpu.iota {dimensions = array<i32: 1>} : vector<8x8xi32>
    %8 = arith.cmpi sle, %7, %6 : vector<8x8xi32>
    %c0_8 = arith.constant 0 : index
    %c0_9 = arith.constant 0 : index
    %c0_10 = arith.constant 0 : index
    %9 = vector.load %arg6[%c0_8, %c0_9, %c0_10] : memref<2x1x64xf32, #tpu.memory_space<vmem>>, vector<1x1x64xf32>
    %10 = vector.shape_cast %9 : vector<1x1x64xf32> to vector<1x64xf32>
    %11 = arith.mulf %2, %2 : vector<8x64xf32>
    %cst = arith.constant dense<0.000000e+00> : vector<8xf32>
    %12 = vector.multi_reduction <add>, %11, %cst [1] : vector<8x64xf32> to vector<8xf32>
    %13 = vector.shape_cast %12 : vector<8xf32> to vector<8x1xf32>
    %cst_11 = arith.constant 6.400000e+01 : f32
    %14 = vector.broadcast %cst_11 : f32 to vector<8x1xf32>
    %15 = arith.divf %13, %14 : vector<8x1xf32>
    %cst_12 = arith.constant 9.99999974E-6 : f32
    %16 = vector.broadcast %cst_12 : f32 to vector<8x1xf32>
    %17 = arith.addf %15, %16 : vector<8x1xf32>
    %18 = math.rsqrt %17 : vector<8x1xf32>
    %19 = vector.broadcast %18 : vector<8x1xf32> to vector<8x64xf32>
    %20 = arith.mulf %2, %19 : vector<8x64xf32>
    %21 = vector.broadcast %10 : vector<1x64xf32> to vector<8x64xf32>
    %22 = arith.mulf %20, %21 : vector<8x64xf32>
    %23 = arith.truncf %22 : vector<8x64xf32> to vector<8x64xbf16>
    %c0_13 = arith.constant 0 : index
    %c0_14 = arith.constant 0 : index
    %c0_15 = arith.constant 0 : index
    %24 = vector.load %arg2[%c0_13, %c0_14, %c0_15] : memref<2x64x192xbf16, #tpu.memory_space<vmem>>, vector<1x64x192xbf16>
    %25 = vector.shape_cast %24 : vector<1x64x192xbf16> to vector<64x192xbf16>
    %cst_16 = arith.constant dense<0.000000e+00> : vector<8x192xf32>
    %26 = tpu.matmul %23, %25, %cst_16 {dimension_numbers = #tpu.dot_dimension_numbers<[1], [0], [0], [1], [0, 0, 1, 1], [], []>} : vector<8x64xbf16>, vector<64x192xbf16>, vector<8x192xf32> -> vector<8x192xf32>
    %27 = vector.extract_strided_slice %26 {offsets = [0, 0], sizes = [8, 128], strides = [1, 1]} : vector<8x192xf32> to vector<8x128xf32>
    %c120_i32 = arith.constant 120 : i32
    %28 = tpu.dynamic_rotate %27 by %c120_i32 dim 1 : vector<8x128xf32>, i32 -> vector<8x128xf32>
    %c8_i32 = arith.constant 8 : i32
    %29 = tpu.dynamic_rotate %27 by %c8_i32 dim 1 : vector<8x128xf32>, i32 -> vector<8x128xf32>
    %30 = arith.mulf %27, %3 : vector<8x128xf32>
    %31 = arith.mulf %28, %4 : vector<8x128xf32>
    %32 = arith.addf %30, %31 : vector<8x128xf32>
    %33 = arith.mulf %29, %5 : vector<8x128xf32>
    %34 = arith.addf %32, %33 : vector<8x128xf32>
    %35 = arith.truncf %34 : vector<8x128xf32> to vector<8x128xbf16>
    %36 = vector.extract_strided_slice %35 {offsets = [0, 0], sizes = [8, 64], strides = [1, 1]} : vector<8x128xbf16> to vector<8x64xbf16>
    %37 = vector.extract_strided_slice %35 {offsets = [0, 64], sizes = [8, 64], strides = [1, 1]} : vector<8x128xbf16> to vector<8x64xbf16>
    %38 = vector.extract_strided_slice %26 {offsets = [0, 128], sizes = [8, 64], strides = [1, 1]} : vector<8x192xf32> to vector<8x64xf32>
    %39 = arith.truncf %38 : vector<8x64xf32> to vector<8x64xbf16>
    %c0_17 = arith.constant 0 : index
    %c0_18 = arith.constant 0 : index
    %c0_19 = arith.constant 0 : index
    %40 = vector.load %arg3[%c0_17, %c0_18, %c0_19] : memref<2x64x64xbf16, #tpu.memory_space<vmem>>, vector<1x64x64xbf16>
    %41 = vector.shape_cast %40 : vector<1x64x64xbf16> to vector<64x64xbf16>
    %cst_20 = arith.constant 0.000000e+00 : f32
    %42 = vector.broadcast %cst_20 : f32 to vector<8x64xf32>
    %43 = vector.extract_strided_slice %36 {offsets = [0, 0], sizes = [8, 16], strides = [1, 1]} : vector<8x64xbf16> to vector<8x16xbf16>
    %44 = vector.extract_strided_slice %37 {offsets = [0, 0], sizes = [8, 16], strides = [1, 1]} : vector<8x64xbf16> to vector<8x16xbf16>
    %cst_21 = arith.constant dense<0.000000e+00> : vector<8x8xf32>
    %45 = tpu.matmul %43, %44, %cst_21 {dimension_numbers = #tpu.dot_dimension_numbers<[1], [1], [0], [0], [0, 0, 1, 0], [], []>} : vector<8x16xbf16>, vector<8x16xbf16>, vector<8x8xf32> -> vector<8x8xf32>
    %cst_22 = arith.constant -1.000000e+30 : f32
    %46 = vector.broadcast %cst_22 : f32 to vector<8x8xf32>
    %47 = arith.select %8, %45, %46 : vector<8x8xi1>, vector<8x8xf32>
    %cst_23 = arith.constant dense<0xFF800000> : vector<8xf32>
    %48 = vector.multi_reduction <maximumf>, %47, %cst_23 [1] : vector<8x8xf32> to vector<8xf32>
    %49 = vector.shape_cast %48 : vector<8xf32> to vector<8x1xf32>
    %50 = vector.broadcast %49 : vector<8x1xf32> to vector<8x8xf32>
    %51 = arith.subf %47, %50 : vector<8x8xf32>
    %52 = math.exp %51 : vector<8x8xf32>
    %cst_24 = arith.constant dense<0.000000e+00> : vector<8xf32>
    %53 = vector.multi_reduction <add>, %52, %cst_24 [1] : vector<8x8xf32> to vector<8xf32>
    %54 = vector.shape_cast %53 : vector<8xf32> to vector<8x1xf32>
    %55 = tpu.reciprocal %54 {approx = true} : vector<8x1xf32> -> vector<8x1xf32>
    %56 = vector.broadcast %55 : vector<8x1xf32> to vector<8x8xf32>
    %57 = arith.mulf %52, %56 : vector<8x8xf32>
    %58 = arith.truncf %57 : vector<8x8xf32> to vector<8x8xbf16>
    %59 = vector.extract_strided_slice %39 {offsets = [0, 0], sizes = [8, 16], strides = [1, 1]} : vector<8x64xbf16> to vector<8x16xbf16>
    %cst_25 = arith.constant dense<0.000000e+00> : vector<8x16xf32>
    %60 = tpu.matmul %58, %59, %cst_25 {dimension_numbers = #tpu.dot_dimension_numbers<[1], [0], [0], [1], [0, 0, 1, 1], [], []>} : vector<8x8xbf16>, vector<8x16xbf16>, vector<8x16xf32> -> vector<8x16xf32>
    %61 = arith.truncf %60 : vector<8x16xf32> to vector<8x16xbf16>
    %62 = vector.extract_strided_slice %41 {offsets = [0, 0], sizes = [16, 64], strides = [1, 1]} : vector<64x64xbf16> to vector<16x64xbf16>
    %cst_26 = arith.constant dense<0.000000e+00> : vector<8x64xf32>
    %63 = tpu.matmul %61, %62, %cst_26 {dimension_numbers = #tpu.dot_dimension_numbers<[1], [0], [0], [1], [0, 0, 1, 1], [], []>} : vector<8x16xbf16>, vector<16x64xbf16>, vector<8x64xf32> -> vector<8x64xf32>
    %64 = arith.addf %42, %63 : vector<8x64xf32>
    %65 = vector.extract_strided_slice %36 {offsets = [0, 16], sizes = [8, 16], strides = [1, 1]} : vector<8x64xbf16> to vector<8x16xbf16>
    %66 = vector.extract_strided_slice %37 {offsets = [0, 16], sizes = [8, 16], strides = [1, 1]} : vector<8x64xbf16> to vector<8x16xbf16>
    %cst_27 = arith.constant dense<0.000000e+00> : vector<8x8xf32>
    %67 = tpu.matmul %65, %66, %cst_27 {dimension_numbers = #tpu.dot_dimension_numbers<[1], [1], [0], [0], [0, 0, 1, 0], [], []>} : vector<8x16xbf16>, vector<8x16xbf16>, vector<8x8xf32> -> vector<8x8xf32>
    %cst_28 = arith.constant -1.000000e+30 : f32
    %68 = vector.broadcast %cst_28 : f32 to vector<8x8xf32>
    %69 = arith.select %8, %67, %68 : vector<8x8xi1>, vector<8x8xf32>
    %cst_29 = arith.constant dense<0xFF800000> : vector<8xf32>
    %70 = vector.multi_reduction <maximumf>, %69, %cst_29 [1] : vector<8x8xf32> to vector<8xf32>
    %71 = vector.shape_cast %70 : vector<8xf32> to vector<8x1xf32>
    %72 = vector.broadcast %71 : vector<8x1xf32> to vector<8x8xf32>
    %73 = arith.subf %69, %72 : vector<8x8xf32>
    %74 = math.exp %73 : vector<8x8xf32>
    %cst_30 = arith.constant dense<0.000000e+00> : vector<8xf32>
    %75 = vector.multi_reduction <add>, %74, %cst_30 [1] : vector<8x8xf32> to vector<8xf32>
    %76 = vector.shape_cast %75 : vector<8xf32> to vector<8x1xf32>
    %77 = tpu.reciprocal %76 {approx = true} : vector<8x1xf32> -> vector<8x1xf32>
    %78 = vector.broadcast %77 : vector<8x1xf32> to vector<8x8xf32>
    %79 = arith.mulf %74, %78 : vector<8x8xf32>
    %80 = arith.truncf %79 : vector<8x8xf32> to vector<8x8xbf16>
    %81 = vector.extract_strided_slice %39 {offsets = [0, 16], sizes = [8, 16], strides = [1, 1]} : vector<8x64xbf16> to vector<8x16xbf16>
    %cst_31 = arith.constant dense<0.000000e+00> : vector<8x16xf32>
    %82 = tpu.matmul %80, %81, %cst_31 {dimension_numbers = #tpu.dot_dimension_numbers<[1], [0], [0], [1], [0, 0, 1, 1], [], []>} : vector<8x8xbf16>, vector<8x16xbf16>, vector<8x16xf32> -> vector<8x16xf32>
    %83 = arith.truncf %82 : vector<8x16xf32> to vector<8x16xbf16>
    %84 = vector.extract_strided_slice %41 {offsets = [16, 0], sizes = [16, 64], strides = [1, 1]} : vector<64x64xbf16> to vector<16x64xbf16>
    %cst_32 = arith.constant dense<0.000000e+00> : vector<8x64xf32>
    %85 = tpu.matmul %83, %84, %cst_32 {dimension_numbers = #tpu.dot_dimension_numbers<[1], [0], [0], [1], [0, 0, 1, 1], [], []>} : vector<8x16xbf16>, vector<16x64xbf16>, vector<8x64xf32> -> vector<8x64xf32>
    %86 = arith.addf %64, %85 : vector<8x64xf32>
    %87 = vector.extract_strided_slice %36 {offsets = [0, 32], sizes = [8, 16], strides = [1, 1]} : vector<8x64xbf16> to vector<8x16xbf16>
    %88 = vector.extract_strided_slice %37 {offsets = [0, 32], sizes = [8, 16], strides = [1, 1]} : vector<8x64xbf16> to vector<8x16xbf16>
    %cst_33 = arith.constant dense<0.000000e+00> : vector<8x8xf32>
    %89 = tpu.matmul %87, %88, %cst_33 {dimension_numbers = #tpu.dot_dimension_numbers<[1], [1], [0], [0], [0, 0, 1, 0], [], []>} : vector<8x16xbf16>, vector<8x16xbf16>, vector<8x8xf32> -> vector<8x8xf32>
    %cst_34 = arith.constant -1.000000e+30 : f32
    %90 = vector.broadcast %cst_34 : f32 to vector<8x8xf32>
    %91 = arith.select %8, %89, %90 : vector<8x8xi1>, vector<8x8xf32>
    %cst_35 = arith.constant dense<0xFF800000> : vector<8xf32>
    %92 = vector.multi_reduction <maximumf>, %91, %cst_35 [1] : vector<8x8xf32> to vector<8xf32>
    %93 = vector.shape_cast %92 : vector<8xf32> to vector<8x1xf32>
    %94 = vector.broadcast %93 : vector<8x1xf32> to vector<8x8xf32>
    %95 = arith.subf %91, %94 : vector<8x8xf32>
    %96 = math.exp %95 : vector<8x8xf32>
    %cst_36 = arith.constant dense<0.000000e+00> : vector<8xf32>
    %97 = vector.multi_reduction <add>, %96, %cst_36 [1] : vector<8x8xf32> to vector<8xf32>
    %98 = vector.shape_cast %97 : vector<8xf32> to vector<8x1xf32>
    %99 = tpu.reciprocal %98 {approx = true} : vector<8x1xf32> -> vector<8x1xf32>
    %100 = vector.broadcast %99 : vector<8x1xf32> to vector<8x8xf32>
    %101 = arith.mulf %96, %100 : vector<8x8xf32>
    %102 = arith.truncf %101 : vector<8x8xf32> to vector<8x8xbf16>
    %103 = vector.extract_strided_slice %39 {offsets = [0, 32], sizes = [8, 16], strides = [1, 1]} : vector<8x64xbf16> to vector<8x16xbf16>
    %cst_37 = arith.constant dense<0.000000e+00> : vector<8x16xf32>
    %104 = tpu.matmul %102, %103, %cst_37 {dimension_numbers = #tpu.dot_dimension_numbers<[1], [0], [0], [1], [0, 0, 1, 1], [], []>} : vector<8x8xbf16>, vector<8x16xbf16>, vector<8x16xf32> -> vector<8x16xf32>
    %105 = arith.truncf %104 : vector<8x16xf32> to vector<8x16xbf16>
    %106 = vector.extract_strided_slice %41 {offsets = [32, 0], sizes = [16, 64], strides = [1, 1]} : vector<64x64xbf16> to vector<16x64xbf16>
    %cst_38 = arith.constant dense<0.000000e+00> : vector<8x64xf32>
    %107 = tpu.matmul %105, %106, %cst_38 {dimension_numbers = #tpu.dot_dimension_numbers<[1], [0], [0], [1], [0, 0, 1, 1], [], []>} : vector<8x16xbf16>, vector<16x64xbf16>, vector<8x64xf32> -> vector<8x64xf32>
    %108 = arith.addf %86, %107 : vector<8x64xf32>
    %109 = vector.extract_strided_slice %36 {offsets = [0, 48], sizes = [8, 16], strides = [1, 1]} : vector<8x64xbf16> to vector<8x16xbf16>
    %110 = vector.extract_strided_slice %37 {offsets = [0, 48], sizes = [8, 16], strides = [1, 1]} : vector<8x64xbf16> to vector<8x16xbf16>
    %cst_39 = arith.constant dense<0.000000e+00> : vector<8x8xf32>
    %111 = tpu.matmul %109, %110, %cst_39 {dimension_numbers = #tpu.dot_dimension_numbers<[1], [1], [0], [0], [0, 0, 1, 0], [], []>} : vector<8x16xbf16>, vector<8x16xbf16>, vector<8x8xf32> -> vector<8x8xf32>
    %cst_40 = arith.constant -1.000000e+30 : f32
    %112 = vector.broadcast %cst_40 : f32 to vector<8x8xf32>
    %113 = arith.select %8, %111, %112 : vector<8x8xi1>, vector<8x8xf32>
    %cst_41 = arith.constant dense<0xFF800000> : vector<8xf32>
    %114 = vector.multi_reduction <maximumf>, %113, %cst_41 [1] : vector<8x8xf32> to vector<8xf32>
    %115 = vector.shape_cast %114 : vector<8xf32> to vector<8x1xf32>
    %116 = vector.broadcast %115 : vector<8x1xf32> to vector<8x8xf32>
    %117 = arith.subf %113, %116 : vector<8x8xf32>
    %118 = math.exp %117 : vector<8x8xf32>
    %cst_42 = arith.constant dense<0.000000e+00> : vector<8xf32>
    %119 = vector.multi_reduction <add>, %118, %cst_42 [1] : vector<8x8xf32> to vector<8xf32>
    %120 = vector.shape_cast %119 : vector<8xf32> to vector<8x1xf32>
    %121 = tpu.reciprocal %120 {approx = true} : vector<8x1xf32> -> vector<8x1xf32>
    %122 = vector.broadcast %121 : vector<8x1xf32> to vector<8x8xf32>
    %123 = arith.mulf %118, %122 : vector<8x8xf32>
    %124 = arith.truncf %123 : vector<8x8xf32> to vector<8x8xbf16>
    %125 = vector.extract_strided_slice %39 {offsets = [0, 48], sizes = [8, 16], strides = [1, 1]} : vector<8x64xbf16> to vector<8x16xbf16>
    %cst_43 = arith.constant dense<0.000000e+00> : vector<8x16xf32>
    %126 = tpu.matmul %124, %125, %cst_43 {dimension_numbers = #tpu.dot_dimension_numbers<[1], [0], [0], [1], [0, 0, 1, 1], [], []>} : vector<8x8xbf16>, vector<8x16xbf16>, vector<8x16xf32> -> vector<8x16xf32>
    %127 = arith.truncf %126 : vector<8x16xf32> to vector<8x16xbf16>
    %128 = vector.extract_strided_slice %41 {offsets = [48, 0], sizes = [16, 64], strides = [1, 1]} : vector<64x64xbf16> to vector<16x64xbf16>
    %cst_44 = arith.constant dense<0.000000e+00> : vector<8x64xf32>
    %129 = tpu.matmul %127, %128, %cst_44 {dimension_numbers = #tpu.dot_dimension_numbers<[1], [0], [0], [1], [0, 0, 1, 1], [], []>} : vector<8x16xbf16>, vector<16x64xbf16>, vector<8x64xf32> -> vector<8x64xf32>
    %130 = arith.addf %108, %129 : vector<8x64xf32>
    %131 = arith.addf %2, %130 : vector<8x64xf32>
    %c0_45 = arith.constant 0 : index
    %c0_46 = arith.constant 0 : index
    %c0_47 = arith.constant 0 : index
    %132 = vector.load %arg7[%c0_45, %c0_46, %c0_47] : memref<2x1x64xf32, #tpu.memory_space<vmem>>, vector<1x1x64xf32>
    %133 = vector.shape_cast %132 : vector<1x1x64xf32> to vector<1x64xf32>
    %134 = arith.mulf %131, %131 : vector<8x64xf32>
    %cst_48 = arith.constant dense<0.000000e+00> : vector<8xf32>
    %135 = vector.multi_reduction <add>, %134, %cst_48 [1] : vector<8x64xf32> to vector<8xf32>
    %136 = vector.shape_cast %135 : vector<8xf32> to vector<8x1xf32>
    %cst_49 = arith.constant 6.400000e+01 : f32
    %137 = vector.broadcast %cst_49 : f32 to vector<8x1xf32>
    %138 = arith.divf %136, %137 : vector<8x1xf32>
    %cst_50 = arith.constant 9.99999974E-6 : f32
    %139 = vector.broadcast %cst_50 : f32 to vector<8x1xf32>
    %140 = arith.addf %138, %139 : vector<8x1xf32>
    %141 = math.rsqrt %140 : vector<8x1xf32>
    %142 = vector.broadcast %141 : vector<8x1xf32> to vector<8x64xf32>
    %143 = arith.mulf %131, %142 : vector<8x64xf32>
    %144 = vector.broadcast %133 : vector<1x64xf32> to vector<8x64xf32>
    %145 = arith.mulf %143, %144 : vector<8x64xf32>
    %146 = arith.truncf %145 : vector<8x64xf32> to vector<8x64xbf16>
    %c0_51 = arith.constant 0 : index
    %c0_52 = arith.constant 0 : index
    %c0_53 = arith.constant 0 : index
    %147 = vector.load %arg4[%c0_51, %c0_52, %c0_53] : memref<2x64x256xbf16, #tpu.memory_space<vmem>>, vector<1x64x256xbf16>
    %148 = vector.shape_cast %147 : vector<1x64x256xbf16> to vector<64x256xbf16>
    %cst_54 = arith.constant dense<0.000000e+00> : vector<8x256xf32>
    %149 = tpu.matmul %146, %148, %cst_54 {dimension_numbers = #tpu.dot_dimension_numbers<[1], [0], [0], [1], [0, 0, 1, 1], [], []>} : vector<8x64xbf16>, vector<64x256xbf16>, vector<8x256xf32> -> vector<8x256xf32>
    %150 = vector.extract_strided_slice %149 {offsets = [0, 0], sizes = [8, 128], strides = [1, 1]} : vector<8x256xf32> to vector<8x128xf32>
    %151 = vector.extract_strided_slice %149 {offsets = [0, 128], sizes = [8, 128], strides = [1, 1]} : vector<8x256xf32> to vector<8x128xf32>
    %cst_55 = arith.constant 0.000000e+00 : f32
    %152 = vector.broadcast %cst_55 : f32 to vector<8x128xf32>
    %153 = arith.subf %152, %150 : vector<8x128xf32>
    %154 = math.exp %153 : vector<8x128xf32>
    %cst_56 = arith.constant 1.000000e+00 : f32
    %155 = vector.broadcast %cst_56 : f32 to vector<8x128xf32>
    %156 = arith.addf %155, %154 : vector<8x128xf32>
    %cst_57 = arith.constant 1.000000e+00 : f32
    %157 = vector.broadcast %cst_57 : f32 to vector<8x128xf32>
    %158 = arith.divf %157, %156 : vector<8x128xf32>
    %159 = arith.mulf %150, %158 : vector<8x128xf32>
    %160 = arith.mulf %159, %151 : vector<8x128xf32>
    %161 = arith.truncf %160 : vector<8x128xf32> to vector<8x128xbf16>
    %c0_58 = arith.constant 0 : index
    %c0_59 = arith.constant 0 : index
    %c0_60 = arith.constant 0 : index
    %162 = vector.load %arg5[%c0_58, %c0_59, %c0_60] : memref<2x128x64xbf16, #tpu.memory_space<vmem>>, vector<1x128x64xbf16>
    %163 = vector.shape_cast %162 : vector<1x128x64xbf16> to vector<128x64xbf16>
    %cst_61 = arith.constant dense<0.000000e+00> : vector<8x64xf32>
    %164 = tpu.matmul %161, %163, %cst_61 {dimension_numbers = #tpu.dot_dimension_numbers<[1], [0], [0], [1], [0, 0, 1, 1], [], []>} : vector<8x128xbf16>, vector<128x64xbf16>, vector<8x64xf32> -> vector<8x64xf32>
    %165 = arith.addf %131, %164 : vector<8x64xf32>
    %c1 = arith.constant 1 : index
    %c0_62 = arith.constant 0 : index
    %c0_63 = arith.constant 0 : index
    %166 = vector.load %arg6[%c1, %c0_62, %c0_63] : memref<2x1x64xf32, #tpu.memory_space<vmem>>, vector<1x1x64xf32>
    %167 = vector.shape_cast %166 : vector<1x1x64xf32> to vector<1x64xf32>
    %168 = arith.mulf %165, %165 : vector<8x64xf32>
    %cst_64 = arith.constant dense<0.000000e+00> : vector<8xf32>
    %169 = vector.multi_reduction <add>, %168, %cst_64 [1] : vector<8x64xf32> to vector<8xf32>
    %170 = vector.shape_cast %169 : vector<8xf32> to vector<8x1xf32>
    %cst_65 = arith.constant 6.400000e+01 : f32
    %171 = vector.broadcast %cst_65 : f32 to vector<8x1xf32>
    %172 = arith.divf %170, %171 : vector<8x1xf32>
    %cst_66 = arith.constant 9.99999974E-6 : f32
    %173 = vector.broadcast %cst_66 : f32 to vector<8x1xf32>
    %174 = arith.addf %172, %173 : vector<8x1xf32>
    %175 = math.rsqrt %174 : vector<8x1xf32>
    %176 = vector.broadcast %175 : vector<8x1xf32> to vector<8x64xf32>
    %177 = arith.mulf %165, %176 : vector<8x64xf32>
    %178 = vector.broadcast %167 : vector<1x64xf32> to vector<8x64xf32>
    %179 = arith.mulf %177, %178 : vector<8x64xf32>
    %180 = arith.truncf %179 : vector<8x64xf32> to vector<8x64xbf16>
    %c1_67 = arith.constant 1 : index
    %c0_68 = arith.constant 0 : index
    %c0_69 = arith.constant 0 : index
    %181 = vector.load %arg2[%c1_67, %c0_68, %c0_69] : memref<2x64x192xbf16, #tpu.memory_space<vmem>>, vector<1x64x192xbf16>
    %182 = vector.shape_cast %181 : vector<1x64x192xbf16> to vector<64x192xbf16>
    %cst_70 = arith.constant dense<0.000000e+00> : vector<8x192xf32>
    %183 = tpu.matmul %180, %182, %cst_70 {dimension_numbers = #tpu.dot_dimension_numbers<[1], [0], [0], [1], [0, 0, 1, 1], [], []>} : vector<8x64xbf16>, vector<64x192xbf16>, vector<8x192xf32> -> vector<8x192xf32>
    %184 = vector.extract_strided_slice %183 {offsets = [0, 0], sizes = [8, 128], strides = [1, 1]} : vector<8x192xf32> to vector<8x128xf32>
    %c120_i32_71 = arith.constant 120 : i32
    %185 = tpu.dynamic_rotate %184 by %c120_i32_71 dim 1 : vector<8x128xf32>, i32 -> vector<8x128xf32>
    %c8_i32_72 = arith.constant 8 : i32
    %186 = tpu.dynamic_rotate %184 by %c8_i32_72 dim 1 : vector<8x128xf32>, i32 -> vector<8x128xf32>
    %187 = arith.mulf %184, %3 : vector<8x128xf32>
    %188 = arith.mulf %185, %4 : vector<8x128xf32>
    %189 = arith.addf %187, %188 : vector<8x128xf32>
    %190 = arith.mulf %186, %5 : vector<8x128xf32>
    %191 = arith.addf %189, %190 : vector<8x128xf32>
    %192 = arith.truncf %191 : vector<8x128xf32> to vector<8x128xbf16>
    %193 = vector.extract_strided_slice %192 {offsets = [0, 0], sizes = [8, 64], strides = [1, 1]} : vector<8x128xbf16> to vector<8x64xbf16>
    %194 = vector.extract_strided_slice %192 {offsets = [0, 64], sizes = [8, 64], strides = [1, 1]} : vector<8x128xbf16> to vector<8x64xbf16>
    %195 = vector.extract_strided_slice %183 {offsets = [0, 128], sizes = [8, 64], strides = [1, 1]} : vector<8x192xf32> to vector<8x64xf32>
    %196 = arith.truncf %195 : vector<8x64xf32> to vector<8x64xbf16>
    %c1_73 = arith.constant 1 : index
    %c0_74 = arith.constant 0 : index
    %c0_75 = arith.constant 0 : index
    %197 = vector.load %arg3[%c1_73, %c0_74, %c0_75] : memref<2x64x64xbf16, #tpu.memory_space<vmem>>, vector<1x64x64xbf16>
    %198 = vector.shape_cast %197 : vector<1x64x64xbf16> to vector<64x64xbf16>
    %cst_76 = arith.constant 0.000000e+00 : f32
    %199 = vector.broadcast %cst_76 : f32 to vector<8x64xf32>
    %200 = vector.extract_strided_slice %193 {offsets = [0, 0], sizes = [8, 16], strides = [1, 1]} : vector<8x64xbf16> to vector<8x16xbf16>
    %201 = vector.extract_strided_slice %194 {offsets = [0, 0], sizes = [8, 16], strides = [1, 1]} : vector<8x64xbf16> to vector<8x16xbf16>
    %cst_77 = arith.constant dense<0.000000e+00> : vector<8x8xf32>
    %202 = tpu.matmul %200, %201, %cst_77 {dimension_numbers = #tpu.dot_dimension_numbers<[1], [1], [0], [0], [0, 0, 1, 0], [], []>} : vector<8x16xbf16>, vector<8x16xbf16>, vector<8x8xf32> -> vector<8x8xf32>
    %cst_78 = arith.constant -1.000000e+30 : f32
    %203 = vector.broadcast %cst_78 : f32 to vector<8x8xf32>
    %204 = arith.select %8, %202, %203 : vector<8x8xi1>, vector<8x8xf32>
    %cst_79 = arith.constant dense<0xFF800000> : vector<8xf32>
    %205 = vector.multi_reduction <maximumf>, %204, %cst_79 [1] : vector<8x8xf32> to vector<8xf32>
    %206 = vector.shape_cast %205 : vector<8xf32> to vector<8x1xf32>
    %207 = vector.broadcast %206 : vector<8x1xf32> to vector<8x8xf32>
    %208 = arith.subf %204, %207 : vector<8x8xf32>
    %209 = math.exp %208 : vector<8x8xf32>
    %cst_80 = arith.constant dense<0.000000e+00> : vector<8xf32>
    %210 = vector.multi_reduction <add>, %209, %cst_80 [1] : vector<8x8xf32> to vector<8xf32>
    %211 = vector.shape_cast %210 : vector<8xf32> to vector<8x1xf32>
    %212 = tpu.reciprocal %211 {approx = true} : vector<8x1xf32> -> vector<8x1xf32>
    %213 = vector.broadcast %212 : vector<8x1xf32> to vector<8x8xf32>
    %214 = arith.mulf %209, %213 : vector<8x8xf32>
    %215 = arith.truncf %214 : vector<8x8xf32> to vector<8x8xbf16>
    %216 = vector.extract_strided_slice %196 {offsets = [0, 0], sizes = [8, 16], strides = [1, 1]} : vector<8x64xbf16> to vector<8x16xbf16>
    %cst_81 = arith.constant dense<0.000000e+00> : vector<8x16xf32>
    %217 = tpu.matmul %215, %216, %cst_81 {dimension_numbers = #tpu.dot_dimension_numbers<[1], [0], [0], [1], [0, 0, 1, 1], [], []>} : vector<8x8xbf16>, vector<8x16xbf16>, vector<8x16xf32> -> vector<8x16xf32>
    %218 = arith.truncf %217 : vector<8x16xf32> to vector<8x16xbf16>
    %219 = vector.extract_strided_slice %198 {offsets = [0, 0], sizes = [16, 64], strides = [1, 1]} : vector<64x64xbf16> to vector<16x64xbf16>
    %cst_82 = arith.constant dense<0.000000e+00> : vector<8x64xf32>
    %220 = tpu.matmul %218, %219, %cst_82 {dimension_numbers = #tpu.dot_dimension_numbers<[1], [0], [0], [1], [0, 0, 1, 1], [], []>} : vector<8x16xbf16>, vector<16x64xbf16>, vector<8x64xf32> -> vector<8x64xf32>
    %221 = arith.addf %199, %220 : vector<8x64xf32>
    %222 = vector.extract_strided_slice %193 {offsets = [0, 16], sizes = [8, 16], strides = [1, 1]} : vector<8x64xbf16> to vector<8x16xbf16>
    %223 = vector.extract_strided_slice %194 {offsets = [0, 16], sizes = [8, 16], strides = [1, 1]} : vector<8x64xbf16> to vector<8x16xbf16>
    %cst_83 = arith.constant dense<0.000000e+00> : vector<8x8xf32>
    %224 = tpu.matmul %222, %223, %cst_83 {dimension_numbers = #tpu.dot_dimension_numbers<[1], [1], [0], [0], [0, 0, 1, 0], [], []>} : vector<8x16xbf16>, vector<8x16xbf16>, vector<8x8xf32> -> vector<8x8xf32>
    %cst_84 = arith.constant -1.000000e+30 : f32
    %225 = vector.broadcast %cst_84 : f32 to vector<8x8xf32>
    %226 = arith.select %8, %224, %225 : vector<8x8xi1>, vector<8x8xf32>
    %cst_85 = arith.constant dense<0xFF800000> : vector<8xf32>
    %227 = vector.multi_reduction <maximumf>, %226, %cst_85 [1] : vector<8x8xf32> to vector<8xf32>
    %228 = vector.shape_cast %227 : vector<8xf32> to vector<8x1xf32>
    %229 = vector.broadcast %228 : vector<8x1xf32> to vector<8x8xf32>
    %230 = arith.subf %226, %229 : vector<8x8xf32>
    %231 = math.exp %230 : vector<8x8xf32>
    %cst_86 = arith.constant dense<0.000000e+00> : vector<8xf32>
    %232 = vector.multi_reduction <add>, %231, %cst_86 [1] : vector<8x8xf32> to vector<8xf32>
    %233 = vector.shape_cast %232 : vector<8xf32> to vector<8x1xf32>
    %234 = tpu.reciprocal %233 {approx = true} : vector<8x1xf32> -> vector<8x1xf32>
    %235 = vector.broadcast %234 : vector<8x1xf32> to vector<8x8xf32>
    %236 = arith.mulf %231, %235 : vector<8x8xf32>
    %237 = arith.truncf %236 : vector<8x8xf32> to vector<8x8xbf16>
    %238 = vector.extract_strided_slice %196 {offsets = [0, 16], sizes = [8, 16], strides = [1, 1]} : vector<8x64xbf16> to vector<8x16xbf16>
    %cst_87 = arith.constant dense<0.000000e+00> : vector<8x16xf32>
    %239 = tpu.matmul %237, %238, %cst_87 {dimension_numbers = #tpu.dot_dimension_numbers<[1], [0], [0], [1], [0, 0, 1, 1], [], []>} : vector<8x8xbf16>, vector<8x16xbf16>, vector<8x16xf32> -> vector<8x16xf32>
    %240 = arith.truncf %239 : vector<8x16xf32> to vector<8x16xbf16>
    %241 = vector.extract_strided_slice %198 {offsets = [16, 0], sizes = [16, 64], strides = [1, 1]} : vector<64x64xbf16> to vector<16x64xbf16>
    %cst_88 = arith.constant dense<0.000000e+00> : vector<8x64xf32>
    %242 = tpu.matmul %240, %241, %cst_88 {dimension_numbers = #tpu.dot_dimension_numbers<[1], [0], [0], [1], [0, 0, 1, 1], [], []>} : vector<8x16xbf16>, vector<16x64xbf16>, vector<8x64xf32> -> vector<8x64xf32>
    %243 = arith.addf %221, %242 : vector<8x64xf32>
    %244 = vector.extract_strided_slice %193 {offsets = [0, 32], sizes = [8, 16], strides = [1, 1]} : vector<8x64xbf16> to vector<8x16xbf16>
    %245 = vector.extract_strided_slice %194 {offsets = [0, 32], sizes = [8, 16], strides = [1, 1]} : vector<8x64xbf16> to vector<8x16xbf16>
    %cst_89 = arith.constant dense<0.000000e+00> : vector<8x8xf32>
    %246 = tpu.matmul %244, %245, %cst_89 {dimension_numbers = #tpu.dot_dimension_numbers<[1], [1], [0], [0], [0, 0, 1, 0], [], []>} : vector<8x16xbf16>, vector<8x16xbf16>, vector<8x8xf32> -> vector<8x8xf32>
    %cst_90 = arith.constant -1.000000e+30 : f32
    %247 = vector.broadcast %cst_90 : f32 to vector<8x8xf32>
    %248 = arith.select %8, %246, %247 : vector<8x8xi1>, vector<8x8xf32>
    %cst_91 = arith.constant dense<0xFF800000> : vector<8xf32>
    %249 = vector.multi_reduction <maximumf>, %248, %cst_91 [1] : vector<8x8xf32> to vector<8xf32>
    %250 = vector.shape_cast %249 : vector<8xf32> to vector<8x1xf32>
    %251 = vector.broadcast %250 : vector<8x1xf32> to vector<8x8xf32>
    %252 = arith.subf %248, %251 : vector<8x8xf32>
    %253 = math.exp %252 : vector<8x8xf32>
    %cst_92 = arith.constant dense<0.000000e+00> : vector<8xf32>
    %254 = vector.multi_reduction <add>, %253, %cst_92 [1] : vector<8x8xf32> to vector<8xf32>
    %255 = vector.shape_cast %254 : vector<8xf32> to vector<8x1xf32>
    %256 = tpu.reciprocal %255 {approx = true} : vector<8x1xf32> -> vector<8x1xf32>
    %257 = vector.broadcast %256 : vector<8x1xf32> to vector<8x8xf32>
    %258 = arith.mulf %253, %257 : vector<8x8xf32>
    %259 = arith.truncf %258 : vector<8x8xf32> to vector<8x8xbf16>
    %260 = vector.extract_strided_slice %196 {offsets = [0, 32], sizes = [8, 16], strides = [1, 1]} : vector<8x64xbf16> to vector<8x16xbf16>
    %cst_93 = arith.constant dense<0.000000e+00> : vector<8x16xf32>
    %261 = tpu.matmul %259, %260, %cst_93 {dimension_numbers = #tpu.dot_dimension_numbers<[1], [0], [0], [1], [0, 0, 1, 1], [], []>} : vector<8x8xbf16>, vector<8x16xbf16>, vector<8x16xf32> -> vector<8x16xf32>
    %262 = arith.truncf %261 : vector<8x16xf32> to vector<8x16xbf16>
    %263 = vector.extract_strided_slice %198 {offsets = [32, 0], sizes = [16, 64], strides = [1, 1]} : vector<64x64xbf16> to vector<16x64xbf16>
    %cst_94 = arith.constant dense<0.000000e+00> : vector<8x64xf32>
    %264 = tpu.matmul %262, %263, %cst_94 {dimension_numbers = #tpu.dot_dimension_numbers<[1], [0], [0], [1], [0, 0, 1, 1], [], []>} : vector<8x16xbf16>, vector<16x64xbf16>, vector<8x64xf32> -> vector<8x64xf32>
    %265 = arith.addf %243, %264 : vector<8x64xf32>
    %266 = vector.extract_strided_slice %193 {offsets = [0, 48], sizes = [8, 16], strides = [1, 1]} : vector<8x64xbf16> to vector<8x16xbf16>
    %267 = vector.extract_strided_slice %194 {offsets = [0, 48], sizes = [8, 16], strides = [1, 1]} : vector<8x64xbf16> to vector<8x16xbf16>
    %cst_95 = arith.constant dense<0.000000e+00> : vector<8x8xf32>
    %268 = tpu.matmul %266, %267, %cst_95 {dimension_numbers = #tpu.dot_dimension_numbers<[1], [1], [0], [0], [0, 0, 1, 0], [], []>} : vector<8x16xbf16>, vector<8x16xbf16>, vector<8x8xf32> -> vector<8x8xf32>
    %cst_96 = arith.constant -1.000000e+30 : f32
    %269 = vector.broadcast %cst_96 : f32 to vector<8x8xf32>
    %270 = arith.select %8, %268, %269 : vector<8x8xi1>, vector<8x8xf32>
    %cst_97 = arith.constant dense<0xFF800000> : vector<8xf32>
    %271 = vector.multi_reduction <maximumf>, %270, %cst_97 [1] : vector<8x8xf32> to vector<8xf32>
    %272 = vector.shape_cast %271 : vector<8xf32> to vector<8x1xf32>
    %273 = vector.broadcast %272 : vector<8x1xf32> to vector<8x8xf32>
    %274 = arith.subf %270, %273 : vector<8x8xf32>
    %275 = math.exp %274 : vector<8x8xf32>
    %cst_98 = arith.constant dense<0.000000e+00> : vector<8xf32>
    %276 = vector.multi_reduction <add>, %275, %cst_98 [1] : vector<8x8xf32> to vector<8xf32>
    %277 = vector.shape_cast %276 : vector<8xf32> to vector<8x1xf32>
    %278 = tpu.reciprocal %277 {approx = true} : vector<8x1xf32> -> vector<8x1xf32>
    %279 = vector.broadcast %278 : vector<8x1xf32> to vector<8x8xf32>
    %280 = arith.mulf %275, %279 : vector<8x8xf32>
    %281 = arith.truncf %280 : vector<8x8xf32> to vector<8x8xbf16>
    %282 = vector.extract_strided_slice %196 {offsets = [0, 48], sizes = [8, 16], strides = [1, 1]} : vector<8x64xbf16> to vector<8x16xbf16>
    %cst_99 = arith.constant dense<0.000000e+00> : vector<8x16xf32>
    %283 = tpu.matmul %281, %282, %cst_99 {dimension_numbers = #tpu.dot_dimension_numbers<[1], [0], [0], [1], [0, 0, 1, 1], [], []>} : vector<8x8xbf16>, vector<8x16xbf16>, vector<8x16xf32> -> vector<8x16xf32>
    %284 = arith.truncf %283 : vector<8x16xf32> to vector<8x16xbf16>
    %285 = vector.extract_strided_slice %198 {offsets = [48, 0], sizes = [16, 64], strides = [1, 1]} : vector<64x64xbf16> to vector<16x64xbf16>
    %cst_100 = arith.constant dense<0.000000e+00> : vector<8x64xf32>
    %286 = tpu.matmul %284, %285, %cst_100 {dimension_numbers = #tpu.dot_dimension_numbers<[1], [0], [0], [1], [0, 0, 1, 1], [], []>} : vector<8x16xbf16>, vector<16x64xbf16>, vector<8x64xf32> -> vector<8x64xf32>
    %287 = arith.addf %265, %286 : vector<8x64xf32>
    %288 = arith.addf %165, %287 : vector<8x64xf32>
    %c1_101 = arith.constant 1 : index
    %c0_102 = arith.constant 0 : index
    %c0_103 = arith.constant 0 : index
    %289 = vector.load %arg7[%c1_101, %c0_102, %c0_103] : memref<2x1x64xf32, #tpu.memory_space<vmem>>, vector<1x1x64xf32>
    %290 = vector.shape_cast %289 : vector<1x1x64xf32> to vector<1x64xf32>
    %291 = arith.mulf %288, %288 : vector<8x64xf32>
    %cst_104 = arith.constant dense<0.000000e+00> : vector<8xf32>
    %292 = vector.multi_reduction <add>, %291, %cst_104 [1] : vector<8x64xf32> to vector<8xf32>
    %293 = vector.shape_cast %292 : vector<8xf32> to vector<8x1xf32>
    %cst_105 = arith.constant 6.400000e+01 : f32
    %294 = vector.broadcast %cst_105 : f32 to vector<8x1xf32>
    %295 = arith.divf %293, %294 : vector<8x1xf32>
    %cst_106 = arith.constant 9.99999974E-6 : f32
    %296 = vector.broadcast %cst_106 : f32 to vector<8x1xf32>
    %297 = arith.addf %295, %296 : vector<8x1xf32>
    %298 = math.rsqrt %297 : vector<8x1xf32>
    %299 = vector.broadcast %298 : vector<8x1xf32> to vector<8x64xf32>
    %300 = arith.mulf %288, %299 : vector<8x64xf32>
    %301 = vector.broadcast %290 : vector<1x64xf32> to vector<8x64xf32>
    %302 = arith.mulf %300, %301 : vector<8x64xf32>
    %303 = arith.truncf %302 : vector<8x64xf32> to vector<8x64xbf16>
    %c1_107 = arith.constant 1 : index
    %c0_108 = arith.constant 0 : index
    %c0_109 = arith.constant 0 : index
    %304 = vector.load %arg4[%c1_107, %c0_108, %c0_109] : memref<2x64x256xbf16, #tpu.memory_space<vmem>>, vector<1x64x256xbf16>
    %305 = vector.shape_cast %304 : vector<1x64x256xbf16> to vector<64x256xbf16>
    %cst_110 = arith.constant dense<0.000000e+00> : vector<8x256xf32>
    %306 = tpu.matmul %303, %305, %cst_110 {dimension_numbers = #tpu.dot_dimension_numbers<[1], [0], [0], [1], [0, 0, 1, 1], [], []>} : vector<8x64xbf16>, vector<64x256xbf16>, vector<8x256xf32> -> vector<8x256xf32>
    %307 = vector.extract_strided_slice %306 {offsets = [0, 0], sizes = [8, 128], strides = [1, 1]} : vector<8x256xf32> to vector<8x128xf32>
    %308 = vector.extract_strided_slice %306 {offsets = [0, 128], sizes = [8, 128], strides = [1, 1]} : vector<8x256xf32> to vector<8x128xf32>
    %cst_111 = arith.constant 0.000000e+00 : f32
    %309 = vector.broadcast %cst_111 : f32 to vector<8x128xf32>
    %310 = arith.subf %309, %307 : vector<8x128xf32>
    %311 = math.exp %310 : vector<8x128xf32>
    %cst_112 = arith.constant 1.000000e+00 : f32
    %312 = vector.broadcast %cst_112 : f32 to vector<8x128xf32>
    %313 = arith.addf %312, %311 : vector<8x128xf32>
    %cst_113 = arith.constant 1.000000e+00 : f32
    %314 = vector.broadcast %cst_113 : f32 to vector<8x128xf32>
    %315 = arith.divf %314, %313 : vector<8x128xf32>
    %316 = arith.mulf %307, %315 : vector<8x128xf32>
    %317 = arith.mulf %316, %308 : vector<8x128xf32>
    %318 = arith.truncf %317 : vector<8x128xf32> to vector<8x128xbf16>
    %c1_114 = arith.constant 1 : index
    %c0_115 = arith.constant 0 : index
    %c0_116 = arith.constant 0 : index
    %319 = vector.load %arg5[%c1_114, %c0_115, %c0_116] : memref<2x128x64xbf16, #tpu.memory_space<vmem>>, vector<1x128x64xbf16>
    %320 = vector.shape_cast %319 : vector<1x128x64xbf16> to vector<128x64xbf16>
    %cst_117 = arith.constant dense<0.000000e+00> : vector<8x64xf32>
    %321 = tpu.matmul %318, %320, %cst_117 {dimension_numbers = #tpu.dot_dimension_numbers<[1], [0], [0], [1], [0, 0, 1, 1], [], []>} : vector<8x128xbf16>, vector<128x64xbf16>, vector<8x64xf32> -> vector<8x64xf32>
    %322 = arith.addf %288, %321 : vector<8x64xf32>
    %c0_118 = arith.constant 0 : index
    %c0_119 = arith.constant 0 : index
    %323 = vector.load %arg8[%c0_118, %c0_119] : memref<1x64xf32, #tpu.memory_space<vmem>>, vector<1x64xf32>
    %324 = arith.mulf %322, %322 : vector<8x64xf32>
    %cst_120 = arith.constant dense<0.000000e+00> : vector<8xf32>
    %325 = vector.multi_reduction <add>, %324, %cst_120 [1] : vector<8x64xf32> to vector<8xf32>
    %326 = vector.shape_cast %325 : vector<8xf32> to vector<8x1xf32>
    %cst_121 = arith.constant 6.400000e+01 : f32
    %327 = vector.broadcast %cst_121 : f32 to vector<8x1xf32>
    %328 = arith.divf %326, %327 : vector<8x1xf32>
    %cst_122 = arith.constant 9.99999974E-6 : f32
    %329 = vector.broadcast %cst_122 : f32 to vector<8x1xf32>
    %330 = arith.addf %328, %329 : vector<8x1xf32>
    %331 = math.rsqrt %330 : vector<8x1xf32>
    %332 = vector.broadcast %331 : vector<8x1xf32> to vector<8x64xf32>
    %333 = arith.mulf %322, %332 : vector<8x64xf32>
    %334 = vector.broadcast %323 : vector<1x64xf32> to vector<8x64xf32>
    %335 = arith.mulf %333, %334 : vector<8x64xf32>
    %336 = arith.truncf %335 : vector<8x64xf32> to vector<8x64xbf16>
    %c0_123 = arith.constant 0 : index
    %c0_124 = arith.constant 0 : index
    %337 = vector.load %arg12[%c0_123, %c0_124] : memref<256x64xbf16, #tpu.memory_space<vmem>>, vector<256x64xbf16>
    %cst_125 = arith.constant dense<0.000000e+00> : vector<8x256xf32>
    %338 = tpu.matmul %336, %337, %cst_125 {dimension_numbers = #tpu.dot_dimension_numbers<[1], [1], [0], [0], [0, 0, 1, 0], [], []>} : vector<8x64xbf16>, vector<256x64xbf16>, vector<8x256xf32> -> vector<8x256xf32>
    %c0_126 = arith.constant 0 : index
    %c0_127 = arith.constant 0 : index
    %c0_128 = arith.constant 0 : index
    %339 = vector.load %arg13[%c0_126, %c0_127, %c0_128] : memref<1x8x256xf32, #tpu.memory_space<vmem>>, vector<1x8x256xf32>
    %340 = vector.shape_cast %339 : vector<1x8x256xf32> to vector<8x256xf32>
    %341 = vector.shape_cast %338 : vector<8x256xf32> to vector<1x8x256xf32>
    tpu.vector_store %arg13[%c0_126, %c0_127, %c0_128], %341 {strides = array<i32>} : memref<1x8x256xf32, #tpu.memory_space<vmem>>, vector<1x8x256xf32>,
    return
  }
  func.func @transform_0(%arg0: i32) -> (i32, i32, i32) {
    %c0_i32 = arith.constant 0 : i32
    %c0_i32_0 = arith.constant 0 : i32
    %c0_i32_1 = arith.constant 0 : i32
    return %arg0, %c0_i32, %c0_i32_0 : i32, i32, i32
  }
  func.func @transform_1(%arg0: i32) -> (i32, i32, i32) {
    %c0_i32 = arith.constant 0 : i32
    %c0_i32_0 = arith.constant 0 : i32
    %c0_i32_1 = arith.constant 0 : i32
    %c0_i32_2 = arith.constant 0 : i32
    return %c0_i32, %c0_i32_0, %c0_i32_1 : i32, i32, i32
  }
  func.func @transform_2(%arg0: i32) -> (i32, i32, i32) {
    %c0_i32 = arith.constant 0 : i32
    %c0_i32_0 = arith.constant 0 : i32
    %c0_i32_1 = arith.constant 0 : i32
    %c0_i32_2 = arith.constant 0 : i32
    return %c0_i32, %c0_i32_0, %c0_i32_1 : i32, i32, i32
  }
  func.func @transform_3(%arg0: i32) -> (i32, i32, i32) {
    %c0_i32 = arith.constant 0 : i32
    %c0_i32_0 = arith.constant 0 : i32
    %c0_i32_1 = arith.constant 0 : i32
    %c0_i32_2 = arith.constant 0 : i32
    return %c0_i32, %c0_i32_0, %c0_i32_1 : i32, i32, i32
  }
  func.func @transform_4(%arg0: i32) -> (i32, i32, i32) {
    %c0_i32 = arith.constant 0 : i32
    %c0_i32_0 = arith.constant 0 : i32
    %c0_i32_1 = arith.constant 0 : i32
    %c0_i32_2 = arith.constant 0 : i32
    return %c0_i32, %c0_i32_0, %c0_i32_1 : i32, i32, i32
  }
  func.func @transform_5(%arg0: i32) -> (i32, i32, i32) {
    %c0_i32 = arith.constant 0 : i32
    %c0_i32_0 = arith.constant 0 : i32
    %c0_i32_1 = arith.constant 0 : i32
    %c0_i32_2 = arith.constant 0 : i32
    return %c0_i32, %c0_i32_0, %c0_i32_1 : i32, i32, i32
  }
  func.func @transform_6(%arg0: i32) -> (i32, i32, i32) {
    %c0_i32 = arith.constant 0 : i32
    %c0_i32_0 = arith.constant 0 : i32
    %c0_i32_1 = arith.constant 0 : i32
    %c0_i32_2 = arith.constant 0 : i32
    return %c0_i32, %c0_i32_0, %c0_i32_1 : i32, i32, i32
  }
  func.func @transform_7(%arg0: i32) -> (i32, i32) {
    %c0_i32 = arith.constant 0 : i32
    %c0_i32_0 = arith.constant 0 : i32
    %c0_i32_1 = arith.constant 0 : i32
    return %c0_i32, %c0_i32_0 : i32, i32
  }
  func.func @transform_8(%arg0: i32) -> (i32, i32) {
    %c0_i32 = arith.constant 0 : i32
    %c0_i32_0 = arith.constant 0 : i32
    %c0_i32_1 = arith.constant 0 : i32
    return %c0_i32, %c0_i32_0 : i32, i32
  }
  func.func @transform_9(%arg0: i32) -> (i32, i32) {
    %c0_i32 = arith.constant 0 : i32
    %c0_i32_0 = arith.constant 0 : i32
    %c0_i32_1 = arith.constant 0 : i32
    return %c0_i32, %c0_i32_0 : i32, i32
  }
  func.func @transform_10(%arg0: i32) -> (i32, i32) {
    %c0_i32 = arith.constant 0 : i32
    %c0_i32_0 = arith.constant 0 : i32
    %c0_i32_1 = arith.constant 0 : i32
    return %c0_i32, %c0_i32_0 : i32, i32
  }
  func.func @transform_11(%arg0: i32) -> (i32, i32) {
    %c0_i32 = arith.constant 0 : i32
    %c0_i32_0 = arith.constant 0 : i32
    %c0_i32_1 = arith.constant 0 : i32
    return %c0_i32, %c0_i32_0 : i32, i32
  }
  func.func @transform_12(%arg0: i32) -> (i32, i32, i32) {
    %c0_i32 = arith.constant 0 : i32
    %c0_i32_0 = arith.constant 0 : i32
    %c0_i32_1 = arith.constant 0 : i32
    return %arg0, %c0_i32, %c0_i32_0 : i32, i32, i32
  }
}

</mosaic_0001>

<llo_original>
// kernel: tile.24
$region0: #{tile.24}
  %s0 = inlined_call_operand.vmem [shape: f32[8,8,16], index: 0, kind: input, shape index: {}]
  %s1 = inlined_call_operand.vmem [shape: f32[8,128], index: 1, kind: output, shape index: {}]
  %v2 = vld [vmem:[%s0] ss:$8 sm:$0xf]
  %v3 = vld [vmem:[%s0] ss:$8 sm:$0xf0]
  %vm4 = vcmask 1047556
  %v5 = vsel %vm4, %v3, %v2
  %vm6 = vcmask 130048
  %7 = vst.msk [vmem:[%s1] sm:$0xff] %vm6, %v5
  %s8 = scalar_lea.vmem %s0, 7
  %v9 = vld [vmem:[%s8] ss:$8 sm:$0xf]
  %s10 = scalar_lea.vmem %s0, 7
  %v11 = vld [vmem:[%s10] ss:$8 sm:$0xf0]
  %vm12 = vcmask 1047556
  %v13 = vsel %vm12, %v11, %v9
  %14 = vrot.lane.b32.xlu0 %v13, 112
  %v15 = vpop.permute.xlu0 %14
  %vm16 = vcmask 1048448
  %17 = vst.msk [vmem:[%s1] sm:$0xff] %vm16, %v15
  %s18 = scalar_lea.vmem %s0, 6
  %v19 = vld [vmem:[%s18] ss:$8 sm:$0xf]
  %s20 = scalar_lea.vmem %s0, 6
  %v21 = vld [vmem:[%s20] ss:$8 sm:$0xf0]
  %vm22 = vcmask 1047556
  %v23 = vsel %vm22, %v21, %v19
  %24 = vrot.lane.b32.xlu0 %v23, 96
  %v25 = vpop.permute.xlu0 %24
  %vm26 = vcmask 917248
  %27 = vst.msk [vmem:[%s1] sm:$0xff] %vm26, %v25
  %s28 = scalar_lea.vmem %s0, 5
  %v29 = vld [vmem:[%s28] ss:$8 sm:$0xf]
  %s30 = scalar_lea.vmem %s0, 5
  %v31 = vld [vmem:[%s30] ss:$8 sm:$0xf0]
  %vm32 = vcmask 1047556
  %v33 = vsel %vm32, %v31, %v29
  %34 = vrot.lane.b32.xlu0 %v33, 80
  %v35 = vpop.permute.xlu0 %34
  %vm36 = vcmask 786048
  %37 = vst.msk [vmem:[%s1] sm:$0xff] %vm36, %v35
  %s38 = scalar_lea.vmem %s0, 4
  %v39 = vld [vmem:[%s38] ss:$8 sm:$0xf]
  %s40 = scalar_lea.vmem %s0, 4
  %v41 = vld [vmem:[%s40] ss:$8 sm:$0xf0]
  %vm42 = vcmask 1047556
  %v43 = vsel %vm42, %v41, %v39
  %44 = vrot.lane.b32.xlu0 %v43, 64
  %v45 = vpop.permute.xlu0 %44
  %vm46 = vcmask 654848
  %47 = vst.msk [vmem:[%s1] sm:$0xff] %vm46, %v45
  %s48 = scalar_lea.vmem %s0, 3
  %v49 = vld [vmem:[%s48] ss:$8 sm:$0xf]
  %s50 = scalar_lea.vmem %s0, 3
  %v51 = vld [vmem:[%s50] ss:$8 sm:$0xf0]
  %vm52 = vcmask 1047556
  %v53 = vsel %vm52, %v51, %v49
  %54 = vrot.lane.b32.xlu0 %v53, 48
  %v55 = vpop.permute.xlu0 %54
  %vm56 = vcmask 523648
  %57 = vst.msk [vmem:[%s1] sm:$0xff] %vm56, %v55
  %s58 = scalar_lea.vmem %s0, 2
  %v59 = vld [vmem:[%s58] ss:$8 sm:$0xf]
  %s60 = scalar_lea.vmem %s0, 2
  %v61 = vld [vmem:[%s60] ss:$8 sm:$0xf0]
  %vm62 = vcmask 1047556
  %v63 = vsel %vm62, %v61, %v59
  %64 = vrot.lane.b32.xlu0 %v63, 32
  %v65 = vpop.permute.xlu0 %64
  %vm66 = vcmask 392448
  %67 = vst.msk [vmem:[%s1] sm:$0xff] %vm66, %v65
  %s68 = scalar_lea.vmem %s0, 1
  %v69 = vld [vmem:[%s68] ss:$8 sm:$0xf]
  %s70 = scalar_lea.vmem %s0, 1
  %v71 = vld [vmem:[%s70] ss:$8 sm:$0xf0]
  %vm72 = vcmask 1047556
  %v73 = vsel %vm72, %v71, %v69
  %74 = vrot.lane.b32.xlu0 %v73, 16
  %v75 = vpop.permute.xlu0 %74
  %vm76 = vcmask 261248
  %77 = vst.msk [vmem:[%s1] sm:$0xff] %vm76, %v75

// kernel: smollm_forward.1
$region0: #{smollm_forward.1}
  #allocation0 [shape = 'u32[]', space=smem, size = 0x4, offset = 0x4, fixed_abs, tag = 'smem constant byte address 0x4 - core index']
  #allocation1 [shape = 'u32[144,128]{1,0:T(1,128)}', space=vmem, size = 0x12000, scoped, tag = 'internal scratch']
  %s0 = inlined_call_operand.vmem [shape: bf16[2,8,64], index: 0, kind: input, shape index: {}]
  %s1 = inlined_call_operand.vmem [shape: bf16[2,64,192], index: 1, kind: input, shape index: {}]
  %s2 = inlined_call_operand.vmem [shape: bf16[2,64,64], index: 2, kind: input, shape index: {}]
  %s3 = inlined_call_operand.vmem [shape: bf16[2,64,256], index: 3, kind: input, shape index: {}]
  %s4 = inlined_call_operand.vmem [shape: bf16[2,128,64], index: 4, kind: input, shape index: {}]
  %s5 = inlined_call_operand.vmem [shape: f32[2,1,64], index: 5, kind: input, shape index: {}]
  %s6 = inlined_call_operand.vmem [shape: f32[2,1,64], index: 6, kind: input, shape index: {}]
  %s7 = inlined_call_operand.vmem [shape: f32[1,64], index: 7, kind: input, shape index: {}]
  %s8 = inlined_call_operand.vmem [shape: f32[8,128], index: 8, kind: input, shape index: {}]
  %s9 = inlined_call_operand.vmem [shape: f32[8,128], index: 9, kind: input, shape index: {}]
  %s10 = inlined_call_operand.vmem [shape: f32[8,128], index: 10, kind: input, shape index: {}]
  %s11 = inlined_call_operand.vmem [shape: bf16[256,64], index: 11, kind: input, shape index: {}]
  %s12 = inlined_call_operand.hbm [shape: f32[2,8,256], index: 12, kind: output, shape index: {}]
  %s13 = sld [smem:[#allocation0]]
  $region81: #{smollm_forward.1} parent=0
    _
  %s15 = ssub.s32 1, %s13
  %s16 = scalar_select 0, %s15, %s13
  $region1: #{smollm_forward.1} parent=0
    #allocation2 [shape = 'u8[16384]{0}', space=vmem, size = 0x4000, scoped, tag = 'output window, operand 0']
    #allocation3 [shape = 's32[2]{0}', space=sflag, size = 0x8, scoped, tag = 'scoped memory for smollm_forward.1']
    %17 = vsyncpa [#allocation3], 0
    %s18 = scalar_lea.sflag [#allocation3], 1
    %19 = vsyncpa %s18, 0
    loop: start=0, step=1, limit=4
    $region2: #{smollm_forward.1} parent=1 // loop_pre_header
      _
    $region3: #{smollm_forward.1} parent=1 // loop_header
      %s21 = sphi 0, %s25
      %p22 = scmp.ge.s32.totalorder %s21, 4
      %s31 = sphi 0, %s33
      %s34 = sphi 0, %s31
      %s35 = sphi 0, %s34
      %s51 = sphi 0, %s35
      %s55 = sphi 0, %s55
      %s57 = sphi 0, %s55
      %s58 = sphi 0, %s57
      %s72 = sphi 0, %s58
      %s76 = sphi 0, %s76
      %s78 = sphi 0, %s76
      %s79 = sphi 0, %s78
      %s93 = sphi 0, %s79
      %s97 = sphi 0, %s97
      %s99 = sphi 0, %s97
      %s100 = sphi 0, %s99
      %s114 = sphi 0, %s100
      %s118 = sphi 0, %s118
      %s120 = sphi 0, %s118
      %s121 = sphi 0, %s120
      %s135 = sphi 0, %s121
      %s139 = sphi 0, %s139
      %s141 = sphi 0, %s139
      %s142 = sphi 0, %s141
      %s156 = sphi 0, %s142
      %s160 = sphi 0, %s160
      %s162 = sphi 0, %s160
      %s163 = sphi 0, %s162
      %s177 = sphi 0, %s163
      %s181 = sphi 0, %s181
      %s183 = sphi 0, %s181
      %s184 = sphi 0, %s183
      %s198 = sphi 0, %s184
      %s202 = sphi 0, %s202
      %s204 = sphi 0, %s202
      %s205 = sphi 0, %s204
      %s219 = sphi 0, %s205
      %s223 = sphi 0, %s223
      %s225 = sphi 0, %s223
      %s226 = sphi 0, %s225
      %s240 = sphi 0, %s226
      %s244 = sphi 0, %s244
      %s246 = sphi 0, %s244
      %s247 = sphi 0, %s246
      %s261 = sphi 0, %s247
      %s265 = sphi 0, %s265
      %s267 = sphi 0, %s265
      %s268 = sphi 0, %s267
      %s282 = sphi 0, %s268
      %s288 = sphi 0, %s290
      %s291 = sphi 0, %s288
      %s292 = sphi 0, %s291
      %s308 = sphi 0, %s292
    $region4: #{smollm_forward.1} parent=1 // loop_header_branch
      %24 = sbr.rel (%p22) target = $region8
    $region5: #{smollm_forward.1} parent=1 // loop_body
      %s26 = ssub.s32 %s21, 1
      %s27 = ssub.s32 %s21, 2
      %s28 = sadd.s32 %s21, 1
      %s29 = ssub.s32 %s21, %s28
      %p30 = scmp.eq.s32.totalorder %s29, 0
      %s32 = sadd.s32 %s31, 1
      %s33 = scalar_select %p30, %s31, %s32
      %p36 = pneg %p30
      %p37 = scmp.eq.s32.totalorder %s21, 1
      %p38 = por %p36, %p37
      %p39 = scmp.ne.s32.totalorder %s31, %s34
      %p40 = scmp.eq.s32.totalorder %s21, 0
      %p41 = por %p39, %p40
      %p42 = scmp.ne.s32.totalorder %s31, %s34
      %p43 = scmp.eq.s32.totalorder %s26, 1
      %p44 = por %p42, %p43
      %p45 = scmp.ne.s32.totalorder %s34, %s35
      %p46 = scmp.eq.s32.totalorder %s26, 0
      %p47 = por %p45, %p46
      %p48 = scmp.ne.s32.totalorder %s34, %s35
      %p49 = scmp.eq.s32.totalorder %s27, 1
      %p50 = por %p48, %p49
      %p52 = scmp.ne.s32.totalorder %s35, %s51
      %p53 = scmp.eq.s32.totalorder %s27, 0
      %p54 = por %p52, %p53
      %s56 = sadd.s32 %s55, 1
      %p59 = scmp.eq.s32.totalorder %s21, 1
      %p60 = scmp.ne.s32.totalorder %s55, %s57
      %p61 = scmp.eq.s32.totalorder %s21, 0
      %p62 = por %p60, %p61
      %p63 = scmp.ne.s32.totalorder %s55, %s57
      %p64 = scmp.eq.s32.totalorder %s26, 1
      %p65 = por %p63, %p64
      %p66 = scmp.ne.s32.totalorder %s57, %s58
      %p67 = scmp.eq.s32.totalorder %s26, 0
      %p68 = por %p66, %p67
      %p69 = scmp.ne.s32.totalorder %s57, %s58
      %p70 = scmp.eq.s32.totalorder %s27, 1
      %p71 = por %p69, %p70
      %p73 = scmp.ne.s32.totalorder %s58, %s72
      %p74 = scmp.eq.s32.totalorder %s27, 0
      %p75 = por %p73, %p74
      %s77 = sadd.s32 %s76, 1
      %p80 = scmp.eq.s32.totalorder %s21, 1
      %p81 = scmp.ne.s32.totalorder %s76, %s78
      %p82 = scmp.eq.s32.totalorder %s21, 0
      %p83 = por %p81, %p82
      %p84 = scmp.ne.s32.totalorder %s76, %s78
      %p85 = scmp.eq.s32.totalorder %s26, 1
      %p86 = por %p84, %p85
      %p87 = scmp.ne.s32.totalorder %s78, %s79
      %p88 = scmp.eq.s32.totalorder %s26, 0
      %p89 = por %p87, %p88
      %p90 = scmp.ne.s32.totalorder %s78, %s79
      %p91 = scmp.eq.s32.totalorder %s27, 1
      %p92 = por %p90, %p91
      %p94 = scmp.ne.s32.totalorder %s79, %s93
      %p95 = scmp.eq.s32.totalorder %s27, 0
      %p96 = por %p94, %p95
      %s98 = sadd.s32 %s97, 1
      %p101 = scmp.eq.s32.totalorder %s21, 1
      %p102 = scmp.ne.s32.totalorder %s97, %s99
      %p103 = scmp.eq.s32.totalorder %s21, 0
      %p104 = por %p102, %p103
      %p105 = scmp.ne.s32.totalorder %s97, %s99
      %p106 = scmp.eq.s32.totalorder %s26, 1
      %p107 = por %p105, %p106
      %p108 = scmp.ne.s32.totalorder %s99, %s100
      %p109 = scmp.eq.s32.totalorder %s26, 0
      %p110 = por %p108, %p109
      %p111 = scmp.ne.s32.totalorder %s99, %s100
      %p112 = scmp.eq.s32.totalorder %s27, 1
      %p113 = por %p111, %p112
      %p115 = scmp.ne.s32.totalorder %s100, %s114
      %p116 = scmp.eq.s32.totalorder %s27, 0
      %p117 = por %p115, %p116
      %s119 = sadd.s32 %s118, 1
      %p122 = scmp.eq.s32.totalorder %s21, 1
      %p123 = scmp.ne.s32.totalorder %s118, %s120
      %p124 = scmp.eq.s32.totalorder %s21, 0
      %p125 = por %p123, %p124
      %p126 = scmp.ne.s32.totalorder %s118, %s120
      %p127 = scmp.eq.s32.totalorder %s26, 1
      %p128 = por %p126, %p127
      %p129 = scmp.ne.s32.totalorder %s120, %s121
      %p130 = scmp.eq.s32.totalorder %s26, 0
      %p131 = por %p129, %p130
      %p132 = scmp.ne.s32.totalorder %s120, %s121
      %p133 = scmp.eq.s32.totalorder %s27, 1
      %p134 = por %p132, %p133
      %p136 = scmp.ne.s32.totalorder %s121, %s135
      %p137 = scmp.eq.s32.totalorder %s27, 0
      %p138 = por %p136, %p137
      %s140 = sadd.s32 %s139, 1
      %p143 = scmp.eq.s32.totalorder %s21, 1
      %p144 = scmp.ne.s32.totalorder %s139, %s141
      %p145 = scmp.eq.s32.totalorder %s21, 0
      %p146 = por %p144, %p145
      %p147 = scmp.ne.s32.totalorder %s139, %s141
      %p148 = scmp.eq.s32.totalorder %s26, 1
      %p149 = por %p147, %p148
      %p150 = scmp.ne.s32.totalorder %s141, %s142
      %p151 = scmp.eq.s32.totalorder %s26, 0
      %p152 = por %p150, %p151
      %p153 = scmp.ne.s32.totalorder %s141, %s142
      %p154 = scmp.eq.s32.totalorder %s27, 1
      %p155 = por %p153, %p154
      %p157 = scmp.ne.s32.totalorder %s142, %s156
      %p158 = scmp.eq.s32.totalorder %s27, 0
      %p159 = por %p157, %p158
      %s161 = sadd.s32 %s160, 1
      %p164 = scmp.eq.s32.totalorder %s21, 1
      %p165 = scmp.ne.s32.totalorder %s160, %s162
      %p166 = scmp.eq.s32.totalorder %s21, 0
      %p167 = por %p165, %p166
      %p168 = scmp.ne.s32.totalorder %s160, %s162
      %p169 = scmp.eq.s32.totalorder %s26, 1
      %p170 = por %p168, %p169
      %p171 = scmp.ne.s32.totalorder %s162, %s163
      %p172 = scmp.eq.s32.totalorder %s26, 0
      %p173 = por %p171, %p172
      %p174 = scmp.ne.s32.totalorder %s162, %s163
      %p175 = scmp.eq.s32.totalorder %s27, 1
      %p176 = por %p174, %p175
      %p178 = scmp.ne.s32.totalorder %s163, %s177
      %p179 = scmp.eq.s32.totalorder %s27, 0
      %p180 = por %p178, %p179
      %s182 = sadd.s32 %s181, 1
      %p185 = scmp.eq.s32.totalorder %s21, 1
      %p186 = scmp.ne.s32.totalorder %s181, %s183
      %p187 = scmp.eq.s32.totalorder %s21, 0
      %p188 = por %p186, %p187
      %p189 = scmp.ne.s32.totalorder %s181, %s183
      %p190 = scmp.eq.s32.totalorder %s26, 1
      %p191 = por %p189, %p190
      %p192 = scmp.ne.s32.totalorder %s183, %s184
      %p193 = scmp.eq.s32.totalorder %s26, 0
      %p194 = por %p192, %p193
      %p195 = scmp.ne.s32.totalorder %s183, %s184
      %p196 = scmp.eq.s32.totalorder %s27, 1
      %p197 = por %p195, %p196
      %p199 = scmp.ne.s32.totalorder %s184, %s198
      %p200 = scmp.eq.s32.totalorder %s27, 0
      %p201 = por %p199, %p200
      %s203 = sadd.s32 %s202, 1
      %p206 = scmp.eq.s32.totalorder %s21, 1
      %p207 = scmp.ne.s32.totalorder %s202, %s204
      %p208 = scmp.eq.s32.totalorder %s21, 0
      %p209 = por %p207, %p208
      %p210 = scmp.ne.s32.totalorder %s202, %s204
      %p211 = scmp.eq.s32.totalorder %s26, 1
      %p212 = por %p210, %p211
      %p213 = scmp.ne.s32.totalorder %s204, %s205
      %p214 = scmp.eq.s32.totalorder %s26, 0
      %p215 = por %p213, %p214
      %p216 = scmp.ne.s32.totalorder %s204, %s205
      %p217 = scmp.eq.s32.totalorder %s27, 1
      %p218 = por %p216, %p217
      %p220 = scmp.ne.s32.totalorder %s205, %s219
      %p221 = scmp.eq.s32.totalorder %s27, 0
      %p222 = por %p220, %p221
      %s224 = sadd.s32 %s223, 1
      %p227 = scmp.eq.s32.totalorder %s21, 1
      %p228 = scmp.ne.s32.totalorder %s223, %s225
      %p229 = scmp.eq.s32.totalorder %s21, 0
      %p230 = por %p228, %p229
      %p231 = scmp.ne.s32.totalorder %s223, %s225
      %p232 = scmp.eq.s32.totalorder %s26, 1
      %p233 = por %p231, %p232
      %p234 = scmp.ne.s32.totalorder %s225, %s226
      %p235 = scmp.eq.s32.totalorder %s26, 0
      %p236 = por %p234, %p235
      %p237 = scmp.ne.s32.totalorder %s225, %s226
      %p238 = scmp.eq.s32.totalorder %s27, 1
      %p239 = por %p237, %p238
      %p241 = scmp.ne.s32.totalorder %s226, %s240
      %p242 = scmp.eq.s32.totalorder %s27, 0
      %p243 = por %p241, %p242
      %s245 = sadd.s32 %s244, 1
      %p248 = scmp.eq.s32.totalorder %s21, 1
      %p249 = scmp.ne.s32.totalorder %s244, %s246
      %p250 = scmp.eq.s32.totalorder %s21, 0
      %p251 = por %p249, %p250
      %p252 = scmp.ne.s32.totalorder %s244, %s246
      %p253 = scmp.eq.s32.totalorder %s26, 1
      %p254 = por %p252, %p253
      %p255 = scmp.ne.s32.totalorder %s246, %s247
      %p256 = scmp.eq.s32.totalorder %s26, 0
      %p257 = por %p255, %p256
      %p258 = scmp.ne.s32.totalorder %s246, %s247
      %p259 = scmp.eq.s32.totalorder %s27, 1
      %p260 = por %p258, %p259
      %p262 = scmp.ne.s32.totalorder %s247, %s261
      %p263 = scmp.eq.s32.totalorder %s27, 0
      %p264 = por %p262, %p263
      %s266 = sadd.s32 %s265, 1
      %p269 = scmp.eq.s32.totalorder %s21, 1
      %p270 = scmp.ne.s32.totalorder %s265, %s267
      %p271 = scmp.eq.s32.totalorder %s21, 0
      %p272 = por %p270, %p271
      %p273 = scmp.ne.s32.totalorder %s265, %s267
      %p274 = scmp.eq.s32.totalorder %s26, 1
      %p275 = por %p273, %p274
      %p276 = scmp.ne.s32.totalorder %s267, %s268
      %p277 = scmp.eq.s32.totalorder %s26, 0
      %p278 = por %p276, %p277
      %p279 = scmp.ne.s32.totalorder %s267, %s268
      %p280 = scmp.eq.s32.totalorder %s27, 1
      %p281 = por %p279, %p280
      %p283 = scmp.ne.s32.totalorder %s268, %s282
      %p284 = scmp.eq.s32.totalorder %s27, 0
      %p285 = por %p283, %p284
      %s286 = ssub.s32 %s21, %s28
      %p287 = scmp.eq.s32.totalorder %s286, 0
      %s289 = sadd.s32 %s288, 1
      %s290 = scalar_select %p287, %s288, %s289
      %p293 = pneg %p287
      %p294 = scmp.eq.s32.totalorder %s21, 1
      %p295 = por %p293, %p294
      %p296 = scmp.ne.s32.totalorder %s288, %s291
      %p297 = scmp.eq.s32.totalorder %s21, 0
      %p298 = por %p296, %p297
      %p299 = scmp.ne.s32.totalorder %s288, %s291
      %p300 = scmp.eq.s32.totalorder %s26, 1
      %p301 = por %p299, %p300
      %p302 = scmp.ne.s32.totalorder %s291, %s292
      %p303 = scmp.eq.s32.totalorder %s26, 0
      %p304 = por %p302, %p303
      %p305 = scmp.ne.s32.totalorder %s291, %s292
      %p306 = scmp.eq.s32.totalorder %s27, 1
      %p307 = por %p305, %p306
      %p309 = scmp.ne.s32.totalorder %s292, %s308
      %p310 = scmp.eq.s32.totalorder %s27, 0
      %p311 = por %p309, %p310
      %p312 = scmp.le.s32.totalorder 1, %s21
      %p313 = scmp.lt.s32.totalorder %s21, 3
      %p314 = pnand %p312, %p313
      %p315 = pneg %p314
      // Predicated region
      $region9: #{smollm_forward.1} parent=5 // pred_check
        _
      $region10: #{smollm_forward.1} parent=5 // pred_check_branch
        %317 = sbr.rel (%p314) target = $region12
      $region11: #{smollm_forward.1} parent=5 // pred_region
        %s318 = ssub.s32 %s21, 1
        // Predicated region
        $region13: #{smollm_forward.1} parent=11 // pred_check
          %p319 = pneg %p68
        $region14: #{smollm_forward.1} parent=11 // pred_check_branch
          %321 = sbr.rel (%p319) target = $region16
        $region15: #{smollm_forward.1} parent=11 // pred_region
          _
        $region16: #{smollm_forward.1} parent=11 // pred_fallthru
          _
        // Predicated region
        $region17: #{smollm_forward.1} parent=11 // pred_check
          %p322 = pneg %p89
        $region18: #{smollm_forward.1} parent=11 // pred_check_branch
          %324 = sbr.rel (%p322) target = $region20
        $region19: #{smollm_forward.1} parent=11 // pred_region
          _
        $region20: #{smollm_forward.1} parent=11 // pred_fallthru
          _
        // Predicated region
        $region21: #{smollm_forward.1} parent=11 // pred_check
          %p325 = pneg %p110
        $region22: #{smollm_forward.1} parent=11 // pred_check_branch
          %327 = sbr.rel (%p325) target = $region24
        $region23: #{smollm_forward.1} parent=11 // pred_region
          _
        $region24: #{smollm_forward.1} parent=11 // pred_fallthru
          _
        // Predicated region
        $region25: #{smollm_forward.1} parent=11 // pred_check
          %p328 = pneg %p131
        $region26: #{smollm_forward.1} parent=11 // pred_check_branch
          %330 = sbr.rel (%p328) target = $region28
        $region27: #{smollm_forward.1} parent=11 // pred_region
          _
        $region28: #{smollm_forward.1} parent=11 // pred_fallthru
          _
        // Predicated region
        $region29: #{smollm_forward.1} parent=11 // pred_check
          %p331 = pneg %p152
        $region30: #{smollm_forward.1} parent=11 // pred_check_branch
          %333 = sbr.rel (%p331) target = $region32
        $region31: #{smollm_forward.1} parent=11 // pred_region
          _
        $region32: #{smollm_forward.1} parent=11 // pred_fallthru
          _
        // Predicated region
        $region33: #{smollm_forward.1} parent=11 // pred_check
          %p334 = pneg %p173
        $region34: #{smollm_forward.1} parent=11 // pred_check_branch
          %336 = sbr.rel (%p334) target = $region36
        $region35: #{smollm_forward.1} parent=11 // pred_region
          _
        $region36: #{smollm_forward.1} parent=11 // pred_fallthru
          _
        // Predicated region
        $region37: #{smollm_forward.1} parent=11 // pred_check
          %p337 = pneg %p194
        $region38: #{smollm_forward.1} parent=11 // pred_check_branch
          %339 = sbr.rel (%p337) target = $region40
        $region39: #{smollm_forward.1} parent=11 // pred_region
          _
        $region40: #{smollm_forward.1} parent=11 // pred_fallthru
          _
        // Predicated region
        $region41: #{smollm_forward.1} parent=11 // pred_check
          %p340 = pneg %p215
        $region42: #{smollm_forward.1} parent=11 // pred_check_branch
          %342 = sbr.rel (%p340) target = $region44
        $region43: #{smollm_forward.1} parent=11 // pred_region
          _
        $region44: #{smollm_forward.1} parent=11 // pred_fallthru
          _
        // Predicated region
        $region45: #{smollm_forward.1} parent=11 // pred_check
          %p343 = pneg %p236
        $region46: #{smollm_forward.1} parent=11 // pred_check_branch
          %345 = sbr.rel (%p343) target = $region48
        $region47: #{smollm_forward.1} parent=11 // pred_region
          _
        $region48: #{smollm_forward.1} parent=11 // pred_fallthru
          _
        // Predicated region
        $region49: #{smollm_forward.1} parent=11 // pred_check
          %p346 = pneg %p257
        $region50: #{smollm_forward.1} parent=11 // pred_check_branch
          %348 = sbr.rel (%p346) target = $region52
        $region51: #{smollm_forward.1} parent=11 // pred_region
          _
        $region52: #{smollm_forward.1} parent=11 // pred_fallthru
          _
        // Predicated region
        $region53: #{smollm_forward.1} parent=11 // pred_check
          %p349 = pneg %p278
        $region54: #{smollm_forward.1} parent=11 // pred_check_branch
          %351 = sbr.rel (%p349) target = $region56
        $region55: #{smollm_forward.1} parent=11 // pred_region
          _
        $region56: #{smollm_forward.1} parent=11 // pred_fallthru
          _
      $region12: #{smollm_forward.1} parent=5 // pred_fallthru
        _
      %p352 = scmp.lt.s32.totalorder %s21, 2
      // Predicated region
      $region57: #{smollm_forward.1} parent=5 // pred_check
        %p353 = pneg %p352
      $region58: #{smollm_forward.1} parent=5 // pred_check_branch
        %355 = sbr.rel (%p353) target = $region60
      $region59: #{smollm_forward.1} parent=5 // pred_region
        // Predicated region
        $region61: #{smollm_forward.1} parent=59 // pred_check
          %p356 = pneg %p41
        $region62: #{smollm_forward.1} parent=59 // pred_check_branch
          %358 = sbr.rel (%p356) target = $region64
        $region63: #{smollm_forward.1} parent=59 // pred_region
          %p359 = scmp.lt.s32.totalorder %s21, 1
          %s360 = scalar_select %p359, %s21, 1
          %s361 = smul.addr %s360, 4
          %s362 = scalar_lea.vmem %s0, %s361
        $region64: #{smollm_forward.1} parent=59 // pred_fallthru
          _
      $region60: #{smollm_forward.1} parent=5 // pred_fallthru
        _
      %p363 = scmp.le.s32.totalorder 1, %s21
      %p364 = scmp.lt.s32.totalorder %s21, 3
      %p365 = pnand %p363, %p364
      %p366 = pneg %p365
      // Predicated region
      $region65: #{smollm_forward.1} parent=5 // pred_check
        _
      $region66: #{smollm_forward.1} parent=5 // pred_check_branch
        %368 = sbr.rel (%p365) target = $region68
      $region67: #{smollm_forward.1} parent=5 // pred_region
        %s369 = ssub.s32 %s21, 1
        %p370 = scmp.lt.s32.totalorder %s26, 1
        %s371 = scalar_select %p370, %s26, 1
        %s372 = smul.addr %s371, 4
        %s373 = scalar_lea.vmem %s0, %s372
        %p374 = pneg %p47
        %p375 = pneg %p44
        %p376 = pneg %p68
        %p377 = pneg %p65
        %p378 = pneg %p89
        %p379 = pneg %p86
        %p380 = pneg %p110
        %p381 = pneg %p107
        %p382 = pneg %p131
        %p383 = pneg %p128
        %p384 = pneg %p152
        %p385 = pneg %p149
        %p386 = pneg %p173
        %p387 = pneg %p170
        %p388 = pneg %p194
        %p389 = pneg %p191
        %p390 = pneg %p215
        %p391 = pneg %p212
        %p392 = pneg %p236
        %p393 = pneg %p233
        %p394 = pneg %p257
        %p395 = pneg %p254
        %p396 = pneg %p278
        %p397 = pneg %p275
        %p398 = pneg %p304
        %p399 = pneg %p301
        %s400 = sand.u32 %s291, 1
        %s401 = scalar_lea.sflag [#allocation3], %s400
        %s402 = sand.u32 %s291, 1
        %s403 = smul.addr %s402, 16
        %s404 = scalar_lea.vmem [#allocation2], %s403
        %p405 = scmp.lt.s32.totalorder %s26, 1
        %s406 = scalar_select %p405, %s26, 1
        %s407 = smul.addr %s406, 4
        %s408 = scalar_lea.vmem %s0, %s407
        %v410 = vld [vmem:[%s408] sm:$0xf]
        %v411 = vunpack.c.l.bf16 %v410
        %v412 = vld [vmem:[%s8] sm:$0xff]
        %v413 = vld [vmem:[%s9] sm:$0xff]
        %v414 = vld [vmem:[%s10] sm:$0xff]
        %v415 = vlaneseq
        %v416 = vshrl.u32 %v415, 7
        %v417 = vlaneseq
        %v418 = vand.u32 %v417, 127
        %vm419 = vcmp.le.s32.totalorder %v418, %v416
        %v420 = vld [vmem:[%s5] sm:$0x1]
        %v421 = vmul.f32 %v411, %v411
        %vm422 = vcmask 523264
        %v423 = vsel %vm422, %v421, 0.0
        %424 = vadd.xlane.f32.xlu0 %v423
        %v425 = vpop.xlane.xlu0 %424
        %v426 = vrcp.pop 64.0
        %v427 = vmul.f32 %v425, %v426
        %v428 = vadd.f32 %v427, 1e-05
        %v429 = vrsqrt.pop %v428
        %v430 = vmul.f32 %v411, %v429
        %v432 = vlaneseq
        %v433 = vshrl.u32 %v432, 7
        %v434 = vsub.s32 0, %v433
        %v435 = vrot.slane %v420, %v434
        %v437 = vmul.f32 %v430, %v435
        %v438 = vpack.c.bf16 %v437, %v437
        %v439 = vld [vmem:[%s1] sm:$0xff]
        %v440 = vld [vmem:[%s1 + $0x8] sm:$0xff]
        %v441 = vld [vmem:[%s1 + $0x10] sm:$0xff]
        %v442 = vld [vmem:[%s1 + $0x18] sm:$0xff]
        %v443 = vld [vmem:[%s1 + $0x20] sm:$0xff]
        %v444 = vld [vmem:[%s1 + $0x28] sm:$0xff]
        %v445 = vld [vmem:[%s1 + $0x30] sm:$0xff]
        %v446 = vld [vmem:[%s1 + $0x38] sm:$0xff]
        %v455 = vunpack.c.l.b16 %v439
        %v456 = vunpack.c.h.b16 %v439
        %v457 = vunpack.c.l.b16 %v440
        %v458 = vunpack.c.h.b16 %v440
        %v459 = vunpack.c.l.b16 %v441
        %v460 = vunpack.c.h.b16 %v441
        %v461 = vunpack.c.l.b16 %v442
        %v462 = vunpack.c.h.b16 %v442
        %v463 = vunpack.c.l.b16 %v443
        %v464 = vunpack.c.h.b16 %v443
        %v465 = vunpack.c.l.b16 %v444
        %v466 = vunpack.c.h.b16 %v444
        %v467 = vunpack.c.l.b16 %v445
        %v468 = vunpack.c.h.b16 %v445
        %v469 = vunpack.c.l.b16 %v446
        %v470 = vunpack.c.h.b16 %v446
        %v471 = vpack.c.b16 %v457, %v455
        %v472 = vpack.c.b16 %v458, %v456
        %v473 = vpack.c.b16 %v461, %v459
        %v474 = vpack.c.b16 %v462, %v460
        %v475 = vpack.c.b16 %v465, %v463
        %v476 = vpack.c.b16 %v466, %v464
        %v477 = vpack.c.b16 %v469, %v467
        %v478 = vpack.c.b16 %v470, %v468
        %v488 = vsel %vm422, %v438, 0
        %490 = vmatprep.subr.bf16.mxu0 %v472
        %491 = vmatpush1.bf16.msra.mxu0 %v471
        %492 = vmatprep.subr.bf16.mxu0 %v474
        %493 = vmatpush1.bf16.msra.mxu0 %v473
        %494 = vmatprep.subr.bf16.mxu0 %v476
        %495 = vmatpush1.bf16.msra.mxu0 %v475
        %496 = vmatprep.subr.bf16.mxu0 %v478
        %497 = vmatpush1.bf16.msra.mxu0 %v477
        %498 = vmatprep.subr.bf16.mxu0 0
        %499 = vmatpush1.bf16.msra.mxu0 0
        %500 = vmatprep.subr.bf16.mxu0 0
        %501 = vmatpush1.bf16.msra.mxu0 0
        %502 = vmatprep.subr.bf16.mxu0 0
        %503 = vmatpush1.bf16.msra.mxu0 0
        %504 = vmatprep.subr.bf16.mxu0 0
        %505 = vmatpush1.bf16.msra.mxu0 0
        %506 = vmatprep.subr.bf16.mxu0 0
        %507 = vmatpush1.bf16.msra.mxu0 0
        %508 = vmatprep.subr.bf16.mxu0 0
        %509 = vmatpush1.bf16.msra.mxu0 0
        %510 = vmatprep.subr.bf16.mxu0 0
        %511 = vmatpush1.bf16.msra.mxu0 0
        %512 = vmatprep.subr.bf16.mxu0 0
        %513 = vmatpush1.bf16.msra.mxu0 0
        %514 = vmatprep.subr.bf16.mxu0 0
        %515 = vmatpush1.bf16.msra.mxu0 0
        %516 = vmatprep.subr.bf16.mxu0 0
        %517 = vmatpush1.bf16.msra.mxu0 0
        %518 = vmatprep.subr.bf16.mxu0 0
        %519 = vmatpush1.bf16.msra.mxu0 0
        %520 = vmatprep.subr.bf16.mxu0 0
        %521 = vmatpush1.bf16.msra.mxu0 0
        %522 = vmatprep.mubr.bf16.mxu0 0
        %523 = vmatmul.mubr.bf16.gmra.mrb[0].mxu0 %v488
        %v524 = vpop.f32.mrb[0].mxu0
        %v525 = vadd.f32 0.0, %v524
        %v526 = vpop.f32.mrb[0].mxu0
        %v527 = vadd.f32 0.0, %v526
        %v528 = vpop.f32.mrb[0].mxu0
        %v529 = vpop.f32.mrb[0].mxu0
        %530 = vdwg.mxu0
        %531 = vrot.lane.b32.xlu0 %v525, 120
        %v532 = vpop.permute.xlu0 %531
        %533 = vrot.lane.b32.xlu0 %v525, 8
        %v534 = vpop.permute.xlu0 %533
        %v535 = vmul.f32 %v525, %v412
        %v536 = vmul.f32 %v532, %v413
        %v537 = vadd.f32 %v535, %v536
        %v538 = vmul.f32 %v534, %v414
        %v539 = vadd.f32 %v537, %v538
        %v540 = vpack.c.bf16 %v539, %v539
        %v541 = vpack.c.bf16 %v527, %v527
        %v542 = vld [vmem:[%s2] sm:$0xf]
        %v543 = vld [vmem:[%s2 + $0x4] sm:$0xf]
        %v544 = vld [vmem:[%s2 + $0x8] sm:$0xf]
        %v545 = vld [vmem:[%s2 + $0xc] sm:$0xf]
        %v546 = vld [vmem:[%s2 + $0x10] sm:$0xf]
        %v547 = vld [vmem:[%s2 + $0x14] sm:$0xf]
        %v548 = vld [vmem:[%s2 + $0x18] sm:$0xf]
        %v549 = vld [vmem:[%s2 + $0x1c] sm:$0xf]
        %551 = vrot.lane.b32.xlu0 %v540, 64
        %v552 = vpop.permute.xlu0 %551
        %vm553 = vcmask 130048
        %v555 = vsel %vm553, %v540, 0
        %v558 = vsel %vm553, %v552, 0
        %560 = vmatprep.subr.bf16.mxu0 0
        %561 = vmatpush1.bf16.xpose.msra.mxu0 %v558
        %562 = vmatprep.subr.bf16.mxu0 0
        %563 = vmatpush1.bf16.xpose.msra.mxu0 0
        %564 = vmatprep.subr.bf16.mxu0 0
        %565 = vmatpush1.bf16.xpose.msra.mxu0 0
        %566 = vmatprep.subr.bf16.mxu0 0
        %567 = vmatpush1.bf16.xpose.msra.mxu0 0
        %568 = vmatprep.subr.bf16.mxu0 0
        %569 = vmatpush1.bf16.xpose.msra.mxu0 0
        %570 = vmatprep.subr.bf16.mxu0 0
        %571 = vmatpush1.bf16.xpose.msra.mxu0 0
        %572 = vmatprep.subr.bf16.mxu0 0
        %573 = vmatpush1.bf16.xpose.msra.mxu0 0
        %574 = vmatprep.subr.bf16.mxu0 0
        %575 = vmatpush1.bf16.xpose.msra.mxu0 0
        %576 = vmatprep.subr.bf16.mxu0 0
        %577 = vmatpush1.bf16.xpose.msra.mxu0 0
        %578 = vmatprep.subr.bf16.mxu0 0
        %579 = vmatpush1.bf16.xpose.msra.mxu0 0
        %580 = vmatprep.subr.bf16.mxu0 0
        %581 = vmatpush1.bf16.xpose.msra.mxu0 0
        %582 = vmatprep.subr.bf16.mxu0 0
        %583 = vmatpush1.bf16.xpose.msra.mxu0 0
        %584 = vmatprep.subr.bf16.mxu0 0
        %585 = vmatpush1.bf16.xpose.msra.mxu0 0
        %586 = vmatprep.subr.bf16.mxu0 0
        %587 = vmatpush1.bf16.xpose.msra.mxu0 0
        %588 = vmatprep.subr.bf16.mxu0 0
        %589 = vmatpush1.bf16.xpose.msra.mxu0 0
        %590 = vmatprep.subr.bf16.mxu0 0
        %591 = vmatpush1.bf16.xpose.msra.mxu0 0
        %592 = vmatprep.mubr.bf16.mxu0 0
        %593 = vmatmul.mubr.bf16.gmra.mrb[0].mxu0 %v555
        %v594 = vpop.f32.mrb[0].mxu0
        %v595 = vadd.f32 0.0, %v594
        %v596 = vpop.f32.mrb[0].mxu0
        %v597 = vpop.f32.mrb[0].mxu0
        %v598 = vpop.f32.mrb[0].mxu0
        %599 = vdwg.mxu0
        %v600 = vsel %vm419, %v595, -1e+30
        %vm601 = vcmask 64512
        %v602 = vsel %vm601, %v600, -inf
        %603 = vmax.xlane.f32.xlu0 %v602
        %v604 = vpop.xlane.xlu0 %603
        %v605 = vsub.f32 %v600, %v604
        %v606 = vmul.f32 %v605, 1.442695
        %v607 = vpow.pop %v606
        %v608 = vsel %vm601, %v607, 0.0
        %609 = vadd.xlane.f32.xlu0 %v608
        %v610 = vpop.xlane.xlu0 %609
        %v611 = vrcp.pop %v610
        %v612 = vmul.f32 %v607, %v611
        %v613 = vpack.c.bf16 %v612, %v612
        %v615 = vsel %vm601, %v613, 0
        %vm617 = vcmask 1043456
        %v619 = vsel %vm617, %v541, 0
        %621 = vmatprep.subr.bf16.mxu0 0
        %622 = vmatpush1.bf16.msra.mxu0 %v619
        %623 = vmatprep.subr.bf16.mxu0 0
        %624 = vmatpush1.bf16.msra.mxu0 0
        %625 = vmatprep.subr.bf16.mxu0 0
        %626 = vmatpush1.bf16.msra.mxu0 0
        %627 = vmatprep.subr.bf16.mxu0 0
        %628 = vmatpush1.bf16.msra.mxu0 0
        %629 = vmatprep.subr.bf16.mxu0 0
        %630 = vmatpush1.bf16.msra.mxu0 0
        %631 = vmatprep.subr.bf16.mxu0 0
        %632 = vmatpush1.bf16.msra.mxu0 0
        %633 = vmatprep.subr.bf16.mxu0 0
        %634 = vmatpush1.bf16.msra.mxu0 0
        %635 = vmatprep.subr.bf16.mxu0 0
        %636 = vmatpush1.bf16.msra.mxu0 0
        %637 = vmatprep.subr.bf16.mxu0 0
        %638 = vmatpush1.bf16.msra.mxu0 0
        %639 = vmatprep.subr.bf16.mxu0 0
        %640 = vmatpush1.bf16.msra.mxu0 0
        %641 = vmatprep.subr.bf16.mxu0 0
        %642 = vmatpush1.bf16.msra.mxu0 0
        %643 = vmatprep.subr.bf16.mxu0 0
        %644 = vmatpush1.bf16.msra.mxu0 0
        %645 = vmatprep.subr.bf16.mxu0 0
        %646 = vmatpush1.bf16.msra.mxu0 0
        %647 = vmatprep.subr.bf16.mxu0 0
        %648 = vmatpush1.bf16.msra.mxu0 0
        %649 = vmatprep.subr.bf16.mxu0 0
        %650 = vmatpush1.bf16.msra.mxu0 0
        %651 = vmatprep.subr.bf16.mxu0 0
        %652 = vmatpush1.bf16.msra.mxu0 0
        %653 = vmatprep.mubr.bf16.mxu0 0
        %654 = vmatmul.mubr.bf16.gmra.mrb[0].mxu0 %v615
        %v655 = vpop.f32.mrb[0].mxu0
        %v656 = vadd.f32 0.0, %v655
        %v657 = vpop.f32.mrb[0].mxu0
        %v658 = vpop.f32.mrb[0].mxu0
        %v659 = vpop.f32.mrb[0].mxu0
        %660 = vdwg.mxu0
        %v661 = vpack.c.bf16 %v656, %v656
        %662 = vrot.lane.b32.xlu0 %v540, 112
        %v663 = vpop.permute.xlu0 %662
        %664 = vrot.lane.b32.xlu0 %v540, 48
        %v665 = vpop.permute.xlu0 %664
        %v667 = vsel %vm553, %v663, 0
        %v670 = vsel %vm553, %v665, 0
        %672 = vmatprep.subr.bf16.mxu0 0
        %673 = vmatpush1.bf16.xpose.msra.mxu0 %v670
        %674 = vmatprep.subr.bf16.mxu0 0
        %675 = vmatpush1.bf16.xpose.msra.mxu0 0
        %676 = vmatprep.subr.bf16.mxu0 0
        %677 = vmatpush1.bf16.xpose.msra.mxu0 0
        %678 = vmatprep.subr.bf16.mxu0 0
        %679 = vmatpush1.bf16.xpose.msra.mxu0 0
        %680 = vmatprep.subr.bf16.mxu0 0
        %681 = vmatpush1.bf16.xpose.msra.mxu0 0
        %682 = vmatprep.subr.bf16.mxu0 0
        %683 = vmatpush1.bf16.xpose.msra.mxu0 0
        %684 = vmatprep.subr.bf16.mxu0 0
        %685 = vmatpush1.bf16.xpose.msra.mxu0 0
        %686 = vmatprep.subr.bf16.mxu0 0
        %687 = vmatpush1.bf16.xpose.msra.mxu0 0
        %688 = vmatprep.subr.bf16.mxu0 0
        %689 = vmatpush1.bf16.xpose.msra.mxu0 0
        %690 = vmatprep.subr.bf16.mxu0 0
        %691 = vmatpush1.bf16.xpose.msra.mxu0 0
        %692 = vmatprep.subr.bf16.mxu0 0
        %693 = vmatpush1.bf16.xpose.msra.mxu0 0
        %694 = vmatprep.subr.bf16.mxu0 0
        %695 = vmatpush1.bf16.xpose.msra.mxu0 0
        %696 = vmatprep.subr.bf16.mxu0 0
        %697 = vmatpush1.bf16.xpose.msra.mxu0 0
        %698 = vmatprep.subr.bf16.mxu0 0
        %699 = vmatpush1.bf16.xpose.msra.mxu0 0
        %700 = vmatprep.subr.bf16.mxu0 0
        %701 = vmatpush1.bf16.xpose.msra.mxu0 0
        %702 = vmatprep.subr.bf16.mxu0 0
        %703 = vmatpush1.bf16.xpose.msra.mxu0 0
        %704 = vmatprep.mubr.bf16.mxu0 0
        %705 = vmatmul.mubr.bf16.gmra.mrb[0].mxu0 %v667
        %v706 = vpop.f32.mrb[0].mxu0
        %v707 = vadd.f32 0.0, %v706
        %v708 = vpop.f32.mrb[0].mxu0
        %v709 = vpop.f32.mrb[0].mxu0
        %v710 = vpop.f32.mrb[0].mxu0
        %711 = vdwg.mxu0
        %v712 = vsel %vm419, %v707, -1e+30
        %v713 = vsel %vm601, %v712, -inf
        %714 = vmax.xlane.f32.xlu0 %v713
        %v715 = vpop.xlane.xlu0 %714
        %v716 = vsub.f32 %v712, %v715
        %v717 = vmul.f32 %v716, 1.442695
        %v718 = vpow.pop %v717
        %v719 = vsel %vm601, %v718, 0.0
        %720 = vadd.xlane.f32.xlu0 %v719
        %v721 = vpop.xlane.xlu0 %720
        %v722 = vrcp.pop %v721
        %v723 = vmul.f32 %v718, %v722
        %v724 = vpack.c.bf16 %v723, %v723
        %726 = vrot.lane.b32.xlu0 %v541, 112
        %v727 = vpop.permute.xlu0 %726
        %v729 = vsel %vm601, %v724, 0
        %v732 = vsel %vm617, %v727, 0
        %734 = vmatprep.subr.bf16.mxu0 0
        %735 = vmatpush1.bf16.msra.mxu0 %v732
        %736 = vmatprep.subr.bf16.mxu0 0
        %737 = vmatpush1.bf16.msra.mxu0 0
        %738 = vmatprep.subr.bf16.mxu0 0
        %739 = vmatpush1.bf16.msra.mxu0 0
        %740 = vmatprep.subr.bf16.mxu0 0
        %741 = vmatpush1.bf16.msra.mxu0 0
        %742 = vmatprep.subr.bf16.mxu0 0
        %743 = vmatpush1.bf16.msra.mxu0 0
        %744 = vmatprep.subr.bf16.mxu0 0
        %745 = vmatpush1.bf16.msra.mxu0 0
        %746 = vmatprep.subr.bf16.mxu0 0
        %747 = vmatpush1.bf16.msra.mxu0 0
        %748 = vmatprep.subr.bf16.mxu0 0
        %749 = vmatpush1.bf16.msra.mxu0 0
        %750 = vmatprep.subr.bf16.mxu0 0
        %751 = vmatpush1.bf16.msra.mxu0 0
        %752 = vmatprep.subr.bf16.mxu0 0
        %753 = vmatpush1.bf16.msra.mxu0 0
        %754 = vmatprep.subr.bf16.mxu0 0
        %755 = vmatpush1.bf16.msra.mxu0 0
        %756 = vmatprep.subr.bf16.mxu0 0
        %757 = vmatpush1.bf16.msra.mxu0 0
        %758 = vmatprep.subr.bf16.mxu0 0
        %759 = vmatpush1.bf16.msra.mxu0 0
        %760 = vmatprep.subr.bf16.mxu0 0
        %761 = vmatpush1.bf16.msra.mxu0 0
        %762 = vmatprep.subr.bf16.mxu0 0
        %763 = vmatpush1.bf16.msra.mxu0 0
        %764 = vmatprep.subr.bf16.mxu0 0
        %765 = vmatpush1.bf16.msra.mxu0 0
        %766 = vmatprep.mubr.bf16.mxu0 0
        %767 = vmatmul.mubr.bf16.gmra.mrb[0].mxu0 %v729
        %v768 = vpop.f32.mrb[0].mxu0
        %v769 = vadd.f32 0.0, %v768
        %v770 = vpop.f32.mrb[0].mxu0
        %v771 = vpop.f32.mrb[0].mxu0
        %v772 = vpop.f32.mrb[0].mxu0
        %773 = vdwg.mxu0
        %v774 = vpack.c.bf16 %v769, %v769
        %v777 = vunpack.c.l.b16 %v544
        %v778 = vunpack.c.l.b16 %v545
        %v779 = vpack.c.b16 %v778, %v777
        %v782 = vsel %vm553, %v774, 0
        %784 = vmatprep.subr.bf16.mxu0 0
        %785 = vmatpush1.bf16.msra.mxu0 %v779
        %786 = vmatprep.subr.bf16.mxu0 0
        %787 = vmatpush1.bf16.msra.mxu0 0
        %788 = vmatprep.subr.bf16.mxu0 0
        %789 = vmatpush1.bf16.msra.mxu0 0
        %790 = vmatprep.subr.bf16.mxu0 0
        %791 = vmatpush1.bf16.msra.mxu0 0
        %792 = vmatprep.subr.bf16.mxu0 0
        %793 = vmatpush1.bf16.msra.mxu0 0
        %794 = vmatprep.subr.bf16.mxu0 0
        %795 = vmatpush1.bf16.msra.mxu0 0
        %796 = vmatprep.subr.bf16.mxu0 0
        %797 = vmatpush1.bf16.msra.mxu0 0
        %798 = vmatprep.subr.bf16.mxu0 0
        %799 = vmatpush1.bf16.msra.mxu0 0
        %800 = vmatprep.subr.bf16.mxu0 0
        %801 = vmatpush1.bf16.msra.mxu0 0
        %802 = vmatprep.subr.bf16.mxu0 0
        %803 = vmatpush1.bf16.msra.mxu0 0
        %804 = vmatprep.subr.bf16.mxu0 0
        %805 = vmatpush1.bf16.msra.mxu0 0
        %806 = vmatprep.subr.bf16.mxu0 0
        %807 = vmatpush1.bf16.msra.mxu0 0
        %808 = vmatprep.subr.bf16.mxu0 0
        %809 = vmatpush1.bf16.msra.mxu0 0
        %810 = vmatprep.subr.bf16.mxu0 0
        %811 = vmatpush1.bf16.msra.mxu0 0
        %812 = vmatprep.subr.bf16.mxu0 0
        %813 = vmatpush1.bf16.msra.mxu0 0
        %814 = vmatprep.subr.bf16.mxu0 0
        %815 = vmatpush1.bf16.msra.mxu0 0
        %816 = vmatprep.mubr.bf16.mxu0 0
        %817 = vmatmul.mubr.bf16.gmra.mrb[0].mxu0 %v782
        %v818 = vpop.f32.mrb[0].mxu0
        %v819 = vadd.f32 0.0, %v818
        %v820 = vpop.f32.mrb[0].mxu0
        %v821 = vpop.f32.mrb[0].mxu0
        %v822 = vpop.f32.mrb[0].mxu0
        %823 = vdwg.mxu0
        %v826 = vunpack.c.l.b16 %v542
        %v827 = vunpack.c.l.b16 %v543
        %v828 = vpack.c.b16 %v827, %v826
        %v831 = vsel %vm553, %v661, 0
        %833 = vmatprep.subr.bf16.mxu0 0
        %834 = vmatpush1.bf16.msra.mxu0 %v828
        %835 = vmatprep.subr.bf16.mxu0 0
        %836 = vmatpush1.bf16.msra.mxu0 0
        %837 = vmatprep.subr.bf16.mxu0 0
        %838 = vmatpush1.bf16.msra.mxu0 0
        %839 = vmatprep.subr.bf16.mxu0 0
        %840 = vmatpush1.bf16.msra.mxu0 0
        %841 = vmatprep.subr.bf16.mxu0 0
        %842 = vmatpush1.bf16.msra.mxu0 0
        %843 = vmatprep.subr.bf16.mxu0 0
        %844 = vmatpush1.bf16.msra.mxu0 0
        %845 = vmatprep.subr.bf16.mxu0 0
        %846 = vmatpush1.bf16.msra.mxu0 0
        %847 = vmatprep.subr.bf16.mxu0 0
        %848 = vmatpush1.bf16.msra.mxu0 0
        %849 = vmatprep.subr.bf16.mxu0 0
        %850 = vmatpush1.bf16.msra.mxu0 0
        %851 = vmatprep.subr.bf16.mxu0 0
        %852 = vmatpush1.bf16.msra.mxu0 0
        %853 = vmatprep.subr.bf16.mxu0 0
        %854 = vmatpush1.bf16.msra.mxu0 0
        %855 = vmatprep.subr.bf16.mxu0 0
        %856 = vmatpush1.bf16.msra.mxu0 0
        %857 = vmatprep.subr.bf16.mxu0 0
        %858 = vmatpush1.bf16.msra.mxu0 0
        %859 = vmatprep.subr.bf16.mxu0 0
        %860 = vmatpush1.bf16.msra.mxu0 0
        %861 = vmatprep.subr.bf16.mxu0 0
        %862 = vmatpush1.bf16.msra.mxu0 0
        %863 = vmatprep.subr.bf16.mxu0 0
        %864 = vmatpush1.bf16.msra.mxu0 0
        %865 = vmatprep.mubr.bf16.mxu0 0
        %866 = vmatmul.mubr.bf16.gmra.mrb[0].mxu0 %v831
        %v867 = vpop.f32.mrb[0].mxu0
        %v868 = vadd.f32 %v819, %v867
        %v869 = vpop.f32.mrb[0].mxu0
        %v870 = vpop.f32.mrb[0].mxu0
        %v871 = vpop.f32.mrb[0].mxu0
        %872 = vdwg.mxu0
        %873 = vrot.lane.b32.xlu0 %v540, 96
        %v874 = vpop.permute.xlu0 %873
        %875 = vrot.lane.b32.xlu0 %v540, 32
        %v876 = vpop.permute.xlu0 %875
        %v878 = vsel %vm553, %v874, 0
        %v881 = vsel %vm553, %v876, 0
        %883 = vmatprep.subr.bf16.mxu0 0
        %884 = vmatpush1.bf16.xpose.msra.mxu0 %v881
        %885 = vmatprep.subr.bf16.mxu0 0
        %886 = vmatpush1.bf16.xpose.msra.mxu0 0
        %887 = vmatprep.subr.bf16.mxu0 0
        %888 = vmatpush1.bf16.xpose.msra.mxu0 0
        %889 = vmatprep.subr.bf16.mxu0 0
        %890 = vmatpush1.bf16.xpose.msra.mxu0 0
        %891 = vmatprep.subr.bf16.mxu0 0
        %892 = vmatpush1.bf16.xpose.msra.mxu0 0
        %893 = vmatprep.subr.bf16.mxu0 0
        %894 = vmatpush1.bf16.xpose.msra.mxu0 0
        %895 = vmatprep.subr.bf16.mxu0 0
        %896 = vmatpush1.bf16.xpose.msra.mxu0 0
        %897 = vmatprep.subr.bf16.mxu0 0
        %898 = vmatpush1.bf16.xpose.msra.mxu0 0
        %899 = vmatprep.subr.bf16.mxu0 0
        %900 = vmatpush1.bf16.xpose.msra.mxu0 0
        %901 = vmatprep.subr.bf16.mxu0 0
        %902 = vmatpush1.bf16.xpose.msra.mxu0 0
        %903 = vmatprep.subr.bf16.mxu0 0
        %904 = vmatpush1.bf16.xpose.msra.mxu0 0
        %905 = vmatprep.subr.bf16.mxu0 0
        %906 = vmatpush1.bf16.xpose.msra.mxu0 0
        %907 = vmatprep.subr.bf16.mxu0 0
        %908 = vmatpush1.bf16.xpose.msra.mxu0 0
        %909 = vmatprep.subr.bf16.mxu0 0
        %910 = vmatpush1.bf16.xpose.msra.mxu0 0
        %911 = vmatprep.subr.bf16.mxu0 0
        %912 = vmatpush1.bf16.xpose.msra.mxu0 0
        %913 = vmatprep.subr.bf16.mxu0 0
        %914 = vmatpush1.bf16.xpose.msra.mxu0 0
        %915 = vmatprep.mubr.bf16.mxu0 0
        %916 = vmatmul.mubr.bf16.gmra.mrb[0].mxu0 %v878
        %v917 = vpop.f32.mrb[0].mxu0
        %v918 = vadd.f32 0.0, %v917
        %v919 = vpop.f32.mrb[0].mxu0
        %v920 = vpop.f32.mrb[0].mxu0
        %v921 = vpop.f32.mrb[0].mxu0
        %922 = vdwg.mxu0
        %v923 = vsel %vm419, %v918, -1e+30
        %v924 = vsel %vm601, %v923, -inf
        %925 = vmax.xlane.f32.xlu0 %v924
        %v926 = vpop.xlane.xlu0 %925
        %v927 = vsub.f32 %v923, %v926
        %v928 = vmul.f32 %v927, 1.442695
        %v929 = vpow.pop %v928
        %v930 = vsel %vm601, %v929, 0.0
        %931 = vadd.xlane.f32.xlu0 %v930
        %v932 = vpop.xlane.xlu0 %931
        %v933 = vrcp.pop %v932
        %v934 = vmul.f32 %v929, %v933
        %v935 = vpack.c.bf16 %v934, %v934
        %936 = vrot.lane.b32.xlu0 %v541, 96
        %v937 = vpop.permute.xlu0 %936
        %v939 = vsel %vm601, %v935, 0
        %v942 = vsel %vm617, %v937, 0
        %944 = vmatprep.subr.bf16.mxu0 0
        %945 = vmatpush1.bf16.msra.mxu0 %v942
        %946 = vmatprep.subr.bf16.mxu0 0
        %947 = vmatpush1.bf16.msra.mxu0 0
        %948 = vmatprep.subr.bf16.mxu0 0
        %949 = vmatpush1.bf16.msra.mxu0 0
        %950 = vmatprep.subr.bf16.mxu0 0
        %951 = vmatpush1.bf16.msra.mxu0 0
        %952 = vmatprep.subr.bf16.mxu0 0
        %953 = vmatpush1.bf16.msra.mxu0 0
        %954 = vmatprep.subr.bf16.mxu0 0
        %955 = vmatpush1.bf16.msra.mxu0 0
        %956 = vmatprep.subr.bf16.mxu0 0
        %957 = vmatpush1.bf16.msra.mxu0 0
        %958 = vmatprep.subr.bf16.mxu0 0
        %959 = vmatpush1.bf16.msra.mxu0 0
        %960 = vmatprep.subr.bf16.mxu0 0
        %961 = vmatpush1.bf16.msra.mxu0 0
        %962 = vmatprep.subr.bf16.mxu0 0
        %963 = vmatpush1.bf16.msra.mxu0 0
        %964 = vmatprep.subr.bf16.mxu0 0
        %965 = vmatpush1.bf16.msra.mxu0 0
        %966 = vmatprep.subr.bf16.mxu0 0
        %967 = vmatpush1.bf16.msra.mxu0 0
        %968 = vmatprep.subr.bf16.mxu0 0
        %969 = vmatpush1.bf16.msra.mxu0 0
        %970 = vmatprep.subr.bf16.mxu0 0
        %971 = vmatpush1.bf16.msra.mxu0 0
        %972 = vmatprep.subr.bf16.mxu0 0
        %973 = vmatpush1.bf16.msra.mxu0 0
        %974 = vmatprep.subr.bf16.mxu0 0
        %975 = vmatpush1.bf16.msra.mxu0 0
        %976 = vmatprep.mubr.bf16.mxu0 0
        %977 = vmatmul.mubr.bf16.gmra.mrb[0].mxu0 %v939
        %v978 = vpop.f32.mrb[0].mxu0
        %v979 = vadd.f32 0.0, %v978
        %v980 = vpop.f32.mrb[0].mxu0
        %v981 = vpop.f32.mrb[0].mxu0
        %v982 = vpop.f32.mrb[0].mxu0
        %983 = vdwg.mxu0
        %v984 = vpack.c.bf16 %v979, %v979
        %v987 = vunpack.c.l.b16 %v546
        %v988 = vunpack.c.l.b16 %v547
        %v989 = vpack.c.b16 %v988, %v987
        %v992 = vsel %vm553, %v984, 0
        %994 = vmatprep.subr.bf16.mxu0 0
        %995 = vmatpush1.bf16.msra.mxu0 %v989
        %996 = vmatprep.subr.bf16.mxu0 0
        %997 = vmatpush1.bf16.msra.mxu0 0
        %998 = vmatprep.subr.bf16.mxu0 0
        %999 = vmatpush1.bf16.msra.mxu0 0
        %1000 = vmatprep.subr.bf16.mxu0 0
        %1001 = vmatpush1.bf16.msra.mxu0 0
        %1002 = vmatprep.subr.bf16.mxu0 0
        %1003 = vmatpush1.bf16.msra.mxu0 0
        %1004 = vmatprep.subr.bf16.mxu0 0
        %1005 = vmatpush1.bf16.msra.mxu0 0
        %1006 = vmatprep.subr.bf16.mxu0 0
        %1007 = vmatpush1.bf16.msra.mxu0 0
        %1008 = vmatprep.subr.bf16.mxu0 0
        %1009 = vmatpush1.bf16.msra.mxu0 0
        %1010 = vmatprep.subr.bf16.mxu0 0
        %1011 = vmatpush1.bf16.msra.mxu0 0
        %1012 = vmatprep.subr.bf16.mxu0 0
        %1013 = vmatpush1.bf16.msra.mxu0 0
        %1014 = vmatprep.subr.bf16.mxu0 0
        %1015 = vmatpush1.bf16.msra.mxu0 0
        %1016 = vmatprep.subr.bf16.mxu0 0
        %1017 = vmatpush1.bf16.msra.mxu0 0
        %1018 = vmatprep.subr.bf16.mxu0 0
        %1019 = vmatpush1.bf16.msra.mxu0 0
        %1020 = vmatprep.subr.bf16.mxu0 0
        %1021 = vmatpush1.bf16.msra.mxu0 0
        %1022 = vmatprep.subr.bf16.mxu0 0
        %1023 = vmatpush1.bf16.msra.mxu0 0
        %1024 = vmatprep.subr.bf16.mxu0 0
        %1025 = vmatpush1.bf16.msra.mxu0 0
        %1026 = vmatprep.mubr.bf16.mxu0 0
        %1027 = vmatmul.mubr.bf16.gmra.mrb[0].mxu0 %v992
        %v1028 = vpop.f32.mrb[0].mxu0
        %v1029 = vadd.f32 0.0, %v1028
        %v1030 = vpop.f32.mrb[0].mxu0
        %v1031 = vpop.f32.mrb[0].mxu0
        %v1032 = vpop.f32.mrb[0].mxu0
        %1033 = vdwg.mxu0
        %v1034 = vadd.f32 %v868, %v1029
        %1035 = vrot.lane.b32.xlu0 %v540, 80
        %v1036 = vpop.permute.xlu0 %1035
        %1037 = vrot.lane.b32.xlu0 %v540, 16
        %v1038 = vpop.permute.xlu0 %1037
        %v1040 = vsel %vm553, %v1036, 0
        %v1043 = vsel %vm553, %v1038, 0
        %1045 = vmatprep.subr.bf16.mxu0 0
        %1046 = vmatpush1.bf16.xpose.msra.mxu0 %v1043
        %1047 = vmatprep.subr.bf16.mxu0 0
        %1048 = vmatpush1.bf16.xpose.msra.mxu0 0
        %1049 = vmatprep.subr.bf16.mxu0 0
        %1050 = vmatpush1.bf16.xpose.msra.mxu0 0
        %1051 = vmatprep.subr.bf16.mxu0 0
        %1052 = vmatpush1.bf16.xpose.msra.mxu0 0
        %1053 = vmatprep.subr.bf16.mxu0 0
        %1054 = vmatpush1.bf16.xpose.msra.mxu0 0
        %1055 = vmatprep.subr.bf16.mxu0 0
        %1056 = vmatpush1.bf16.xpose.msra.mxu0 0
        %1057 = vmatprep.subr.bf16.mxu0 0
        %1058 = vmatpush1.bf16.xpose.msra.mxu0 0
        %1059 = vmatprep.subr.bf16.mxu0 0
        %1060 = vmatpush1.bf16.xpose.msra.mxu0 0
        %1061 = vmatprep.subr.bf16.mxu0 0
        %1062 = vmatpush1.bf16.xpose.msra.mxu0 0
        %1063 = vmatprep.subr.bf16.mxu0 0
        %1064 = vmatpush1.bf16.xpose.msra.mxu0 0
        %1065 = vmatprep.subr.bf16.mxu0 0
        %1066 = vmatpush1.bf16.xpose.msra.mxu0 0
        %1067 = vmatprep.subr.bf16.mxu0 0
        %1068 = vmatpush1.bf16.xpose.msra.mxu0 0
        %1069 = vmatprep.subr.bf16.mxu0 0
        %1070 = vmatpush1.bf16.xpose.msra.mxu0 0
        %1071 = vmatprep.subr.bf16.mxu0 0
        %1072 = vmatpush1.bf16.xpose.msra.mxu0 0
        %1073 = vmatprep.subr.bf16.mxu0 0
        %1074 = vmatpush1.bf16.xpose.msra.mxu0 0
        %1075 = vmatprep.subr.bf16.mxu0 0
        %1076 = vmatpush1.bf16.xpose.msra.mxu0 0
        %1077 = vmatprep.mubr.bf16.mxu0 0
        %1078 = vmatmul.mubr.bf16.gmra.mrb[0].mxu0 %v1040
        %v1079 = vpop.f32.mrb[0].mxu0
        %v1080 = vadd.f32 0.0, %v1079
        %v1081 = vpop.f32.mrb[0].mxu0
        %v1082 = vpop.f32.mrb[0].mxu0
        %v1083 = vpop.f32.mrb[0].mxu0
        %1084 = vdwg.mxu0
        %v1085 = vsel %vm419, %v1080, -1e+30
        %v1086 = vsel %vm601, %v1085, -inf
        %1087 = vmax.xlane.f32.xlu0 %v1086
        %v1088 = vpop.xlane.xlu0 %1087
        %v1089 = vsub.f32 %v1085, %v1088
        %v1090 = vmul.f32 %v1089, 1.442695
        %v1091 = vpow.pop %v1090
        %v1092 = vsel %vm601, %v1091, 0.0
        %1093 = vadd.xlane.f32.xlu0 %v1092
        %v1094 = vpop.xlane.xlu0 %1093
        %v1095 = vrcp.pop %v1094
        %v1096 = vmul.f32 %v1091, %v1095
        %v1097 = vpack.c.bf16 %v1096, %v1096
        %1098 = vrot.lane.b32.xlu0 %v541, 80
        %v1099 = vpop.permute.xlu0 %1098
        %v1101 = vsel %vm601, %v1097, 0
        %v1104 = vsel %vm617, %v1099, 0
        %1106 = vmatprep.subr.bf16.mxu0 0
        %1107 = vmatpush1.bf16.msra.mxu0 %v1104
        %1108 = vmatprep.subr.bf16.mxu0 0
        %1109 = vmatpush1.bf16.msra.mxu0 0
        %1110 = vmatprep.subr.bf16.mxu0 0
        %1111 = vmatpush1.bf16.msra.mxu0 0
        %1112 = vmatprep.subr.bf16.mxu0 0
        %1113 = vmatpush1.bf16.msra.mxu0 0
        %1114 = vmatprep.subr.bf16.mxu0 0
        %1115 = vmatpush1.bf16.msra.mxu0 0
        %1116 = vmatprep.subr.bf16.mxu0 0
        %1117 = vmatpush1.bf16.msra.mxu0 0
        %1118 = vmatprep.subr.bf16.mxu0 0
        %1119 = vmatpush1.bf16.msra.mxu0 0
        %1120 = vmatprep.subr.bf16.mxu0 0
        %1121 = vmatpush1.bf16.msra.mxu0 0
        %1122 = vmatprep.subr.bf16.mxu0 0
        %1123 = vmatpush1.bf16.msra.mxu0 0
        %1124 = vmatprep.subr.bf16.mxu0 0
        %1125 = vmatpush1.bf16.msra.mxu0 0
        %1126 = vmatprep.subr.bf16.mxu0 0
        %1127 = vmatpush1.bf16.msra.mxu0 0
        %1128 = vmatprep.subr.bf16.mxu0 0
        %1129 = vmatpush1.bf16.msra.mxu0 0
        %1130 = vmatprep.subr.bf16.mxu0 0
        %1131 = vmatpush1.bf16.msra.mxu0 0
        %1132 = vmatprep.subr.bf16.mxu0 0
        %1133 = vmatpush1.bf16.msra.mxu0 0
        %1134 = vmatprep.subr.bf16.mxu0 0
        %1135 = vmatpush1.bf16.msra.mxu0 0
        %1136 = vmatprep.subr.bf16.mxu0 0
        %1137 = vmatpush1.bf16.msra.mxu0 0
        %1138 = vmatprep.mubr.bf16.mxu0 0
        %1139 = vmatmul.mubr.bf16.gmra.mrb[0].mxu0 %v1101
        %v1140 = vpop.f32.mrb[0].mxu0
        %v1141 = vadd.f32 0.0, %v1140
        %v1142 = vpop.f32.mrb[0].mxu0
        %v1143 = vpop.f32.mrb[0].mxu0
        %v1144 = vpop.f32.mrb[0].mxu0
        %1145 = vdwg.mxu0
        %v1146 = vpack.c.bf16 %v1141, %v1141
        %v1149 = vunpack.c.l.b16 %v548
        %v1150 = vunpack.c.l.b16 %v549
        %v1151 = vpack.c.b16 %v1150, %v1149
        %v1154 = vsel %vm553, %v1146, 0
        %1156 = vmatprep.subr.bf16.mxu0 0
        %1157 = vmatpush1.bf16.msra.mxu0 %v1151
        %1158 = vmatprep.subr.bf16.mxu0 0
        %1159 = vmatpush1.bf16.msra.mxu0 0
        %1160 = vmatprep.subr.bf16.mxu0 0
        %1161 = vmatpush1.bf16.msra.mxu0 0
        %1162 = vmatprep.subr.bf16.mxu0 0
        %1163 = vmatpush1.bf16.msra.mxu0 0
        %1164 = vmatprep.subr.bf16.mxu0 0
        %1165 = vmatpush1.bf16.msra.mxu0 0
        %1166 = vmatprep.subr.bf16.mxu0 0
        %1167 = vmatpush1.bf16.msra.mxu0 0
        %1168 = vmatprep.subr.bf16.mxu0 0
        %1169 = vmatpush1.bf16.msra.mxu0 0
        %1170 = vmatprep.subr.bf16.mxu0 0
        %1171 = vmatpush1.bf16.msra.mxu0 0
        %1172 = vmatprep.subr.bf16.mxu0 0
        %1173 = vmatpush1.bf16.msra.mxu0 0
        %1174 = vmatprep.subr.bf16.mxu0 0
        %1175 = vmatpush1.bf16.msra.mxu0 0
        %1176 = vmatprep.subr.bf16.mxu0 0
        %1177 = vmatpush1.bf16.msra.mxu0 0
        %1178 = vmatprep.subr.bf16.mxu0 0
        %1179 = vmatpush1.bf16.msra.mxu0 0
        %1180 = vmatprep.subr.bf16.mxu0 0
        %1181 = vmatpush1.bf16.msra.mxu0 0
        %1182 = vmatprep.subr.bf16.mxu0 0
        %1183 = vmatpush1.bf16.msra.mxu0 0
        %1184 = vmatprep.subr.bf16.mxu0 0
        %1185 = vmatpush1.bf16.msra.mxu0 0
        %1186 = vmatprep.subr.bf16.mxu0 0
        %1187 = vmatpush1.bf16.msra.mxu0 0
        %1188 = vmatprep.mubr.bf16.mxu0 0
        %1189 = vmatmul.mubr.bf16.gmra.mrb[0].mxu0 %v1154
        %v1190 = vpop.f32.mrb[0].mxu0
        %v1191 = vadd.f32 0.0, %v1190
        %v1192 = vpop.f32.mrb[0].mxu0
        %v1193 = vpop.f32.mrb[0].mxu0
        %v1194 = vpop.f32.mrb[0].mxu0
        %1195 = vdwg.mxu0
        %v1196 = vadd.f32 %v1034, %v1191
        %v1197 = vadd.f32 %v411, %v1196
        %v1198 = vld [vmem:[%s6] sm:$0x1]
        %v1199 = vmul.f32 %v1197, %v1197
        %v1200 = vsel %vm422, %v1199, 0.0
        %1201 = vadd.xlane.f32.xlu0 %v1200
        %v1202 = vpop.xlane.xlu0 %1201
        %v1203 = vmul.f32 %v1202, %v426
        %v1204 = vadd.f32 %v1203, 1e-05
        %v1205 = vrsqrt.pop %v1204
        %v1206 = vmul.f32 %v1197, %v1205
        %v1208 = vlaneseq
        %v1209 = vshrl.u32 %v1208, 7
        %v1210 = vsub.s32 0, %v1209
        %v1211 = vrot.slane %v1198, %v1210
        %v1213 = vmul.f32 %v1206, %v1211
        %v1214 = vpack.c.bf16 %v1213, %v1213
        %v1215 = vld [vmem:[%s3] sm:$0xff]
        %v1216 = vld [vmem:[%s3 + $0x8] sm:$0xff]
        %v1217 = vld [vmem:[%s3 + $0x10] sm:$0xff]
        %v1218 = vld [vmem:[%s3 + $0x18] sm:$0xff]
        %v1219 = vld [vmem:[%s3 + $0x20] sm:$0xff]
        %v1220 = vld [vmem:[%s3 + $0x28] sm:$0xff]
        %v1221 = vld [vmem:[%s3 + $0x30] sm:$0xff]
        %v1222 = vld [vmem:[%s3 + $0x38] sm:$0xff]
        %v1231 = vunpack.c.l.b16 %v1215
        %v1232 = vunpack.c.h.b16 %v1215
        %v1233 = vunpack.c.l.b16 %v1216
        %v1234 = vunpack.c.h.b16 %v1216
        %v1235 = vunpack.c.l.b16 %v1217
        %v1236 = vunpack.c.h.b16 %v1217
        %v1237 = vunpack.c.l.b16 %v1218
        %v1238 = vunpack.c.h.b16 %v1218
        %v1239 = vunpack.c.l.b16 %v1219
        %v1240 = vunpack.c.h.b16 %v1219
        %v1241 = vunpack.c.l.b16 %v1220
        %v1242 = vunpack.c.h.b16 %v1220
        %v1243 = vunpack.c.l.b16 %v1221
        %v1244 = vunpack.c.h.b16 %v1221
        %v1245 = vunpack.c.l.b16 %v1222
        %v1246 = vunpack.c.h.b16 %v1222
        %v1247 = vpack.c.b16 %v1233, %v1231
        %v1248 = vpack.c.b16 %v1234, %v1232
        %v1249 = vpack.c.b16 %v1237, %v1235
        %v1250 = vpack.c.b16 %v1238, %v1236
        %v1251 = vpack.c.b16 %v1241, %v1239
        %v1252 = vpack.c.b16 %v1242, %v1240
        %v1253 = vpack.c.b16 %v1245, %v1243
        %v1254 = vpack.c.b16 %v1246, %v1244
        %v1264 = vsel %vm422, %v1214, 0
        %1266 = vmatprep.subr.bf16.mxu0 %v1248
        %1267 = vmatpush1.bf16.msra.mxu0 %v1247
        %1268 = vmatprep.subr.bf16.mxu0 %v1250
        %1269 = vmatpush1.bf16.msra.mxu0 %v1249
        %1270 = vmatprep.subr.bf16.mxu0 %v1252
        %1271 = vmatpush1.bf16.msra.mxu0 %v1251
        %1272 = vmatprep.subr.bf16.mxu0 %v1254
        %1273 = vmatpush1.bf16.msra.mxu0 %v1253
        %1274 = vmatprep.subr.bf16.mxu0 0
        %1275 = vmatpush1.bf16.msra.mxu0 0
        %1276 = vmatprep.subr.bf16.mxu0 0
        %1277 = vmatpush1.bf16.msra.mxu0 0
        %1278 = vmatprep.subr.bf16.mxu0 0
        %1279 = vmatpush1.bf16.msra.mxu0 0
        %1280 = vmatprep.subr.bf16.mxu0 0
        %1281 = vmatpush1.bf16.msra.mxu0 0
        %1282 = vmatprep.subr.bf16.mxu0 0
        %1283 = vmatpush1.bf16.msra.mxu0 0
        %1284 = vmatprep.subr.bf16.mxu0 0
        %1285 = vmatpush1.bf16.msra.mxu0 0
        %1286 = vmatprep.subr.bf16.mxu0 0
        %1287 = vmatpush1.bf16.msra.mxu0 0
        %1288 = vmatprep.subr.bf16.mxu0 0
        %1289 = vmatpush1.bf16.msra.mxu0 0
        %1290 = vmatprep.subr.bf16.mxu0 0
        %1291 = vmatpush1.bf16.msra.mxu0 0
        %1292 = vmatprep.subr.bf16.mxu0 0
        %1293 = vmatpush1.bf16.msra.mxu0 0
        %1294 = vmatprep.subr.bf16.mxu0 0
        %1295 = vmatpush1.bf16.msra.mxu0 0
        %1296 = vmatprep.subr.bf16.mxu0 0
        %1297 = vmatpush1.bf16.msra.mxu0 0
        %1298 = vmatprep.mubr.bf16.mxu0 0
        %1299 = vmatmul.mubr.bf16.gmra.mrb[0].mxu0 %v1264
        %v1300 = vpop.f32.mrb[0].mxu0
        %v1301 = vadd.f32 0.0, %v1300
        %v1302 = vpop.f32.mrb[0].mxu0
        %v1303 = vadd.f32 0.0, %v1302
        %v1304 = vpop.f32.mrb[0].mxu0
        %v1305 = vpop.f32.mrb[0].mxu0
        %1306 = vdwg.mxu0
        %v1307 = vsub.f32 0.0, %v1301
        %v1308 = vmul.f32 %v1307, 1.442695
        %v1309 = vpow.pop %v1308
        %v1310 = vadd.f32 %v1309, 1.0
        %v1311 = vrcp.pop %v1310
        %v1312 = vmul.f32 1.0, %v1311
        %v1313 = vmul.f32 %v1301, %v1312
        %v1314 = vmul.f32 %v1313, %v1303
        %v1315 = vpack.c.bf16 %v1314, %v1314
        %v1316 = vld [vmem:[%s4] sm:$0xf]
        %v1317 = vld [vmem:[%s4 + $0x4] sm:$0xf]
        %v1318 = vld [vmem:[%s4 + $0x8] sm:$0xf]
        %v1319 = vld [vmem:[%s4 + $0xc] sm:$0xf]
        %v1320 = vld [vmem:[%s4 + $0x10] sm:$0xf]
        %v1321 = vld [vmem:[%s4 + $0x14] sm:$0xf]
        %v1322 = vld [vmem:[%s4 + $0x18] sm:$0xf]
        %v1323 = vld [vmem:[%s4 + $0x1c] sm:$0xf]
        %v1324 = vld [vmem:[%s4 + $0x20] sm:$0xf]
        %v1325 = vld [vmem:[%s4 + $0x24] sm:$0xf]
        %v1326 = vld [vmem:[%s4 + $0x28] sm:$0xf]
        %v1327 = vld [vmem:[%s4 + $0x2c] sm:$0xf]
        %v1328 = vld [vmem:[%s4 + $0x30] sm:$0xf]
        %v1329 = vld [vmem:[%s4 + $0x34] sm:$0xf]
        %v1330 = vld [vmem:[%s4 + $0x38] sm:$0xf]
        %v1331 = vld [vmem:[%s4 + $0x3c] sm:$0xf]
        %v1348 = vunpack.c.l.b16 %v1316
        %v1349 = vunpack.c.l.b16 %v1317
        %v1350 = vunpack.c.l.b16 %v1318
        %v1351 = vunpack.c.l.b16 %v1319
        %v1352 = vunpack.c.l.b16 %v1320
        %v1353 = vunpack.c.l.b16 %v1321
        %v1354 = vunpack.c.l.b16 %v1322
        %v1355 = vunpack.c.l.b16 %v1323
        %v1356 = vunpack.c.l.b16 %v1324
        %v1357 = vunpack.c.l.b16 %v1325
        %v1358 = vunpack.c.l.b16 %v1326
        %v1359 = vunpack.c.l.b16 %v1327
        %v1360 = vunpack.c.l.b16 %v1328
        %v1361 = vunpack.c.l.b16 %v1329
        %v1362 = vunpack.c.l.b16 %v1330
        %v1363 = vunpack.c.l.b16 %v1331
        %v1364 = vpack.c.b16 %v1349, %v1348
        %v1365 = vpack.c.b16 %v1351, %v1350
        %v1366 = vpack.c.b16 %v1353, %v1352
        %v1367 = vpack.c.b16 %v1355, %v1354
        %v1368 = vpack.c.b16 %v1357, %v1356
        %v1369 = vpack.c.b16 %v1359, %v1358
        %v1370 = vpack.c.b16 %v1361, %v1360
        %v1371 = vpack.c.b16 %v1363, %v1362
        %1380 = vmatprep.subr.bf16.mxu0 0
        %1381 = vmatpush1.bf16.msra.mxu0 %v1364
        %1382 = vmatprep.subr.bf16.mxu0 0
        %1383 = vmatpush1.bf16.msra.mxu0 %v1365
        %1384 = vmatprep.subr.bf16.mxu0 0
        %1385 = vmatpush1.bf16.msra.mxu0 %v1366
        %1386 = vmatprep.subr.bf16.mxu0 0
        %1387 = vmatpush1.bf16.msra.mxu0 %v1367
        %1388 = vmatprep.subr.bf16.mxu0 0
        %1389 = vmatpush1.bf16.msra.mxu0 %v1368
        %1390 = vmatprep.subr.bf16.mxu0 0
        %1391 = vmatpush1.bf16.msra.mxu0 %v1369
        %1392 = vmatprep.subr.bf16.mxu0 0
        %1393 = vmatpush1.bf16.msra.mxu0 %v1370
        %1394 = vmatprep.subr.bf16.mxu0 0
        %1395 = vmatpush1.bf16.msra.mxu0 %v1371
        %1396 = vmatprep.subr.bf16.mxu0 0
        %1397 = vmatpush1.bf16.msra.mxu0 0
        %1398 = vmatprep.subr.bf16.mxu0 0
        %1399 = vmatpush1.bf16.msra.mxu0 0
        %1400 = vmatprep.subr.bf16.mxu0 0
        %1401 = vmatpush1.bf16.msra.mxu0 0
        %1402 = vmatprep.subr.bf16.mxu0 0
        %1403 = vmatpush1.bf16.msra.mxu0 0
        %1404 = vmatprep.subr.bf16.mxu0 0
        %1405 = vmatpush1.bf16.msra.mxu0 0
        %1406 = vmatprep.subr.bf16.mxu0 0
        %1407 = vmatpush1.bf16.msra.mxu0 0
        %1408 = vmatprep.subr.bf16.mxu0 0
        %1409 = vmatpush1.bf16.msra.mxu0 0
        %1410 = vmatprep.subr.bf16.mxu0 0
        %1411 = vmatpush1.bf16.msra.mxu0 0
        %1412 = vmatprep.mubr.bf16.mxu0 0
        %1413 = vmatmul.mubr.bf16.gmra.mrb[0].mxu0 %v1315
        %v1414 = vpop.f32.mrb[0].mxu0
        %v1415 = vadd.f32 0.0, %v1414
        %v1416 = vpop.f32.mrb[0].mxu0
        %v1417 = vpop.f32.mrb[0].mxu0
        %v1418 = vpop.f32.mrb[0].mxu0
        %1419 = vdwg.mxu0
        %v1420 = vadd.f32 %v1197, %v1415
        %s1421 = scalar_lea.vmem %s5, 1
        %v1422 = vld [vmem:[%s1421] sm:$0x1]
        %v1423 = vmul.f32 %v1420, %v1420
        %v1424 = vsel %vm422, %v1423, 0.0
        %1425 = vadd.xlane.f32.xlu0 %v1424
        %v1426 = vpop.xlane.xlu0 %1425
        %v1427 = vmul.f32 %v1426, %v426
        %v1428 = vadd.f32 %v1427, 1e-05
        %v1429 = vrsqrt.pop %v1428
        %v1430 = vmul.f32 %v1420, %v1429
        %v1432 = vlaneseq
        %v1433 = vshrl.u32 %v1432, 7
        %v1434 = vsub.s32 0, %v1433
        %v1435 = vrot.slane %v1422, %v1434
        %v1437 = vmul.f32 %v1430, %v1435
        %v1438 = vpack.c.bf16 %v1437, %v1437
        %s1439 = scalar_lea.vmem %s1, 64
        %v1440 = vld [vmem:[%s1439] sm:$0xff]
        %v1441 = vld [vmem:[%s1439 + $0x8] sm:$0xff]
        %v1442 = vld [vmem:[%s1439 + $0x10] sm:$0xff]
        %v1443 = vld [vmem:[%s1439 + $0x18] sm:$0xff]
        %v1444 = vld [vmem:[%s1439 + $0x20] sm:$0xff]
        %v1445 = vld [vmem:[%s1439 + $0x28] sm:$0xff]
        %v1446 = vld [vmem:[%s1439 + $0x30] sm:$0xff]
        %v1447 = vld [vmem:[%s1439 + $0x38] sm:$0xff]
        %v1456 = vunpack.c.l.b16 %v1440
        %v1457 = vunpack.c.h.b16 %v1440
        %v1458 = vunpack.c.l.b16 %v1441
        %v1459 = vunpack.c.h.b16 %v1441
        %v1460 = vunpack.c.l.b16 %v1442
        %v1461 = vunpack.c.h.b16 %v1442
        %v1462 = vunpack.c.l.b16 %v1443
        %v1463 = vunpack.c.h.b16 %v1443
        %v1464 = vunpack.c.l.b16 %v1444
        %v1465 = vunpack.c.h.b16 %v1444
        %v1466 = vunpack.c.l.b16 %v1445
        %v1467 = vunpack.c.h.b16 %v1445
        %v1468 = vunpack.c.l.b16 %v1446
        %v1469 = vunpack.c.h.b16 %v1446
        %v1470 = vunpack.c.l.b16 %v1447
        %v1471 = vunpack.c.h.b16 %v1447
        %v1472 = vpack.c.b16 %v1458, %v1456
        %v1473 = vpack.c.b16 %v1459, %v1457
        %v1474 = vpack.c.b16 %v1462, %v1460
        %v1475 = vpack.c.b16 %v1463, %v1461
        %v1476 = vpack.c.b16 %v1466, %v1464
        %v1477 = vpack.c.b16 %v1467, %v1465
        %v1478 = vpack.c.b16 %v1470, %v1468
        %v1479 = vpack.c.b16 %v1471, %v1469
        %v1489 = vsel %vm422, %v1438, 0
        %1491 = vmatprep.subr.bf16.mxu0 %v1473
        %1492 = vmatpush1.bf16.msra.mxu0 %v1472
        %1493 = vmatprep.subr.bf16.mxu0 %v1475
        %1494 = vmatpush1.bf16.msra.mxu0 %v1474
        %1495 = vmatprep.subr.bf16.mxu0 %v1477
        %1496 = vmatpush1.bf16.msra.mxu0 %v1476
        %1497 = vmatprep.subr.bf16.mxu0 %v1479
        %1498 = vmatpush1.bf16.msra.mxu0 %v1478
        %1499 = vmatprep.subr.bf16.mxu0 0
        %1500 = vmatpush1.bf16.msra.mxu0 0
        %1501 = vmatprep.subr.bf16.mxu0 0
        %1502 = vmatpush1.bf16.msra.mxu0 0
        %1503 = vmatprep.subr.bf16.mxu0 0
        %1504 = vmatpush1.bf16.msra.mxu0 0
        %1505 = vmatprep.subr.bf16.mxu0 0
        %1506 = vmatpush1.bf16.msra.mxu0 0
        %1507 = vmatprep.subr.bf16.mxu0 0
        %1508 = vmatpush1.bf16.msra.mxu0 0
        %1509 = vmatprep.subr.bf16.mxu0 0
        %1510 = vmatpush1.bf16.msra.mxu0 0
        %1511 = vmatprep.subr.bf16.mxu0 0
        %1512 = vmatpush1.bf16.msra.mxu0 0
        %1513 = vmatprep.subr.bf16.mxu0 0
        %1514 = vmatpush1.bf16.msra.mxu0 0
        %1515 = vmatprep.subr.bf16.mxu0 0
        %1516 = vmatpush1.bf16.msra.mxu0 0
        %1517 = vmatprep.subr.bf16.mxu0 0
        %1518 = vmatpush1.bf16.msra.mxu0 0
        %1519 = vmatprep.subr.bf16.mxu0 0
        %1520 = vmatpush1.bf16.msra.mxu0 0
        %1521 = vmatprep.subr.bf16.mxu0 0
        %1522 = vmatpush1.bf16.msra.mxu0 0
        %1523 = vmatprep.mubr.bf16.mxu0 0
        %1524 = vmatmul.mubr.bf16.gmra.mrb[0].mxu0 %v1489
        %v1525 = vpop.f32.mrb[0].mxu0
        %v1526 = vadd.f32 0.0, %v1525
        %v1527 = vpop.f32.mrb[0].mxu0
        %v1528 = vadd.f32 0.0, %v1527
        %v1529 = vpop.f32.mrb[0].mxu0
        %v1530 = vpop.f32.mrb[0].mxu0
        %1531 = vdwg.mxu0
        %1532 = vrot.lane.b32.xlu0 %v1526, 120
        %v1533 = vpop.permute.xlu0 %1532
        %1534 = vrot.lane.b32.xlu0 %v1526, 8
        %v1535 = vpop.permute.xlu0 %1534
        %v1536 = vmul.f32 %v1526, %v412
        %v1537 = vmul.f32 %v1533, %v413
        %v1538 = vadd.f32 %v1536, %v1537
        %v1539 = vmul.f32 %v1535, %v414
        %v1540 = vadd.f32 %v1538, %v1539
        %v1541 = vpack.c.bf16 %v1540, %v1540
        %v1542 = vpack.c.bf16 %v1528, %v1528
        %s1543 = scalar_lea.vmem %s2, 32
        %v1544 = vld [vmem:[%s1543] sm:$0xf]
        %v1545 = vld [vmem:[%s1543 + $0x4] sm:$0xf]
        %v1546 = vld [vmem:[%s1543 + $0x8] sm:$0xf]
        %v1547 = vld [vmem:[%s1543 + $0xc] sm:$0xf]
        %v1548 = vld [vmem:[%s1543 + $0x10] sm:$0xf]
        %v1549 = vld [vmem:[%s1543 + $0x14] sm:$0xf]
        %v1550 = vld [vmem:[%s1543 + $0x18] sm:$0xf]
        %v1551 = vld [vmem:[%s1543 + $0x1c] sm:$0xf]
        %1553 = vrot.lane.b32.xlu0 %v1541, 64
        %v1554 = vpop.permute.xlu0 %1553
        %v1556 = vsel %vm553, %v1541, 0
        %v1559 = vsel %vm553, %v1554, 0
        %1561 = vmatprep.subr.bf16.mxu0 0
        %1562 = vmatpush1.bf16.xpose.msra.mxu0 %v1559
        %1563 = vmatprep.subr.bf16.mxu0 0
        %1564 = vmatpush1.bf16.xpose.msra.mxu0 0
        %1565 = vmatprep.subr.bf16.mxu0 0
        %1566 = vmatpush1.bf16.xpose.msra.mxu0 0
        %1567 = vmatprep.subr.bf16.mxu0 0
        %1568 = vmatpush1.bf16.xpose.msra.mxu0 0
        %1569 = vmatprep.subr.bf16.mxu0 0
        %1570 = vmatpush1.bf16.xpose.msra.mxu0 0
        %1571 = vmatprep.subr.bf16.mxu0 0
        %1572 = vmatpush1.bf16.xpose.msra.mxu0 0
        %1573 = vmatprep.subr.bf16.mxu0 0
        %1574 = vmatpush1.bf16.xpose.msra.mxu0 0
        %1575 = vmatprep.subr.bf16.mxu0 0
        %1576 = vmatpush1.bf16.xpose.msra.mxu0 0
        %1577 = vmatprep.subr.bf16.mxu0 0
        %1578 = vmatpush1.bf16.xpose.msra.mxu0 0
        %1579 = vmatprep.subr.bf16.mxu0 0
        %1580 = vmatpush1.bf16.xpose.msra.mxu0 0
        %1581 = vmatprep.subr.bf16.mxu0 0
        %1582 = vmatpush1.bf16.xpose.msra.mxu0 0
        %1583 = vmatprep.subr.bf16.mxu0 0
        %1584 = vmatpush1.bf16.xpose.msra.mxu0 0
        %1585 = vmatprep.subr.bf16.mxu0 0
        %1586 = vmatpush1.bf16.xpose.msra.mxu0 0
        %1587 = vmatprep.subr.bf16.mxu0 0
        %1588 = vmatpush1.bf16.xpose.msra.mxu0 0
        %1589 = vmatprep.subr.bf16.mxu0 0
        %1590 = vmatpush1.bf16.xpose.msra.mxu0 0
        %1591 = vmatprep.subr.bf16.mxu0 0
        %1592 = vmatpush1.bf16.xpose.msra.mxu0 0
        %1593 = vmatprep.mubr.bf16.mxu0 0
        %1594 = vmatmul.mubr.bf16.gmra.mrb[0].mxu0 %v1556
        %v1595 = vpop.f32.mrb[0].mxu0
        %v1596 = vadd.f32 0.0, %v1595
        %v1597 = vpop.f32.mrb[0].mxu0
        %v1598 = vpop.f32.mrb[0].mxu0
        %v1599 = vpop.f32.mrb[0].mxu0
        %1600 = vdwg.mxu0
        %v1601 = vsel %vm419, %v1596, -1e+30
        %v1602 = vsel %vm601, %v1601, -inf
        %1603 = vmax.xlane.f32.xlu0 %v1602
        %v1604 = vpop.xlane.xlu0 %1603
        %v1605 = vsub.f32 %v1601, %v1604
        %v1606 = vmul.f32 %v1605, 1.442695
        %v1607 = vpow.pop %v1606
        %v1608 = vsel %vm601, %v1607, 0.0
        %1609 = vadd.xlane.f32.xlu0 %v1608
        %v1610 = vpop.xlane.xlu0 %1609
        %v1611 = vrcp.pop %v1610
        %v1612 = vmul.f32 %v1607, %v1611
        %v1613 = vpack.c.bf16 %v1612, %v1612
        %v1615 = vsel %vm601, %v1613, 0
        %v1618 = vsel %vm617, %v1542, 0
        %1620 = vmatprep.subr.bf16.mxu0 0
        %1621 = vmatpush1.bf16.msra.mxu0 %v1618
        %1622 = vmatprep.subr.bf16.mxu0 0
        %1623 = vmatpush1.bf16.msra.mxu0 0
        %1624 = vmatprep.subr.bf16.mxu0 0
        %1625 = vmatpush1.bf16.msra.mxu0 0
        %1626 = vmatprep.subr.bf16.mxu0 0
        %1627 = vmatpush1.bf16.msra.mxu0 0
        %1628 = vmatprep.subr.bf16.mxu0 0
        %1629 = vmatpush1.bf16.msra.mxu0 0
        %1630 = vmatprep.subr.bf16.mxu0 0
        %1631 = vmatpush1.bf16.msra.mxu0 0
        %1632 = vmatprep.subr.bf16.mxu0 0
        %1633 = vmatpush1.bf16.msra.mxu0 0
        %1634 = vmatprep.subr.bf16.mxu0 0
        %1635 = vmatpush1.bf16.msra.mxu0 0
        %1636 = vmatprep.subr.bf16.mxu0 0
        %1637 = vmatpush1.bf16.msra.mxu0 0
        %1638 = vmatprep.subr.bf16.mxu0 0
        %1639 = vmatpush1.bf16.msra.mxu0 0
        %1640 = vmatprep.subr.bf16.mxu0 0
        %1641 = vmatpush1.bf16.msra.mxu0 0
        %1642 = vmatprep.subr.bf16.mxu0 0
        %1643 = vmatpush1.bf16.msra.mxu0 0
        %1644 = vmatprep.subr.bf16.mxu0 0
        %1645 = vmatpush1.bf16.msra.mxu0 0
        %1646 = vmatprep.subr.bf16.mxu0 0
        %1647 = vmatpush1.bf16.msra.mxu0 0
        %1648 = vmatprep.subr.bf16.mxu0 0
        %1649 = vmatpush1.bf16.msra.mxu0 0
        %1650 = vmatprep.subr.bf16.mxu0 0
        %1651 = vmatpush1.bf16.msra.mxu0 0
        %1652 = vmatprep.mubr.bf16.mxu0 0
        %1653 = vmatmul.mubr.bf16.gmra.mrb[0].mxu0 %v1615
        %v1654 = vpop.f32.mrb[0].mxu0
        %v1655 = vadd.f32 0.0, %v1654
        %v1656 = vpop.f32.mrb[0].mxu0
        %v1657 = vpop.f32.mrb[0].mxu0
        %v1658 = vpop.f32.mrb[0].mxu0
        %1659 = vdwg.mxu0
        %v1660 = vpack.c.bf16 %v1655, %v1655
        %1661 = vrot.lane.b32.xlu0 %v1541, 112
        %v1662 = vpop.permute.xlu0 %1661
        %1663 = vrot.lane.b32.xlu0 %v1541, 48
        %v1664 = vpop.permute.xlu0 %1663
        %v1666 = vsel %vm553, %v1662, 0
        %v1669 = vsel %vm553, %v1664, 0
        %1671 = vmatprep.subr.bf16.mxu0 0
        %1672 = vmatpush1.bf16.xpose.msra.mxu0 %v1669
        %1673 = vmatprep.subr.bf16.mxu0 0
        %1674 = vmatpush1.bf16.xpose.msra.mxu0 0
        %1675 = vmatprep.subr.bf16.mxu0 0
        %1676 = vmatpush1.bf16.xpose.msra.mxu0 0
        %1677 = vmatprep.subr.bf16.mxu0 0
        %1678 = vmatpush1.bf16.xpose.msra.mxu0 0
        %1679 = vmatprep.subr.bf16.mxu0 0
        %1680 = vmatpush1.bf16.xpose.msra.mxu0 0
        %1681 = vmatprep.subr.bf16.mxu0 0
        %1682 = vmatpush1.bf16.xpose.msra.mxu0 0
        %1683 = vmatprep.subr.bf16.mxu0 0
        %1684 = vmatpush1.bf16.xpose.msra.mxu0 0
        %1685 = vmatprep.subr.bf16.mxu0 0
        %1686 = vmatpush1.bf16.xpose.msra.mxu0 0
        %1687 = vmatprep.subr.bf16.mxu0 0
        %1688 = vmatpush1.bf16.xpose.msra.mxu0 0
        %1689 = vmatprep.subr.bf16.mxu0 0
        %1690 = vmatpush1.bf16.xpose.msra.mxu0 0
        %1691 = vmatprep.subr.bf16.mxu0 0
        %1692 = vmatpush1.bf16.xpose.msra.mxu0 0
        %1693 = vmatprep.subr.bf16.mxu0 0
        %1694 = vmatpush1.bf16.xpose.msra.mxu0 0
        %1695 = vmatprep.subr.bf16.mxu0 0
        %1696 = vmatpush1.bf16.xpose.msra.mxu0 0
        %1697 = vmatprep.subr.bf16.mxu0 0
        %1698 = vmatpush1.bf16.xpose.msra.mxu0 0
        %1699 = vmatprep.subr.bf16.mxu0 0
        %1700 = vmatpush1.bf16.xpose.msra.mxu0 0
        %1701 = vmatprep.subr.bf16.mxu0 0
        %1702 = vmatpush1.bf16.xpose.msra.mxu0 0
        %1703 = vmatprep.mubr.bf16.mxu0 0
        %1704 = vmatmul.mubr.bf16.gmra.mrb[0].mxu0 %v1666
        %v1705 = vpop.f32.mrb[0].mxu0
        %v1706 = vadd.f32 0.0, %v1705
        %v1707 = vpop.f32.mrb[0].mxu0
        %v1708 = vpop.f32.mrb[0].mxu0
        %v1709 = vpop.f32.mrb[0].mxu0
        %1710 = vdwg.mxu0
        %v1711 = vsel %vm419, %v1706, -1e+30
        %v1712 = vsel %vm601, %v1711, -inf
        %1713 = vmax.xlane.f32.xlu0 %v1712
        %v1714 = vpop.xlane.xlu0 %1713
        %v1715 = vsub.f32 %v1711, %v1714
        %v1716 = vmul.f32 %v1715, 1.442695
        %v1717 = vpow.pop %v1716
        %v1718 = vsel %vm601, %v1717, 0.0
        %1719 = vadd.xlane.f32.xlu0 %v1718
        %v1720 = vpop.xlane.xlu0 %1719
        %v1721 = vrcp.pop %v1720
        %v1722 = vmul.f32 %v1717, %v1721
        %v1723 = vpack.c.bf16 %v1722, %v1722
        %1725 = vrot.lane.b32.xlu0 %v1542, 112
        %v1726 = vpop.permute.xlu0 %1725
        %v1728 = vsel %vm601, %v1723, 0
        %v1731 = vsel %vm617, %v1726, 0
        %1733 = vmatprep.subr.bf16.mxu0 0
        %1734 = vmatpush1.bf16.msra.mxu0 %v1731
        %1735 = vmatprep.subr.bf16.mxu0 0
        %1736 = vmatpush1.bf16.msra.mxu0 0
        %1737 = vmatprep.subr.bf16.mxu0 0
        %1738 = vmatpush1.bf16.msra.mxu0 0
        %1739 = vmatprep.subr.bf16.mxu0 0
        %1740 = vmatpush1.bf16.msra.mxu0 0
        %1741 = vmatprep.subr.bf16.mxu0 0
        %1742 = vmatpush1.bf16.msra.mxu0 0
        %1743 = vmatprep.subr.bf16.mxu0 0
        %1744 = vmatpush1.bf16.msra.mxu0 0
        %1745 = vmatprep.subr.bf16.mxu0 0
        %1746 = vmatpush1.bf16.msra.mxu0 0
        %1747 = vmatprep.subr.bf16.mxu0 0
        %1748 = vmatpush1.bf16.msra.mxu0 0
        %1749 = vmatprep.subr.bf16.mxu0 0
        %1750 = vmatpush1.bf16.msra.mxu0 0
        %1751 = vmatprep.subr.bf16.mxu0 0
        %1752 = vmatpush1.bf16.msra.mxu0 0
        %1753 = vmatprep.subr.bf16.mxu0 0
        %1754 = vmatpush1.bf16.msra.mxu0 0
        %1755 = vmatprep.subr.bf16.mxu0 0
        %1756 = vmatpush1.bf16.msra.mxu0 0
        %1757 = vmatprep.subr.bf16.mxu0 0
        %1758 = vmatpush1.bf16.msra.mxu0 0
        %1759 = vmatprep.subr.bf16.mxu0 0
        %1760 = vmatpush1.bf16.msra.mxu0 0
        %1761 = vmatprep.subr.bf16.mxu0 0
        %1762 = vmatpush1.bf16.msra.mxu0 0
        %1763 = vmatprep.subr.bf16.mxu0 0
        %1764 = vmatpush1.bf16.msra.mxu0 0
        %1765 = vmatprep.mubr.bf16.mxu0 0
        %1766 = vmatmul.mubr.bf16.gmra.mrb[0].mxu0 %v1728
        %v1767 = vpop.f32.mrb[0].mxu0
        %v1768 = vadd.f32 0.0, %v1767
        %v1769 = vpop.f32.mrb[0].mxu0
        %v1770 = vpop.f32.mrb[0].mxu0
        %v1771 = vpop.f32.mrb[0].mxu0
        %1772 = vdwg.mxu0
        %v1773 = vpack.c.bf16 %v1768, %v1768
        %v1776 = vunpack.c.l.b16 %v1546
        %v1777 = vunpack.c.l.b16 %v1547
        %v1778 = vpack.c.b16 %v1777, %v1776
        %v1781 = vsel %vm553, %v1773, 0
        %1783 = vmatprep.subr.bf16.mxu0 0
        %1784 = vmatpush1.bf16.msra.mxu0 %v1778
        %1785 = vmatprep.subr.bf16.mxu0 0
        %1786 = vmatpush1.bf16.msra.mxu0 0
        %1787 = vmatprep.subr.bf16.mxu0 0
        %1788 = vmatpush1.bf16.msra.mxu0 0
        %1789 = vmatprep.subr.bf16.mxu0 0
        %1790 = vmatpush1.bf16.msra.mxu0 0
        %1791 = vmatprep.subr.bf16.mxu0 0
        %1792 = vmatpush1.bf16.msra.mxu0 0
        %1793 = vmatprep.subr.bf16.mxu0 0
        %1794 = vmatpush1.bf16.msra.mxu0 0
        %1795 = vmatprep.subr.bf16.mxu0 0
        %1796 = vmatpush1.bf16.msra.mxu0 0
        %1797 = vmatprep.subr.bf16.mxu0 0
        %1798 = vmatpush1.bf16.msra.mxu0 0
        %1799 = vmatprep.subr.bf16.mxu0 0
        %1800 = vmatpush1.bf16.msra.mxu0 0
        %1801 = vmatprep.subr.bf16.mxu0 0
        %1802 = vmatpush1.bf16.msra.mxu0 0
        %1803 = vmatprep.subr.bf16.mxu0 0
        %1804 = vmatpush1.bf16.msra.mxu0 0
        %1805 = vmatprep.subr.bf16.mxu0 0
        %1806 = vmatpush1.bf16.msra.mxu0 0
        %1807 = vmatprep.subr.bf16.mxu0 0
        %1808 = vmatpush1.bf16.msra.mxu0 0
        %1809 = vmatprep.subr.bf16.mxu0 0
        %1810 = vmatpush1.bf16.msra.mxu0 0
        %1811 = vmatprep.subr.bf16.mxu0 0
        %1812 = vmatpush1.bf16.msra.mxu0 0
        %1813 = vmatprep.subr.bf16.mxu0 0
        %1814 = vmatpush1.bf16.msra.mxu0 0
        %1815 = vmatprep.mubr.bf16.mxu0 0
        %1816 = vmatmul.mubr.bf16.gmra.mrb[0].mxu0 %v1781
        %v1817 = vpop.f32.mrb[0].mxu0
        %v1818 = vadd.f32 0.0, %v1817
        %v1819 = vpop.f32.mrb[0].mxu0
        %v1820 = vpop.f32.mrb[0].mxu0
        %v1821 = vpop.f32.mrb[0].mxu0
        %1822 = vdwg.mxu0
        %v1825 = vunpack.c.l.b16 %v1544
        %v1826 = vunpack.c.l.b16 %v1545
        %v1827 = vpack.c.b16 %v1826, %v1825
        %v1830 = vsel %vm553, %v1660, 0
        %1832 = vmatprep.subr.bf16.mxu0 0
        %1833 = vmatpush1.bf16.msra.mxu0 %v1827
        %1834 = vmatprep.subr.bf16.mxu0 0
        %1835 = vmatpush1.bf16.msra.mxu0 0
        %1836 = vmatprep.subr.bf16.mxu0 0
        %1837 = vmatpush1.bf16.msra.mxu0 0
        %1838 = vmatprep.subr.bf16.mxu0 0
        %1839 = vmatpush1.bf16.msra.mxu0 0
        %1840 = vmatprep.subr.bf16.mxu0 0
        %1841 = vmatpush1.bf16.msra.mxu0 0
        %1842 = vmatprep.subr.bf16.mxu0 0
        %1843 = vmatpush1.bf16.msra.mxu0 0
        %1844 = vmatprep.subr.bf16.mxu0 0
        %1845 = vmatpush1.bf16.msra.mxu0 0
        %1846 = vmatprep.subr.bf16.mxu0 0
        %1847 = vmatpush1.bf16.msra.mxu0 0
        %1848 = vmatprep.subr.bf16.mxu0 0
        %1849 = vmatpush1.bf16.msra.mxu0 0
        %1850 = vmatprep.subr.bf16.mxu0 0
        %1851 = vmatpush1.bf16.msra.mxu0 0
        %1852 = vmatprep.subr.bf16.mxu0 0
        %1853 = vmatpush1.bf16.msra.mxu0 0
        %1854 = vmatprep.subr.bf16.mxu0 0
        %1855 = vmatpush1.bf16.msra.mxu0 0
        %1856 = vmatprep.subr.bf16.mxu0 0
        %1857 = vmatpush1.bf16.msra.mxu0 0
        %1858 = vmatprep.subr.bf16.mxu0 0
        %1859 = vmatpush1.bf16.msra.mxu0 0
        %1860 = vmatprep.subr.bf16.mxu0 0
        %1861 = vmatpush1.bf16.msra.mxu0 0
        %1862 = vmatprep.subr.bf16.mxu0 0
        %1863 = vmatpush1.bf16.msra.mxu0 0
        %1864 = vmatprep.mubr.bf16.mxu0 0
        %1865 = vmatmul.mubr.bf16.gmra.mrb[0].mxu0 %v1830
        %v1866 = vpop.f32.mrb[0].mxu0
        %v1867 = vadd.f32 %v1818, %v1866
        %v1868 = vpop.f32.mrb[0].mxu0
        %v1869 = vpop.f32.mrb[0].mxu0
        %v1870 = vpop.f32.mrb[0].mxu0
        %1871 = vdwg.mxu0
        %1872 = vrot.lane.b32.xlu0 %v1541, 96
        %v1873 = vpop.permute.xlu0 %1872
        %1874 = vrot.lane.b32.xlu0 %v1541, 32
        %v1875 = vpop.permute.xlu0 %1874
        %v1877 = vsel %vm553, %v1873, 0
        %v1880 = vsel %vm553, %v1875, 0
        %1882 = vmatprep.subr.bf16.mxu0 0
        %1883 = vmatpush1.bf16.xpose.msra.mxu0 %v1880
        %1884 = vmatprep.subr.bf16.mxu0 0
        %1885 = vmatpush1.bf16.xpose.msra.mxu0 0
        %1886 = vmatprep.subr.bf16.mxu0 0
        %1887 = vmatpush1.bf16.xpose.msra.mxu0 0
        %1888 = vmatprep.subr.bf16.mxu0 0
        %1889 = vmatpush1.bf16.xpose.msra.mxu0 0
        %1890 = vmatprep.subr.bf16.mxu0 0
        %1891 = vmatpush1.bf16.xpose.msra.mxu0 0
        %1892 = vmatprep.subr.bf16.mxu0 0
        %1893 = vmatpush1.bf16.xpose.msra.mxu0 0
        %1894 = vmatprep.subr.bf16.mxu0 0
        %1895 = vmatpush1.bf16.xpose.msra.mxu0 0
        %1896 = vmatprep.subr.bf16.mxu0 0
        %1897 = vmatpush1.bf16.xpose.msra.mxu0 0
        %1898 = vmatprep.subr.bf16.mxu0 0
        %1899 = vmatpush1.bf16.xpose.msra.mxu0 0
        %1900 = vmatprep.subr.bf16.mxu0 0
        %1901 = vmatpush1.bf16.xpose.msra.mxu0 0
        %1902 = vmatprep.subr.bf16.mxu0 0
        %1903 = vmatpush1.bf16.xpose.msra.mxu0 0
        %1904 = vmatprep.subr.bf16.mxu0 0
        %1905 = vmatpush1.bf16.xpose.msra.mxu0 0
        %1906 = vmatprep.subr.bf16.mxu0 0
        %1907 = vmatpush1.bf16.xpose.msra.mxu0 0
        %1908 = vmatprep.subr.bf16.mxu0 0
        %1909 = vmatpush1.bf16.xpose.msra.mxu0 0
        %1910 = vmatprep.subr.bf16.mxu0 0
        %1911 = vmatpush1.bf16.xpose.msra.mxu0 0
        %1912 = vmatprep.subr.bf16.mxu0 0
        %1913 = vmatpush1.bf16.xpose.msra.mxu0 0
        %1914 = vmatprep.mubr.bf16.mxu0 0
        %1915 = vmatmul.mubr.bf16.gmra.mrb[0].mxu0 %v1877
        %v1916 = vpop.f32.mrb[0].mxu0
        %v1917 = vadd.f32 0.0, %v1916
        %v1918 = vpop.f32.mrb[0].mxu0
        %v1919 = vpop.f32.mrb[0].mxu0
        %v1920 = vpop.f32.mrb[0].mxu0
        %1921 = vdwg.mxu0
        %v1922 = vsel %vm419, %v1917, -1e+30
        %v1923 = vsel %vm601, %v1922, -inf
        %1924 = vmax.xlane.f32.xlu0 %v1923
        %v1925 = vpop.xlane.xlu0 %1924
        %v1926 = vsub.f32 %v1922, %v1925
        %v1927 = vmul.f32 %v1926, 1.442695
        %v1928 = vpow.pop %v1927
        %v1929 = vsel %vm601, %v1928, 0.0
        %1930 = vadd.xlane.f32.xlu0 %v1929
        %v1931 = vpop.xlane.xlu0 %1930
        %v1932 = vrcp.pop %v1931
        %v1933 = vmul.f32 %v1928, %v1932
        %v1934 = vpack.c.bf16 %v1933, %v1933
        %1935 = vrot.lane.b32.xlu0 %v1542, 96
        %v1936 = vpop.permute.xlu0 %1935
        %v1938 = vsel %vm601, %v1934, 0
        %v1941 = vsel %vm617, %v1936, 0
        %1943 = vmatprep.subr.bf16.mxu0 0
        %1944 = vmatpush1.bf16.msra.mxu0 %v1941
        %1945 = vmatprep.subr.bf16.mxu0 0
        %1946 = vmatpush1.bf16.msra.mxu0 0
        %1947 = vmatprep.subr.bf16.mxu0 0
        %1948 = vmatpush1.bf16.msra.mxu0 0
        %1949 = vmatprep.subr.bf16.mxu0 0
        %1950 = vmatpush1.bf16.msra.mxu0 0
        %1951 = vmatprep.subr.bf16.mxu0 0
        %1952 = vmatpush1.bf16.msra.mxu0 0
        %1953 = vmatprep.subr.bf16.mxu0 0
        %1954 = vmatpush1.bf16.msra.mxu0 0
        %1955 = vmatprep.subr.bf16.mxu0 0
        %1956 = vmatpush1.bf16.msra.mxu0 0
        %1957 = vmatprep.subr.bf16.mxu0 0
        %1958 = vmatpush1.bf16.msra.mxu0 0
        %1959 = vmatprep.subr.bf16.mxu0 0
        %1960 = vmatpush1.bf16.msra.mxu0 0
        %1961 = vmatprep.subr.bf16.mxu0 0
        %1962 = vmatpush1.bf16.msra.mxu0 0
        %1963 = vmatprep.subr.bf16.mxu0 0
        %1964 = vmatpush1.bf16.msra.mxu0 0
        %1965 = vmatprep.subr.bf16.mxu0 0
        %1966 = vmatpush1.bf16.msra.mxu0 0
        %1967 = vmatprep.subr.bf16.mxu0 0
        %1968 = vmatpush1.bf16.msra.mxu0 0
        %1969 = vmatprep.subr.bf16.mxu0 0
        %1970 = vmatpush1.bf16.msra.mxu0 0
        %1971 = vmatprep.subr.bf16.mxu0 0
        %1972 = vmatpush1.bf16.msra.mxu0 0
        %1973 = vmatprep.subr.bf16.mxu0 0
        %1974 = vmatpush1.bf16.msra.mxu0 0
        %1975 = vmatprep.mubr.bf16.mxu0 0
        %1976 = vmatmul.mubr.bf16.gmra.mrb[0].mxu0 %v1938
        %v1977 = vpop.f32.mrb[0].mxu0
        %v1978 = vadd.f32 0.0, %v1977
        %v1979 = vpop.f32.mrb[0].mxu0
        %v1980 = vpop.f32.mrb[0].mxu0
        %v1981 = vpop.f32.mrb[0].mxu0
        %1982 = vdwg.mxu0
        %v1983 = vpack.c.bf16 %v1978, %v1978
        %v1986 = vunpack.c.l.b16 %v1548
        %v1987 = vunpack.c.l.b16 %v1549
        %v1988 = vpack.c.b16 %v1987, %v1986
        %v1991 = vsel %vm553, %v1983, 0
        %1993 = vmatprep.subr.bf16.mxu0 0
        %1994 = vmatpush1.bf16.msra.mxu0 %v1988
        %1995 = vmatprep.subr.bf16.mxu0 0
        %1996 = vmatpush1.bf16.msra.mxu0 0
        %1997 = vmatprep.subr.bf16.mxu0 0
        %1998 = vmatpush1.bf16.msra.mxu0 0
        %1999 = vmatprep.subr.bf16.mxu0 0
        %2000 = vmatpush1.bf16.msra.mxu0 0
        %2001 = vmatprep.subr.bf16.mxu0 0
        %2002 = vmatpush1.bf16.msra.mxu0 0
        %2003 = vmatprep.subr.bf16.mxu0 0
        %2004 = vmatpush1.bf16.msra.mxu0 0
        %2005 = vmatprep.subr.bf16.mxu0 0
        %2006 = vmatpush1.bf16.msra.mxu0 0
        %2007 = vmatprep.subr.bf16.mxu0 0
        %2008 = vmatpush1.bf16.msra.mxu0 0
        %2009 = vmatprep.subr.bf16.mxu0 0
        %2010 = vmatpush1.bf16.msra.mxu0 0
        %2011 = vmatprep.subr.bf16.mxu0 0
        %2012 = vmatpush1.bf16.msra.mxu0 0
        %2013 = vmatprep.subr.bf16.mxu0 0
        %2014 = vmatpush1.bf16.msra.mxu0 0
        %2015 = vmatprep.subr.bf16.mxu0 0
        %2016 = vmatpush1.bf16.msra.mxu0 0
        %2017 = vmatprep.subr.bf16.mxu0 0
        %2018 = vmatpush1.bf16.msra.mxu0 0
        %2019 = vmatprep.subr.bf16.mxu0 0
        %2020 = vmatpush1.bf16.msra.mxu0 0
        %2021 = vmatprep.subr.bf16.mxu0 0
        %2022 = vmatpush1.bf16.msra.mxu0 0
        %2023 = vmatprep.subr.bf16.mxu0 0
        %2024 = vmatpush1.bf16.msra.mxu0 0
        %2025 = vmatprep.mubr.bf16.mxu0 0
        %2026 = vmatmul.mubr.bf16.gmra.mrb[0].mxu0 %v1991
        %v2027 = vpop.f32.mrb[0].mxu0
        %v2028 = vadd.f32 0.0, %v2027
        %v2029 = vpop.f32.mrb[0].mxu0
        %v2030 = vpop.f32.mrb[0].mxu0
        %v2031 = vpop.f32.mrb[0].mxu0
        %2032 = vdwg.mxu0
        %v2033 = vadd.f32 %v1867, %v2028
        %2034 = vrot.lane.b32.xlu0 %v1541, 80
        %v2035 = vpop.permute.xlu0 %2034
        %2036 = vrot.lane.b32.xlu0 %v1541, 16
        %v2037 = vpop.permute.xlu0 %2036
        %v2039 = vsel %vm553, %v2035, 0
        %v2042 = vsel %vm553, %v2037, 0
        %2044 = vmatprep.subr.bf16.mxu0 0
        %2045 = vmatpush1.bf16.xpose.msra.mxu0 %v2042
        %2046 = vmatprep.subr.bf16.mxu0 0
        %2047 = vmatpush1.bf16.xpose.msra.mxu0 0
        %2048 = vmatprep.subr.bf16.mxu0 0
        %2049 = vmatpush1.bf16.xpose.msra.mxu0 0
        %2050 = vmatprep.subr.bf16.mxu0 0
        %2051 = vmatpush1.bf16.xpose.msra.mxu0 0
        %2052 = vmatprep.subr.bf16.mxu0 0
        %2053 = vmatpush1.bf16.xpose.msra.mxu0 0
        %2054 = vmatprep.subr.bf16.mxu0 0
        %2055 = vmatpush1.bf16.xpose.msra.mxu0 0
        %2056 = vmatprep.subr.bf16.mxu0 0
        %2057 = vmatpush1.bf16.xpose.msra.mxu0 0
        %2058 = vmatprep.subr.bf16.mxu0 0
        %2059 = vmatpush1.bf16.xpose.msra.mxu0 0
        %2060 = vmatprep.subr.bf16.mxu0 0
        %2061 = vmatpush1.bf16.xpose.msra.mxu0 0
        %2062 = vmatprep.subr.bf16.mxu0 0
        %2063 = vmatpush1.bf16.xpose.msra.mxu0 0
        %2064 = vmatprep.subr.bf16.mxu0 0
        %2065 = vmatpush1.bf16.xpose.msra.mxu0 0
        %2066 = vmatprep.subr.bf16.mxu0 0
        %2067 = vmatpush1.bf16.xpose.msra.mxu0 0
        %2068 = vmatprep.subr.bf16.mxu0 0
        %2069 = vmatpush1.bf16.xpose.msra.mxu0 0
        %2070 = vmatprep.subr.bf16.mxu0 0
        %2071 = vmatpush1.bf16.xpose.msra.mxu0 0
        %2072 = vmatprep.subr.bf16.mxu0 0
        %2073 = vmatpush1.bf16.xpose.msra.mxu0 0
        %2074 = vmatprep.subr.bf16.mxu0 0
        %2075 = vmatpush1.bf16.xpose.msra.mxu0 0
        %2076 = vmatprep.mubr.bf16.mxu0 0
        %2077 = vmatmul.mubr.bf16.gmra.mrb[0].mxu0 %v2039
        %v2078 = vpop.f32.mrb[0].mxu0
        %v2079 = vadd.f32 0.0, %v2078
        %v2080 = vpop.f32.mrb[0].mxu0
        %v2081 = vpop.f32.mrb[0].mxu0
        %v2082 = vpop.f32.mrb[0].mxu0
        %2083 = vdwg.mxu0
        %v2084 = vsel %vm419, %v2079, -1e+30
        %v2085 = vsel %vm601, %v2084, -inf
        %2086 = vmax.xlane.f32.xlu0 %v2085
        %v2087 = vpop.xlane.xlu0 %2086
        %v2088 = vsub.f32 %v2084, %v2087
        %v2089 = vmul.f32 %v2088, 1.442695
        %v2090 = vpow.pop %v2089
        %v2091 = vsel %vm601, %v2090, 0.0
        %2092 = vadd.xlane.f32.xlu0 %v2091
        %v2093 = vpop.xlane.xlu0 %2092
        %v2094 = vrcp.pop %v2093
        %v2095 = vmul.f32 %v2090, %v2094
        %v2096 = vpack.c.bf16 %v2095, %v2095
        %2097 = vrot.lane.b32.xlu0 %v1542, 80
        %v2098 = vpop.permute.xlu0 %2097
        %v2100 = vsel %vm601, %v2096, 0
        %v2103 = vsel %vm617, %v2098, 0
        %2105 = vmatprep.subr.bf16.mxu0 0
        %2106 = vmatpush1.bf16.msra.mxu0 %v2103
        %2107 = vmatprep.subr.bf16.mxu0 0
        %2108 = vmatpush1.bf16.msra.mxu0 0
        %2109 = vmatprep.subr.bf16.mxu0 0
        %2110 = vmatpush1.bf16.msra.mxu0 0
        %2111 = vmatprep.subr.bf16.mxu0 0
        %2112 = vmatpush1.bf16.msra.mxu0 0
        %2113 = vmatprep.subr.bf16.mxu0 0
        %2114 = vmatpush1.bf16.msra.mxu0 0
        %2115 = vmatprep.subr.bf16.mxu0 0
        %2116 = vmatpush1.bf16.msra.mxu0 0
        %2117 = vmatprep.subr.bf16.mxu0 0
        %2118 = vmatpush1.bf16.msra.mxu0 0
        %2119 = vmatprep.subr.bf16.mxu0 0
        %2120 = vmatpush1.bf16.msra.mxu0 0
        %2121 = vmatprep.subr.bf16.mxu0 0
        %2122 = vmatpush1.bf16.msra.mxu0 0
        %2123 = vmatprep.subr.bf16.mxu0 0
        %2124 = vmatpush1.bf16.msra.mxu0 0
        %2125 = vmatprep.subr.bf16.mxu0 0
        %2126 = vmatpush1.bf16.msra.mxu0 0
        %2127 = vmatprep.subr.bf16.mxu0 0
        %2128 = vmatpush1.bf16.msra.mxu0 0
        %2129 = vmatprep.subr.bf16.mxu0 0
        %2130 = vmatpush1.bf16.msra.mxu0 0
        %2131 = vmatprep.subr.bf16.mxu0 0
        %2132 = vmatpush1.bf16.msra.mxu0 0
        %2133 = vmatprep.subr.bf16.mxu0 0
        %2134 = vmatpush1.bf16.msra.mxu0 0
        %2135 = vmatprep.subr.bf16.mxu0 0
        %2136 = vmatpush1.bf16.msra.mxu0 0
        %2137 = vmatprep.mubr.bf16.mxu0 0
        %2138 = vmatmul.mubr.bf16.gmra.mrb[0].mxu0 %v2100
        %v2139 = vpop.f32.mrb[0].mxu0
        %v2140 = vadd.f32 0.0, %v2139
        %v2141 = vpop.f32.mrb[0].mxu0
        %v2142 = vpop.f32.mrb[0].mxu0
        %v2143 = vpop.f32.mrb[0].mxu0
        %2144 = vdwg.mxu0
        %v2145 = vpack.c.bf16 %v2140, %v2140
        %v2148 = vunpack.c.l.b16 %v1550
        %v2149 = vunpack.c.l.b16 %v1551
        %v2150 = vpack.c.b16 %v2149, %v2148
        %v2153 = vsel %vm553, %v2145, 0
        %2155 = vmatprep.subr.bf16.mxu0 0
        %2156 = vmatpush1.bf16.msra.mxu0 %v2150
        %2157 = vmatprep.subr.bf16.mxu0 0
        %2158 = vmatpush1.bf16.msra.mxu0 0
        %2159 = vmatprep.subr.bf16.mxu0 0
        %2160 = vmatpush1.bf16.msra.mxu0 0
        %2161 = vmatprep.subr.bf16.mxu0 0
        %2162 = vmatpush1.bf16.msra.mxu0 0
        %2163 = vmatprep.subr.bf16.mxu0 0
        %2164 = vmatpush1.bf16.msra.mxu0 0
        %2165 = vmatprep.subr.bf16.mxu0 0
        %2166 = vmatpush1.bf16.msra.mxu0 0
        %2167 = vmatprep.subr.bf16.mxu0 0
        %2168 = vmatpush1.bf16.msra.mxu0 0
        %2169 = vmatprep.subr.bf16.mxu0 0
        %2170 = vmatpush1.bf16.msra.mxu0 0
        %2171 = vmatprep.subr.bf16.mxu0 0
        %2172 = vmatpush1.bf16.msra.mxu0 0
        %2173 = vmatprep.subr.bf16.mxu0 0
        %2174 = vmatpush1.bf16.msra.mxu0 0
        %2175 = vmatprep.subr.bf16.mxu0 0
        %2176 = vmatpush1.bf16.msra.mxu0 0
        %2177 = vmatprep.subr.bf16.mxu0 0
        %2178 = vmatpush1.bf16.msra.mxu0 0
        %2179 = vmatprep.subr.bf16.mxu0 0
        %2180 = vmatpush1.bf16.msra.mxu0 0
        %2181 = vmatprep.subr.bf16.mxu0 0
        %2182 = vmatpush1.bf16.msra.mxu0 0
        %2183 = vmatprep.subr.bf16.mxu0 0
        %2184 = vmatpush1.bf16.msra.mxu0 0
        %2185 = vmatprep.subr.bf16.mxu0 0
        %2186 = vmatpush1.bf16.msra.mxu0 0
        %2187 = vmatprep.mubr.bf16.mxu0 0
        %2188 = vmatmul.mubr.bf16.gmra.mrb[0].mxu0 %v2153
        %v2189 = vpop.f32.mrb[0].mxu0
        %v2190 = vadd.f32 0.0, %v2189
        %v2191 = vpop.f32.mrb[0].mxu0
        %v2192 = vpop.f32.mrb[0].mxu0
        %v2193 = vpop.f32.mrb[0].mxu0
        %2194 = vdwg.mxu0
        %v2195 = vadd.f32 %v2033, %v2190
        %v2196 = vadd.f32 %v1420, %v2195
        %s2197 = scalar_lea.vmem %s6, 1
        %v2198 = vld [vmem:[%s2197] sm:$0x1]
        %v2199 = vmul.f32 %v2196, %v2196
        %v2200 = vsel %vm422, %v2199, 0.0
        %2201 = vadd.xlane.f32.xlu0 %v2200
        %v2202 = vpop.xlane.xlu0 %2201
        %v2203 = vmul.f32 %v2202, %v426
        %v2204 = vadd.f32 %v2203, 1e-05
        %v2205 = vrsqrt.pop %v2204
        %v2206 = vmul.f32 %v2196, %v2205
        %v2208 = vlaneseq
        %v2209 = vshrl.u32 %v2208, 7
        %v2210 = vsub.s32 0, %v2209
        %v2211 = vrot.slane %v2198, %v2210
        %v2213 = vmul.f32 %v2206, %v2211
        %v2214 = vpack.c.bf16 %v2213, %v2213
        %s2215 = scalar_lea.vmem %s3, 64
        %v2216 = vld [vmem:[%s2215] sm:$0xff]
        %v2217 = vld [vmem:[%s2215 + $0x8] sm:$0xff]
        %v2218 = vld [vmem:[%s2215 + $0x10] sm:$0xff]
        %v2219 = vld [vmem:[%s2215 + $0x18] sm:$0xff]
        %v2220 = vld [vmem:[%s2215 + $0x20] sm:$0xff]
        %v2221 = vld [vmem:[%s2215 + $0x28] sm:$0xff]
        %v2222 = vld [vmem:[%s2215 + $0x30] sm:$0xff]
        %v2223 = vld [vmem:[%s2215 + $0x38] sm:$0xff]
        %v2232 = vunpack.c.l.b16 %v2216
        %v2233 = vunpack.c.h.b16 %v2216
        %v2234 = vunpack.c.l.b16 %v2217
        %v2235 = vunpack.c.h.b16 %v2217
        %v2236 = vunpack.c.l.b16 %v2218
        %v2237 = vunpack.c.h.b16 %v2218
        %v2238 = vunpack.c.l.b16 %v2219
        %v2239 = vunpack.c.h.b16 %v2219
        %v2240 = vunpack.c.l.b16 %v2220
        %v2241 = vunpack.c.h.b16 %v2220
        %v2242 = vunpack.c.l.b16 %v2221
        %v2243 = vunpack.c.h.b16 %v2221
        %v2244 = vunpack.c.l.b16 %v2222
        %v2245 = vunpack.c.h.b16 %v2222
        %v2246 = vunpack.c.l.b16 %v2223
        %v2247 = vunpack.c.h.b16 %v2223
        %v2248 = vpack.c.b16 %v2234, %v2232
        %v2249 = vpack.c.b16 %v2235, %v2233
        %v2250 = vpack.c.b16 %v2238, %v2236
        %v2251 = vpack.c.b16 %v2239, %v2237
        %v2252 = vpack.c.b16 %v2242, %v2240
        %v2253 = vpack.c.b16 %v2243, %v2241
        %v2254 = vpack.c.b16 %v2246, %v2244
        %v2255 = vpack.c.b16 %v2247, %v2245
        %v2265 = vsel %vm422, %v2214, 0
        %2267 = vmatprep.subr.bf16.mxu0 %v2249
        %2268 = vmatpush1.bf16.msra.mxu0 %v2248
        %2269 = vmatprep.subr.bf16.mxu0 %v2251
        %2270 = vmatpush1.bf16.msra.mxu0 %v2250
        %2271 = vmatprep.subr.bf16.mxu0 %v2253
        %2272 = vmatpush1.bf16.msra.mxu0 %v2252
        %2273 = vmatprep.subr.bf16.mxu0 %v2255
        %2274 = vmatpush1.bf16.msra.mxu0 %v2254
        %2275 = vmatprep.subr.bf16.mxu0 0
        %2276 = vmatpush1.bf16.msra.mxu0 0
        %2277 = vmatprep.subr.bf16.mxu0 0
        %2278 = vmatpush1.bf16.msra.mxu0 0
        %2279 = vmatprep.subr.bf16.mxu0 0
        %2280 = vmatpush1.bf16.msra.mxu0 0
        %2281 = vmatprep.subr.bf16.mxu0 0
        %2282 = vmatpush1.bf16.msra.mxu0 0
        %2283 = vmatprep.subr.bf16.mxu0 0
        %2284 = vmatpush1.bf16.msra.mxu0 0
        %2285 = vmatprep.subr.bf16.mxu0 0
        %2286 = vmatpush1.bf16.msra.mxu0 0
        %2287 = vmatprep.subr.bf16.mxu0 0
        %2288 = vmatpush1.bf16.msra.mxu0 0
        %2289 = vmatprep.subr.bf16.mxu0 0
        %2290 = vmatpush1.bf16.msra.mxu0 0
        %2291 = vmatprep.subr.bf16.mxu0 0
        %2292 = vmatpush1.bf16.msra.mxu0 0
        %2293 = vmatprep.subr.bf16.mxu0 0
        %2294 = vmatpush1.bf16.msra.mxu0 0
        %2295 = vmatprep.subr.bf16.mxu0 0
        %2296 = vmatpush1.bf16.msra.mxu0 0
        %2297 = vmatprep.subr.bf16.mxu0 0
        %2298 = vmatpush1.bf16.msra.mxu0 0
        %2299 = vmatprep.mubr.bf16.mxu0 0
        %2300 = vmatmul.mubr.bf16.gmra.mrb[0].mxu0 %v2265
        %v2301 = vpop.f32.mrb[0].mxu0
        %v2302 = vadd.f32 0.0, %v2301
        %v2303 = vpop.f32.mrb[0].mxu0
        %v2304 = vadd.f32 0.0, %v2303
        %v2305 = vpop.f32.mrb[0].mxu0
        %v2306 = vpop.f32.mrb[0].mxu0
        %2307 = vdwg.mxu0
        %v2308 = vsub.f32 0.0, %v2302
        %v2309 = vmul.f32 %v2308, 1.442695
        %v2310 = vpow.pop %v2309
        %v2311 = vadd.f32 %v2310, 1.0
        %v2312 = vrcp.pop %v2311
        %v2313 = vmul.f32 1.0, %v2312
        %v2314 = vmul.f32 %v2302, %v2313
        %v2315 = vmul.f32 %v2314, %v2304
        %v2316 = vpack.c.bf16 %v2315, %v2315
        %s2317 = scalar_lea.vmem %s4, 64
        %v2318 = vld [vmem:[%s2317] sm:$0xf]
        %v2319 = vld [vmem:[%s2317 + $0x4] sm:$0xf]
        %v2320 = vld [vmem:[%s2317 + $0x8] sm:$0xf]
        %v2321 = vld [vmem:[%s2317 + $0xc] sm:$0xf]
        %v2322 = vld [vmem:[%s2317 + $0x10] sm:$0xf]
        %v2323 = vld [vmem:[%s2317 + $0x14] sm:$0xf]
        %v2324 = vld [vmem:[%s2317 + $0x18] sm:$0xf]
        %v2325 = vld [vmem:[%s2317 + $0x1c] sm:$0xf]
        %v2326 = vld [vmem:[%s2317 + $0x20] sm:$0xf]
        %v2327 = vld [vmem:[%s2317 + $0x24] sm:$0xf]
        %v2328 = vld [vmem:[%s2317 + $0x28] sm:$0xf]
        %v2329 = vld [vmem:[%s2317 + $0x2c] sm:$0xf]
        %v2330 = vld [vmem:[%s2317 + $0x30] sm:$0xf]
        %v2331 = vld [vmem:[%s2317 + $0x34] sm:$0xf]
        %v2332 = vld [vmem:[%s2317 + $0x38] sm:$0xf]
        %v2333 = vld [vmem:[%s2317 + $0x3c] sm:$0xf]
        %v2350 = vunpack.c.l.b16 %v2318
        %v2351 = vunpack.c.l.b16 %v2319
        %v2352 = vunpack.c.l.b16 %v2320
        %v2353 = vunpack.c.l.b16 %v2321
        %v2354 = vunpack.c.l.b16 %v2322
        %v2355 = vunpack.c.l.b16 %v2323
        %v2356 = vunpack.c.l.b16 %v2324
        %v2357 = vunpack.c.l.b16 %v2325
        %v2358 = vunpack.c.l.b16 %v2326
        %v2359 = vunpack.c.l.b16 %v2327
        %v2360 = vunpack.c.l.b16 %v2328
        %v2361 = vunpack.c.l.b16 %v2329
        %v2362 = vunpack.c.l.b16 %v2330
        %v2363 = vunpack.c.l.b16 %v2331
        %v2364 = vunpack.c.l.b16 %v2332
        %v2365 = vunpack.c.l.b16 %v2333
        %v2366 = vpack.c.b16 %v2351, %v2350
        %v2367 = vpack.c.b16 %v2353, %v2352
        %v2368 = vpack.c.b16 %v2355, %v2354
        %v2369 = vpack.c.b16 %v2357, %v2356
        %v2370 = vpack.c.b16 %v2359, %v2358
        %v2371 = vpack.c.b16 %v2361, %v2360
        %v2372 = vpack.c.b16 %v2363, %v2362
        %v2373 = vpack.c.b16 %v2365, %v2364
        %2382 = vmatprep.subr.bf16.mxu0 0
        %2383 = vmatpush1.bf16.msra.mxu0 %v2366
        %2384 = vmatprep.subr.bf16.mxu0 0
        %2385 = vmatpush1.bf16.msra.mxu0 %v2367
        %2386 = vmatprep.subr.bf16.mxu0 0
        %2387 = vmatpush1.bf16.msra.mxu0 %v2368
        %2388 = vmatprep.subr.bf16.mxu0 0
        %2389 = vmatpush1.bf16.msra.mxu0 %v2369
        %2390 = vmatprep.subr.bf16.mxu0 0
        %2391 = vmatpush1.bf16.msra.mxu0 %v2370
        %2392 = vmatprep.subr.bf16.mxu0 0
        %2393 = vmatpush1.bf16.msra.mxu0 %v2371
        %2394 = vmatprep.subr.bf16.mxu0 0
        %2395 = vmatpush1.bf16.msra.mxu0 %v2372
        %2396 = vmatprep.subr.bf16.mxu0 0
        %2397 = vmatpush1.bf16.msra.mxu0 %v2373
        %2398 = vmatprep.subr.bf16.mxu0 0
        %2399 = vmatpush1.bf16.msra.mxu0 0
        %2400 = vmatprep.subr.bf16.mxu0 0
        %2401 = vmatpush1.bf16.msra.mxu0 0
        %2402 = vmatprep.subr.bf16.mxu0 0
        %2403 = vmatpush1.bf16.msra.mxu0 0
        %2404 = vmatprep.subr.bf16.mxu0 0
        %2405 = vmatpush1.bf16.msra.mxu0 0
        %2406 = vmatprep.subr.bf16.mxu0 0
        %2407 = vmatpush1.bf16.msra.mxu0 0
        %2408 = vmatprep.subr.bf16.mxu0 0
        %2409 = vmatpush1.bf16.msra.mxu0 0
        %2410 = vmatprep.subr.bf16.mxu0 0
        %2411 = vmatpush1.bf16.msra.mxu0 0
        %2412 = vmatprep.subr.bf16.mxu0 0
        %2413 = vmatpush1.bf16.msra.mxu0 0
        %2414 = vmatprep.mubr.bf16.mxu0 0
        %2415 = vmatmul.mubr.bf16.gmra.mrb[0].mxu0 %v2316
        %v2416 = vpop.f32.mrb[0].mxu0
        %v2417 = vadd.f32 0.0, %v2416
        %v2418 = vpop.f32.mrb[0].mxu0
        %v2419 = vpop.f32.mrb[0].mxu0
        %v2420 = vpop.f32.mrb[0].mxu0
        %2421 = vdwg.mxu0
        %v2422 = vadd.f32 %v2196, %v2417
        %v2423 = vld [vmem:[%s7] sm:$0x1]
        %v2424 = vmul.f32 %v2422, %v2422
        %v2425 = vsel %vm422, %v2424, 0.0
        %2426 = vadd.xlane.f32.xlu0 %v2425
        %v2427 = vpop.xlane.xlu0 %2426
        %v2428 = vmul.f32 %v2427, %v426
        %v2429 = vadd.f32 %v2428, 1e-05
        %v2430 = vrsqrt.pop %v2429
        %v2431 = vmul.f32 %v2422, %v2430
        %v2433 = vlaneseq
        %v2434 = vshrl.u32 %v2433, 7
        %v2435 = vsub.s32 0, %v2434
        %v2436 = vrot.slane %v2423, %v2435
        %v2438 = vmul.f32 %v2431, %v2436
        %v2439 = vpack.c.bf16 %v2438, %v2438
        %v2440 = vld [vmem:[%s11] sm:$0xf]
        %v2441 = vld [vmem:[%s11 + $0x4] sm:$0xf]
        %v2442 = vld [vmem:[%s11 + $0x8] sm:$0xf]
        %v2443 = vld [vmem:[%s11 + $0xc] sm:$0xf]
        %v2444 = vld [vmem:[%s11 + $0x10] sm:$0xf]
        %v2445 = vld [vmem:[%s11 + $0x14] sm:$0xf]
        %v2446 = vld [vmem:[%s11 + $0x18] sm:$0xf]
        %v2447 = vld [vmem:[%s11 + $0x1c] sm:$0xf]
        %v2448 = vld [vmem:[%s11 + $0x20] sm:$0xf]
        %v2449 = vld [vmem:[%s11 + $0x24] sm:$0xf]
        %v2450 = vld [vmem:[%s11 + $0x28] sm:$0xf]
        %v2451 = vld [vmem:[%s11 + $0x2c] sm:$0xf]
        %v2452 = vld [vmem:[%s11 + $0x30] sm:$0xf]
        %v2453 = vld [vmem:[%s11 + $0x34] sm:$0xf]
        %v2454 = vld [vmem:[%s11 + $0x38] sm:$0xf]
        %v2455 = vld [vmem:[%s11 + $0x3c] sm:$0xf]
        %v2456 = vld [vmem:[%s11 + $0x40] sm:$0xf]
        %v2457 = vld [vmem:[%s11 + $0x44] sm:$0xf]
        %v2458 = vld [vmem:[%s11 + $0x48] sm:$0xf]
        %v2459 = vld [vmem:[%s11 + $0x4c] sm:$0xf]
        %v2460 = vld [vmem:[%s11 + $0x50] sm:$0xf]
        %v2461 = vld [vmem:[%s11 + $0x54] sm:$0xf]
        %v2462 = vld [vmem:[%s11 + $0x58] sm:$0xf]
        %v2463 = vld [vmem:[%s11 + $0x5c] sm:$0xf]
        %v2464 = vld [vmem:[%s11 + $0x60] sm:$0xf]
        %v2465 = vld [vmem:[%s11 + $0x64] sm:$0xf]
        %v2466 = vld [vmem:[%s11 + $0x68] sm:$0xf]
        %v2467 = vld [vmem:[%s11 + $0x6c] sm:$0xf]
        %v2468 = vld [vmem:[%s11 + $0x70] sm:$0xf]
        %v2469 = vld [vmem:[%s11 + $0x74] sm:$0xf]
        %v2470 = vld [vmem:[%s11 + $0x78] sm:$0xf]
        %v2471 = vld [vmem:[%s11 + $0x7c] sm:$0xf]
        %v2504 = vunpack.c.l.b16 %v2440
        %v2505 = vunpack.c.l.b16 %v2441
        %v2506 = vunpack.c.l.b16 %v2442
        %v2507 = vunpack.c.l.b16 %v2443
        %v2508 = vunpack.c.l.b16 %v2444
        %v2509 = vunpack.c.l.b16 %v2445
        %v2510 = vunpack.c.l.b16 %v2446
        %v2511 = vunpack.c.l.b16 %v2447
        %v2512 = vunpack.c.l.b16 %v2448
        %v2513 = vunpack.c.l.b16 %v2449
        %v2514 = vunpack.c.l.b16 %v2450
        %v2515 = vunpack.c.l.b16 %v2451
        %v2516 = vunpack.c.l.b16 %v2452
        %v2517 = vunpack.c.l.b16 %v2453
        %v2518 = vunpack.c.l.b16 %v2454
        %v2519 = vunpack.c.l.b16 %v2455
        %v2520 = vunpack.c.l.b16 %v2456
        %v2521 = vunpack.c.l.b16 %v2457
        %v2522 = vunpack.c.l.b16 %v2458
        %v2523 = vunpack.c.l.b16 %v2459
        %v2524 = vunpack.c.l.b16 %v2460
        %v2525 = vunpack.c.l.b16 %v2461
        %v2526 = vunpack.c.l.b16 %v2462
        %v2527 = vunpack.c.l.b16 %v2463
        %v2528 = vunpack.c.l.b16 %v2464
        %v2529 = vunpack.c.l.b16 %v2465
        %v2530 = vunpack.c.l.b16 %v2466
        %v2531 = vunpack.c.l.b16 %v2467
        %v2532 = vunpack.c.l.b16 %v2468
        %v2533 = vunpack.c.l.b16 %v2469
        %v2534 = vunpack.c.l.b16 %v2470
        %v2535 = vunpack.c.l.b16 %v2471
        %v2536 = vpack.c.b16 %v2505, %v2504
        %v2537 = vpack.c.b16 %v2507, %v2506
        %v2538 = vpack.c.b16 %v2509, %v2508
        %v2539 = vpack.c.b16 %v2511, %v2510
        %v2540 = vpack.c.b16 %v2513, %v2512
        %v2541 = vpack.c.b16 %v2515, %v2514
        %v2542 = vpack.c.b16 %v2517, %v2516
        %v2543 = vpack.c.b16 %v2519, %v2518
        %v2544 = vpack.c.b16 %v2521, %v2520
        %v2545 = vpack.c.b16 %v2523, %v2522
        %v2546 = vpack.c.b16 %v2525, %v2524
        %v2547 = vpack.c.b16 %v2527, %v2526
        %v2548 = vpack.c.b16 %v2529, %v2528
        %v2549 = vpack.c.b16 %v2531, %v2530
        %v2550 = vpack.c.b16 %v2533, %v2532
        %v2551 = vpack.c.b16 %v2535, %v2534
        %v2553 = vsel %vm422, %v2439, 0
        %v2556 = vsel %vm422, %v2536, 0
        %v2559 = vsel %vm422, %v2537, 0
        %v2562 = vsel %vm422, %v2538, 0
        %v2565 = vsel %vm422, %v2539, 0
        %v2568 = vsel %vm422, %v2540, 0
        %v2571 = vsel %vm422, %v2541, 0
        %v2574 = vsel %vm422, %v2542, 0
        %v2577 = vsel %vm422, %v2543, 0
        %v2580 = vsel %vm422, %v2544, 0
        %v2583 = vsel %vm422, %v2545, 0
        %v2586 = vsel %vm422, %v2546, 0
        %v2589 = vsel %vm422, %v2547, 0
        %v2592 = vsel %vm422, %v2548, 0
        %v2595 = vsel %vm422, %v2549, 0
        %v2598 = vsel %vm422, %v2550, 0
        %v2601 = vsel %vm422, %v2551, 0
        %2603 = vmatprep.subr.bf16.mxu0 0
        %2604 = vmatpush1.bf16.xpose.msra.mxu0 %v2556
        %2605 = vmatprep.subr.bf16.mxu0 0
        %2606 = vmatpush1.bf16.xpose.msra.mxu0 %v2559
        %2607 = vmatprep.subr.bf16.mxu0 0
        %2608 = vmatpush1.bf16.xpose.msra.mxu0 %v2562
        %2609 = vmatprep.subr.bf16.mxu0 0
        %2610 = vmatpush1.bf16.xpose.msra.mxu0 %v2565
        %2611 = vmatprep.subr.bf16.mxu0 0
        %2612 = vmatpush1.bf16.xpose.msra.mxu0 %v2568
        %2613 = vmatprep.subr.bf16.mxu0 0
        %2614 = vmatpush1.bf16.xpose.msra.mxu0 %v2571
        %2615 = vmatprep.subr.bf16.mxu0 0
        %2616 = vmatpush1.bf16.xpose.msra.mxu0 %v2574
        %2617 = vmatprep.subr.bf16.mxu0 0
        %2618 = vmatpush1.bf16.xpose.msra.mxu0 %v2577
        %2619 = vmatprep.subr.bf16.mxu0 0
        %2620 = vmatpush1.bf16.xpose.msra.mxu0 %v2580
        %2621 = vmatprep.subr.bf16.mxu0 0
        %2622 = vmatpush1.bf16.xpose.msra.mxu0 %v2583
        %2623 = vmatprep.subr.bf16.mxu0 0
        %2624 = vmatpush1.bf16.xpose.msra.mxu0 %v2586
        %2625 = vmatprep.subr.bf16.mxu0 0
        %2626 = vmatpush1.bf16.xpose.msra.mxu0 %v2589
        %2627 = vmatprep.subr.bf16.mxu0 0
        %2628 = vmatpush1.bf16.xpose.msra.mxu0 %v2592
        %2629 = vmatprep.subr.bf16.mxu0 0
        %2630 = vmatpush1.bf16.xpose.msra.mxu0 %v2595
        %2631 = vmatprep.subr.bf16.mxu0 0
        %2632 = vmatpush1.bf16.xpose.msra.mxu0 %v2598
        %2633 = vmatprep.subr.bf16.mxu0 0
        %2634 = vmatpush1.bf16.xpose.msra.mxu0 %v2601
        %2635 = vmatprep.mubr.bf16.mxu0 0
        %2636 = vmatmul.mubr.bf16.gmra.mrb[0].mxu0 %v2553
        %v2637 = vpop.f32.mrb[0].mxu0
        %v2638 = vadd.f32 0.0, %v2637
        %v2639 = vpop.f32.mrb[0].mxu0
        %v2640 = vadd.f32 0.0, %v2639
        %v2641 = vpop.f32.mrb[0].mxu0
        %v2642 = vpop.f32.mrb[0].mxu0
        %2643 = vdwg.mxu0
        %2644 = vst [vmem:[%s404] sm:$0xff] %v2638
        %2645 = vst [vmem:[%s404 + $0x8] sm:$0xff] %v2640
        %s2646 = sand.u32 %s291, 1
        %s2647 = scalar_lea.sflag [#allocation3], %s2646
        %s2648 = sand.u32 %s291, 1
        %s2649 = smul.addr %s2648, 16
        %s2650 = scalar_lea.vmem [#allocation2], %s2649
        // Predicated region
        $region69: #{smollm_forward.1} parent=67 // pred_check
          %p2651 = pneg %p301
        $region70: #{smollm_forward.1} parent=67 // pred_check_branch
          %2653 = sbr.rel (%p2651) target = $region72
        $region71: #{smollm_forward.1} parent=67 // pred_region
          %s2655 = ssub.s32 256, 256
          %2656 = vsyncadd %s2647, %s2655
          %s2657 = smul.addr %s26, 2
          %s2658 = smul.addr %s2657, 128
          %s2659 = scalar_lea.hbm %s12, %s2658
          %s2661 = sshll.u32 %s2650, 4
          %s2662 = int_to_ptr.vmem [resolvable:$true] %s2661
          %2664 = dma.vmem_to_hbm [thread:$0]  %s2662, 256, %s2659, %s2647
        $region72: #{smollm_forward.1} parent=67 // pred_fallthru
          _
      $region68: #{smollm_forward.1} parent=5 // pred_fallthru
        _
      %p2665 = scmp.le.s32.totalorder 2, %s21
      // Predicated region
      $region73: #{smollm_forward.1} parent=5 // pred_check
        %p2666 = pneg %p2665
      $region74: #{smollm_forward.1} parent=5 // pred_check_branch
        %2668 = sbr.rel (%p2666) target = $region76
      $region75: #{smollm_forward.1} parent=5 // pred_region
        %s2669 = ssub.s32 %s21, 2
        // Predicated region
        $region77: #{smollm_forward.1} parent=75 // pred_check
          %p2670 = pneg %p307
        $region78: #{smollm_forward.1} parent=75 // pred_check_branch
          %2672 = sbr.rel (%p2670) target = $region80
        $region79: #{smollm_forward.1} parent=75 // pred_region
          %s2673 = sand.u32 %s292, 1
          %s2674 = scalar_lea.sflag [#allocation3], %s2673
          %s2675 = sand.u32 %s292, 1
          %s2676 = smul.addr %s2675, 16
          %s2677 = scalar_lea.vmem [#allocation2], %s2676
          %2678 = dma.done %s2674, 256
        $region80: #{smollm_forward.1} parent=75 // pred_fallthru
          _
      $region76: #{smollm_forward.1} parent=5 // pred_fallthru
        _
    $region6: #{smollm_forward.1} parent=1 // loop_footer
      %s25 = sadd.s32 1, %s21
    $region7: #{smollm_forward.1} parent=1 // loop_footer_branch
      %20 = sbr.rel target = $region3
    $region8: #{smollm_forward.1} parent=1 // loop_exit
      _
    %2679 = vsyncpa [#allocation3], 1
    %s2680 = scalar_lea.sflag [#allocation3], 1
    %2681 = vsyncpa %s2680, 1

</llo_original>
